<compile_context>
chip_gen: v7x
topology: tpu7x:2x2x1
jax: 0.10.0
libtpu: 0.0.40
codegen_flags: <defaults>
</compile_context>

<pallas_src>
import jax
import jax.numpy as jnp
from jax import lax
from jax.experimental import pallas as pl
from jax.experimental.pallas import tpu as pltpu


def _round_up(v, m):
    return ((v + m - 1) // m) * m


# ---------------------------------------------------------------------------
# Fused kernel: [1x1 conv + BN + ReLU] -> zero-padded VMEM scratch ->
#               9-tap 3x3 conv (stride 1 or 2) + BN + ReLU.
# ---------------------------------------------------------------------------
def _make_convbn_kernel(H, W, Ho, Wo, stride, cin, cp_in, cp_out, bottleneck):
    def kernel(*refs):
        if bottleneck:
            x_ref, w1_ref, b1_ref, w2_ref, b2_ref, o_ref, pad_sc = refs
        else:
            x_ref, w2_ref, b2_ref, o_ref, pad_sc = refs

        # Zero the padded scratch: its 1-pixel border implements padding=1 of
        # the 3x3 conv, and the extra channels pad K up to a 128-lane width.
        pad_sc[...] = jnp.zeros_like(pad_sc)

        xin = x_ref[0]                                      # (H*W, Cin) bf16
        if bottleneck:
            # 1x1 conv (BN scale pre-folded into w1) -> +shift -> ReLU.
            y1 = jnp.dot(xin, w1_ref[...],
                         preferred_element_type=jnp.float32)
            y1 = jnp.maximum(y1 + b1_ref[...], 0.0)         # (H*W, cp_in) f32
            pad_sc[1:H + 1, 1:W + 1, :] = y1.reshape(H, W, cp_in)
        else:
            pad_sc[1:H + 1, 1:W + 1, :cin] = (
                xin.reshape(H, W, cin).astype(jnp.float32))

        # 3x3 conv: 9 shifted-window matmuls accumulated in f32 (no im2col in
        # HBM; the shifted views are read directly from the VMEM scratch).
        acc = jnp.zeros((Ho * Wo, cp_out), jnp.float32)
        for kh in range(3):
            for kw in range(3):
                if stride == 1:
                    tap = pad_sc[kh:kh + Ho, kw:kw + Wo, :]
                else:  # stride 2 ('down'): strided window reads from VMEM
                    tap = pad_sc[pl.ds(kh, Ho, stride),
                                 pl.ds(kw, Wo, stride), :]
                tap = tap.reshape(Ho * Wo, cp_in).astype(jnp.bfloat16)
                acc = acc + jnp.dot(tap, w2_ref[kh * 3 + kw],
                                    preferred_element_type=jnp.float32)

        # Second BN (scale folded into w2) shift + ReLU; lane-dense store.
        o_ref[0] = jnp.maximum(acc + b2_ref[...], 0.0).astype(o_ref.dtype)

    return kernel


# ---------------------------------------------------------------------------
# Parameter construction (deterministic, mirrors the PyTorch __init__ shapes).
# ---------------------------------------------------------------------------
def init_params(key, nIn, nOut, bottleneck, bnWidth, eps=1e-5):
    params = {"bottleneck": bottleneck}
    nInner = nIn
    k1, k2 = jax.random.split(key)
    if bottleneck:
        nInner = min(nInner, bnWidth * nOut)
        params["w1_oihw"] = 0.1 * jax.random.normal(
            k1, (nInner, nIn, 1, 1), jnp.float32)
        gamma1 = 1.0 + 0.1 * jnp.arange(nInner, dtype=jnp.float32)
        beta1 = 0.05 * jnp.arange(nInner, dtype=jnp.float32)
        mean1 = jnp.zeros((nInner,), jnp.float32)
        var1 = jnp.ones((nInner,), jnp.float32)
        s1 = gamma1 / jnp.sqrt(var1 + eps)
        params["scale1"] = s1
        params["shift1"] = beta1 - mean1 * s1
    params["w2_oihw"] = 0.1 * jax.random.normal(
        k2, (nOut, nInner, 3, 3), jnp.float32)
    gamma2 = 1.0 + 0.05 * jnp.arange(nOut, dtype=jnp.float32)
    beta2 = -0.02 * jnp.arange(nOut, dtype=jnp.float32)
    mean2 = jnp.zeros((nOut,), jnp.float32)
    var2 = jnp.ones((nOut,), jnp.float32)
    s2 = gamma2 / jnp.sqrt(var2 + eps)
    params["scale2"] = s2
    params["shift2"] = beta2 - mean2 * s2
    return params


# ---------------------------------------------------------------------------
# Forward pass (Pallas) and pure-JAX f32 reference.
# ---------------------------------------------------------------------------
def conv_bn_forward(x_nchw, params, conv_type):
    if conv_type == "normal":
        stride = 1
    elif conv_type == "down":
        stride = 2
    else:
        raise ValueError(conv_type)
    bottleneck = params["bottleneck"]

    # TODO(synk): a full-model port should stay NHWC end-to-end; these entry /
    # exit transposes only preserve the PyTorch NCHW interface of this module.
    x = jnp.transpose(x_nchw, (0, 2, 3, 1)).astype(jnp.float32)   # NCHW->NHWC
    N, H, W, Cin = x.shape
    Ho = (H - 1) // stride + 1        # = (H + 2*pad - 3)//stride + 1, pad=1
    Wo = (W - 1) // stride + 1

    w2 = params["w2_oihw"]                        # (Cout, Cinner, 3, 3)
    Cout, Cinner = int(w2.shape[0]), int(w2.shape[1])
    cp_in = _round_up(Cinner, 128)                # lane-dense K for the 3x3
    cp_out = _round_up(Cout, 128)                 # lane-dense output stores

    # Fold BN scale into the weight columns (drops the per-element multiply
    # from the kernel epilogue), pad to lane-dense shapes, cast to bf16.
    w2_k = jnp.transpose(w2, (2, 3, 1, 0)).reshape(9, Cinner, Cout)
    w2_k = w2_k * params["scale2"][None, None, :]
    w2_p = (jnp.zeros((9, cp_in, cp_out), jnp.float32)
            .at[:, :Cinner, :Cout].set(w2_k).astype(jnp.bfloat16))
    b2_p = (jnp.zeros((1, cp_out), jnp.float32)
            .at[0, :Cout].set(params["shift2"]))

    x2d = x.reshape(N, H * W, Cin).astype(jnp.bfloat16)   # bf16 halves HBM read

    args = [x2d]
    in_specs = [pl.BlockSpec((1, H * W, Cin), lambda n: (n, 0, 0))]
    if bottleneck:
        w1 = params["w1_oihw"][:, :, 0, 0].T * params["scale1"][None, :]
        w1_p = (jnp.zeros((Cin, cp_in), jnp.float32)
                .at[:, :Cinner].set(w1).astype(jnp.bfloat16))
        b1_p = (jnp.zeros((1, cp_in), jnp.float32)
                .at[0, :Cinner].set(params["shift1"]))
        args += [w1_p, b1_p]
        in_specs += [pl.BlockSpec((Cin, cp_in), lambda n: (0, 0)),
                     pl.BlockSpec((1, cp_in), lambda n: (0, 0))]
    args += [w2_p, b2_p]
    in_specs += [pl.BlockSpec((9, cp_in, cp_out), lambda n: (0, 0, 0)),
                 pl.BlockSpec((1, cp_out), lambda n: (0, 0))]

    kernel = _make_convbn_kernel(H, W, Ho, Wo, stride, Cin, cp_in, cp_out,
                                 bottleneck)

    # Per-step VMEM: double-buffered w2 (9*cp_in*cp_out*2B), the output block
    # (Ho*Wo*cp_out*4B), the padded scratch ((H+2)*(W+2)*cp_in*4B) -- ~1.5 MiB
    # here, far below every generation's scoped limit (32 MiB requested below
    # is safe on v5e/v6e/v7x).
    # TODO(synk): very large feature maps would need spatial tiling of the
    # per-image plane instead of whole-plane-per-grid-step processing.
    out = pl.pallas_call(
        kernel,
        out_shape=jax.ShapeDtypeStruct((N, Ho * Wo, cp_out), jnp.float32),
        grid=(N,),
        in_specs=in_specs,
        out_specs=pl.BlockSpec((1, Ho * Wo, cp_out), lambda n: (n, 0, 0)),
        scratch_shapes=[pltpu.VMEM((H + 2, W + 2, cp_in), jnp.float32)],
        compiler_params=pltpu.CompilerParams(
            dimension_semantics=("parallel",),      # images shard across TCs
            vmem_limit_bytes=32 * 1024 * 1024),
    )(*args)

    out = out.reshape(N, Ho, Wo, cp_out)[..., :Cout]
    return jnp.transpose(out, (0, 3, 1, 2))                # NHWC -> NCHW


def conv_bn_reference(x_nchw, params, conv_type):
    dn = ("NCHW", "OIHW", "NCHW")
    y = x_nchw.astype(jnp.float32)
    if params["bottleneck"]:
        y = lax.conv_general_dilated(y, params["w1_oihw"], (1, 1), "VALID",
                                     dimension_numbers=dn)
        y = y * params["scale1"][None, :, None, None] \
            + params["shift1"][None, :, None, None]
        y = jnp.maximum(y, 0.0)
    s = 1 if conv_type == "normal" else 2
    y = lax.conv_general_dilated(y, params["w2_oihw"], (s, s), ((1, 1), (1, 1)),
                                 dimension_numbers=dn)
    y = y * params["scale2"][None, :, None, None] \
        + params["shift2"][None, :, None, None]
    return jnp.maximum(y, 0.0)


if __name__ == "__main__":
    key = jax.random.PRNGKey(0)
    kx, kp, kx2, kp2 = jax.random.split(key, 4)

    ok = True
    # bf16 MXU inputs (f32 accumulation) -> compare to the f32 reference with
    # a correspondingly looser tolerance.
    ATOL = RTOL = 5e-2

    # ConvBN(nIn=4, nOut=8, type=..., bottleneck=True, bnWidth=1)
    nIn, nOut, bnWidth = 4, 8, 1
    x = jax.random.normal(kx, (2, nIn, 16, 16), jnp.float32)       # NCHW input
    params = init_params(kp, nIn, nOut, bottleneck=True, bnWidth=bnWidth)
    for conv_type in ("normal", "down"):
        out = jax.block_until_ready(conv_bn_forward(x, params, conv_type))
        ref = jax.block_until_ready(conv_bn_reference(x, params, conv_type))
        if out.shape != ref.shape or not bool(
            jnp.allclose(out, ref, atol=ATOL, rtol=RTOL)
        ):
            ok = False
            print(f"MISMATCH bottleneck=True type={conv_type}: "
                  f"max err {float(jnp.max(jnp.abs(out - ref)))}")

    # ConvBN(nIn=8, nOut=8, type=..., bottleneck=False, bnWidth=1)
    x2 = jax.random.normal(kx2, (2, 8, 16, 16), jnp.float32)
    params2 = init_params(kp2, 8, 8, bottleneck=False, bnWidth=1)
    for conv_type in ("normal", "down"):
        out = jax.block_until_ready(conv_bn_forward(x2, params2, conv_type))
        ref = jax.block_until_ready(conv_bn_reference(x2, params2, conv_type))
        if out.shape != ref.shape or not bool(
            jnp.allclose(out, ref, atol=ATOL, rtol=RTOL)
        ):
            ok = False
            print(f"MISMATCH bottleneck=False type={conv_type}: "
                  f"max err {float(jnp.max(jnp.abs(out - ref)))}")

    if ok:
        print("KERNEL_OK")
</pallas_src>

<mosaic_0001>
module attributes {stable_mosaic.version = 11 : i64} {
  func.func @kernel(%arg0: i32, %arg1: memref<1x256x4xbf16, #tpu.memory_space<vmem>>, %arg2: memref<4x128xbf16, #tpu.memory_space<vmem>>, %arg3: memref<1x128xf32, #tpu.memory_space<vmem>>, %arg4: memref<9x128x128xbf16, #tpu.memory_space<vmem>>, %arg5: memref<1x128xf32, #tpu.memory_space<vmem>>, %arg6: memref<1x256x128xf32, #tpu.memory_space<vmem>>, %arg7: memref<18x18x128xf32, #tpu.memory_space<vmem>>) attributes {dimension_semantics = [#tpu.dimension_semantics<parallel>], iteration_bounds = array<i64: 2>, scalar_prefetch = 0 : i64, scratch_operands = 1 : i64, tpu.core_type = #tpu.core_type<tc>, window_params = [{transform_indices = @transform_0, window_bounds = array<i64: 1, 256, 4>}, {pipeline_mode = #tpu.pipeline_mode<synchronous>, transform_indices = @transform_1, window_bounds = array<i64: 4, 128>}, {pipeline_mode = #tpu.pipeline_mode<synchronous>, transform_indices = @transform_2, window_bounds = array<i64: 1, 128>}, {pipeline_mode = #tpu.pipeline_mode<synchronous>, transform_indices = @transform_3, window_bounds = array<i64: 9, 128, 128>}, {pipeline_mode = #tpu.pipeline_mode<synchronous>, transform_indices = @transform_4, window_bounds = array<i64: 1, 128>}, {transform_indices = @transform_5, window_bounds = array<i64: 1, 256, 128>}]} {
    %cst = arith.constant 0.000000e+00 : f32
    %0 = vector.broadcast %cst : f32 to vector<18x18x128xf32>
    %c0 = arith.constant 0 : index
    %c0_0 = arith.constant 0 : index
    %c0_1 = arith.constant 0 : index
    %1 = vector.load %arg7[%c0, %c0_0, %c0_1] : memref<18x18x128xf32, #tpu.memory_space<vmem>>, vector<18x18x128xf32>
    tpu.vector_store %arg7[%c0, %c0_0, %c0_1], %0 {strides = array<i32>} : memref<18x18x128xf32, #tpu.memory_space<vmem>>, vector<18x18x128xf32>,
    %c0_2 = arith.constant 0 : index
    %c0_3 = arith.constant 0 : index
    %c0_4 = arith.constant 0 : index
    %2 = vector.load %arg1[%c0_2, %c0_3, %c0_4] : memref<1x256x4xbf16, #tpu.memory_space<vmem>>, vector<1x256x4xbf16>
    %3 = vector.shape_cast %2 : vector<1x256x4xbf16> to vector<256x4xbf16>
    %c0_5 = arith.constant 0 : index
    %c0_6 = arith.constant 0 : index
    %4 = vector.load %arg2[%c0_5, %c0_6] : memref<4x128xbf16, #tpu.memory_space<vmem>>, vector<4x128xbf16>
    %cst_7 = arith.constant dense<0.000000e+00> : vector<256x128xf32>
    %5 = tpu.matmul %3, %4, %cst_7 {dimension_numbers = #tpu.dot_dimension_numbers<[1], [0], [0], [1], [0, 0, 1, 1], [], []>} : vector<256x4xbf16>, vector<4x128xbf16>, vector<256x128xf32> -> vector<256x128xf32>
    %c0_8 = arith.constant 0 : index
    %c0_9 = arith.constant 0 : index
    %6 = vector.load %arg3[%c0_8, %c0_9] : memref<1x128xf32, #tpu.memory_space<vmem>>, vector<1x128xf32>
    %7 = vector.broadcast %6 : vector<1x128xf32> to vector<256x128xf32>
    %8 = arith.addf %5, %7 : vector<256x128xf32>
    %cst_10 = arith.constant 0.000000e+00 : f32
    %9 = vector.broadcast %cst_10 : f32 to vector<256x128xf32>
    %10 = arith.maximumf %8, %9 : vector<256x128xf32>
    %11 = vector.shape_cast %10 : vector<256x128xf32> to vector<16x16x128xf32>
    %c1 = arith.constant 1 : index
    %c1_11 = arith.constant 1 : index
    %c0_12 = arith.constant 0 : index
    %12 = vector.load %arg7[%c1, %c1_11, %c0_12] : memref<18x18x128xf32, #tpu.memory_space<vmem>>, vector<16x16x128xf32>
    tpu.vector_store %arg7[%c1, %c1_11, %c0_12], %11 {strides = array<i32>} : memref<18x18x128xf32, #tpu.memory_space<vmem>>, vector<16x16x128xf32>,
    %cst_13 = arith.constant 0.000000e+00 : f32
    %13 = vector.broadcast %cst_13 : f32 to vector<256x128xf32>
    %c0_14 = arith.constant 0 : index
    %c0_15 = arith.constant 0 : index
    %c0_16 = arith.constant 0 : index
    %14 = vector.load %arg7[%c0_14, %c0_15, %c0_16] : memref<18x18x128xf32, #tpu.memory_space<vmem>>, vector<16x16x128xf32>
    %15 = vector.shape_cast %14 : vector<16x16x128xf32> to vector<256x128xf32>
    %16 = arith.truncf %15 : vector<256x128xf32> to vector<256x128xbf16>
    %c0_17 = arith.constant 0 : index
    %c0_18 = arith.constant 0 : index
    %c0_19 = arith.constant 0 : index
    %17 = vector.load %arg4[%c0_17, %c0_18, %c0_19] : memref<9x128x128xbf16, #tpu.memory_space<vmem>>, vector<1x128x128xbf16>
    %18 = vector.shape_cast %17 : vector<1x128x128xbf16> to vector<128x128xbf16>
    %cst_20 = arith.constant dense<0.000000e+00> : vector<256x128xf32>
    %19 = tpu.matmul %16, %18, %cst_20 {dimension_numbers = #tpu.dot_dimension_numbers<[1], [0], [0], [1], [0, 0, 1, 1], [], []>} : vector<256x128xbf16>, vector<128x128xbf16>, vector<256x128xf32> -> vector<256x128xf32>
    %20 = arith.addf %13, %19 : vector<256x128xf32>
    %c0_21 = arith.constant 0 : index
    %c1_22 = arith.constant 1 : index
    %c0_23 = arith.constant 0 : index
    %21 = vector.load %arg7[%c0_21, %c1_22, %c0_23] : memref<18x18x128xf32, #tpu.memory_space<vmem>>, vector<16x16x128xf32>
    %22 = vector.shape_cast %21 : vector<16x16x128xf32> to vector<256x128xf32>
    %23 = arith.truncf %22 : vector<256x128xf32> to vector<256x128xbf16>
    %c1_24 = arith.constant 1 : index
    %c0_25 = arith.constant 0 : index
    %c0_26 = arith.constant 0 : index
    %24 = vector.load %arg4[%c1_24, %c0_25, %c0_26] : memref<9x128x128xbf16, #tpu.memory_space<vmem>>, vector<1x128x128xbf16>
    %25 = vector.shape_cast %24 : vector<1x128x128xbf16> to vector<128x128xbf16>
    %cst_27 = arith.constant dense<0.000000e+00> : vector<256x128xf32>
    %26 = tpu.matmul %23, %25, %cst_27 {dimension_numbers = #tpu.dot_dimension_numbers<[1], [0], [0], [1], [0, 0, 1, 1], [], []>} : vector<256x128xbf16>, vector<128x128xbf16>, vector<256x128xf32> -> vector<256x128xf32>
    %27 = arith.addf %20, %26 : vector<256x128xf32>
    %c0_28 = arith.constant 0 : index
    %c2 = arith.constant 2 : index
    %c0_29 = arith.constant 0 : index
    %28 = vector.load %arg7[%c0_28, %c2, %c0_29] : memref<18x18x128xf32, #tpu.memory_space<vmem>>, vector<16x16x128xf32>
    %29 = vector.shape_cast %28 : vector<16x16x128xf32> to vector<256x128xf32>
    %30 = arith.truncf %29 : vector<256x128xf32> to vector<256x128xbf16>
    %c2_30 = arith.constant 2 : index
    %c0_31 = arith.constant 0 : index
    %c0_32 = arith.constant 0 : index
    %31 = vector.load %arg4[%c2_30, %c0_31, %c0_32] : memref<9x128x128xbf16, #tpu.memory_space<vmem>>, vector<1x128x128xbf16>
    %32 = vector.shape_cast %31 : vector<1x128x128xbf16> to vector<128x128xbf16>
    %cst_33 = arith.constant dense<0.000000e+00> : vector<256x128xf32>
    %33 = tpu.matmul %30, %32, %cst_33 {dimension_numbers = #tpu.dot_dimension_numbers<[1], [0], [0], [1], [0, 0, 1, 1], [], []>} : vector<256x128xbf16>, vector<128x128xbf16>, vector<256x128xf32> -> vector<256x128xf32>
    %34 = arith.addf %27, %33 : vector<256x128xf32>
    %c1_34 = arith.constant 1 : index
    %c0_35 = arith.constant 0 : index
    %c0_36 = arith.constant 0 : index
    %35 = vector.load %arg7[%c1_34, %c0_35, %c0_36] : memref<18x18x128xf32, #tpu.memory_space<vmem>>, vector<16x16x128xf32>
    %36 = vector.shape_cast %35 : vector<16x16x128xf32> to vector<256x128xf32>
    %37 = arith.truncf %36 : vector<256x128xf32> to vector<256x128xbf16>
    %c3 = arith.constant 3 : index
    %c0_37 = arith.constant 0 : index
    %c0_38 = arith.constant 0 : index
    %38 = vector.load %arg4[%c3, %c0_37, %c0_38] : memref<9x128x128xbf16, #tpu.memory_space<vmem>>, vector<1x128x128xbf16>
    %39 = vector.shape_cast %38 : vector<1x128x128xbf16> to vector<128x128xbf16>
    %cst_39 = arith.constant dense<0.000000e+00> : vector<256x128xf32>
    %40 = tpu.matmul %37, %39, %cst_39 {dimension_numbers = #tpu.dot_dimension_numbers<[1], [0], [0], [1], [0, 0, 1, 1], [], []>} : vector<256x128xbf16>, vector<128x128xbf16>, vector<256x128xf32> -> vector<256x128xf32>
    %41 = arith.addf %34, %40 : vector<256x128xf32>
    %c1_40 = arith.constant 1 : index
    %c1_41 = arith.constant 1 : index
    %c0_42 = arith.constant 0 : index
    %42 = vector.load %arg7[%c1_40, %c1_41, %c0_42] : memref<18x18x128xf32, #tpu.memory_space<vmem>>, vector<16x16x128xf32>
    %43 = vector.shape_cast %42 : vector<16x16x128xf32> to vector<256x128xf32>
    %44 = arith.truncf %43 : vector<256x128xf32> to vector<256x128xbf16>
    %c4 = arith.constant 4 : index
    %c0_43 = arith.constant 0 : index
    %c0_44 = arith.constant 0 : index
    %45 = vector.load %arg4[%c4, %c0_43, %c0_44] : memref<9x128x128xbf16, #tpu.memory_space<vmem>>, vector<1x128x128xbf16>
    %46 = vector.shape_cast %45 : vector<1x128x128xbf16> to vector<128x128xbf16>
    %cst_45 = arith.constant dense<0.000000e+00> : vector<256x128xf32>
    %47 = tpu.matmul %44, %46, %cst_45 {dimension_numbers = #tpu.dot_dimension_numbers<[1], [0], [0], [1], [0, 0, 1, 1], [], []>} : vector<256x128xbf16>, vector<128x128xbf16>, vector<256x128xf32> -> vector<256x128xf32>
    %48 = arith.addf %41, %47 : vector<256x128xf32>
    %c1_46 = arith.constant 1 : index
    %c2_47 = arith.constant 2 : index
    %c0_48 = arith.constant 0 : index
    %49 = vector.load %arg7[%c1_46, %c2_47, %c0_48] : memref<18x18x128xf32, #tpu.memory_space<vmem>>, vector<16x16x128xf32>
    %50 = vector.shape_cast %49 : vector<16x16x128xf32> to vector<256x128xf32>
    %51 = arith.truncf %50 : vector<256x128xf32> to vector<256x128xbf16>
    %c5 = arith.constant 5 : index
    %c0_49 = arith.constant 0 : index
    %c0_50 = arith.constant 0 : index
    %52 = vector.load %arg4[%c5, %c0_49, %c0_50] : memref<9x128x128xbf16, #tpu.memory_space<vmem>>, vector<1x128x128xbf16>
    %53 = vector.shape_cast %52 : vector<1x128x128xbf16> to vector<128x128xbf16>
    %cst_51 = arith.constant dense<0.000000e+00> : vector<256x128xf32>
    %54 = tpu.matmul %51, %53, %cst_51 {dimension_numbers = #tpu.dot_dimension_numbers<[1], [0], [0], [1], [0, 0, 1, 1], [], []>} : vector<256x128xbf16>, vector<128x128xbf16>, vector<256x128xf32> -> vector<256x128xf32>
    %55 = arith.addf %48, %54 : vector<256x128xf32>
    %c2_52 = arith.constant 2 : index
    %c0_53 = arith.constant 0 : index
    %c0_54 = arith.constant 0 : index
    %56 = vector.load %arg7[%c2_52, %c0_53, %c0_54] : memref<18x18x128xf32, #tpu.memory_space<vmem>>, vector<16x16x128xf32>
    %57 = vector.shape_cast %56 : vector<16x16x128xf32> to vector<256x128xf32>
    %58 = arith.truncf %57 : vector<256x128xf32> to vector<256x128xbf16>
    %c6 = arith.constant 6 : index
    %c0_55 = arith.constant 0 : index
    %c0_56 = arith.constant 0 : index
    %59 = vector.load %arg4[%c6, %c0_55, %c0_56] : memref<9x128x128xbf16, #tpu.memory_space<vmem>>, vector<1x128x128xbf16>
    %60 = vector.shape_cast %59 : vector<1x128x128xbf16> to vector<128x128xbf16>
    %cst_57 = arith.constant dense<0.000000e+00> : vector<256x128xf32>
    %61 = tpu.matmul %58, %60, %cst_57 {dimension_numbers = #tpu.dot_dimension_numbers<[1], [0], [0], [1], [0, 0, 1, 1], [], []>} : vector<256x128xbf16>, vector<128x128xbf16>, vector<256x128xf32> -> vector<256x128xf32>
    %62 = arith.addf %55, %61 : vector<256x128xf32>
    %c2_58 = arith.constant 2 : index
    %c1_59 = arith.constant 1 : index
    %c0_60 = arith.constant 0 : index
    %63 = vector.load %arg7[%c2_58, %c1_59, %c0_60] : memref<18x18x128xf32, #tpu.memory_space<vmem>>, vector<16x16x128xf32>
    %64 = vector.shape_cast %63 : vector<16x16x128xf32> to vector<256x128xf32>
    %65 = arith.truncf %64 : vector<256x128xf32> to vector<256x128xbf16>
    %c7 = arith.constant 7 : index
    %c0_61 = arith.constant 0 : index
    %c0_62 = arith.constant 0 : index
    %66 = vector.load %arg4[%c7, %c0_61, %c0_62] : memref<9x128x128xbf16, #tpu.memory_space<vmem>>, vector<1x128x128xbf16>
    %67 = vector.shape_cast %66 : vector<1x128x128xbf16> to vector<128x128xbf16>
    %cst_63 = arith.constant dense<0.000000e+00> : vector<256x128xf32>
    %68 = tpu.matmul %65, %67, %cst_63 {dimension_numbers = #tpu.dot_dimension_numbers<[1], [0], [0], [1], [0, 0, 1, 1], [], []>} : vector<256x128xbf16>, vector<128x128xbf16>, vector<256x128xf32> -> vector<256x128xf32>
    %69 = arith.addf %62, %68 : vector<256x128xf32>
    %c2_64 = arith.constant 2 : index
    %c2_65 = arith.constant 2 : index
    %c0_66 = arith.constant 0 : index
    %70 = vector.load %arg7[%c2_64, %c2_65, %c0_66] : memref<18x18x128xf32, #tpu.memory_space<vmem>>, vector<16x16x128xf32>
    %71 = vector.shape_cast %70 : vector<16x16x128xf32> to vector<256x128xf32>
    %72 = arith.truncf %71 : vector<256x128xf32> to vector<256x128xbf16>
    %c8 = arith.constant 8 : index
    %c0_67 = arith.constant 0 : index
    %c0_68 = arith.constant 0 : index
    %73 = vector.load %arg4[%c8, %c0_67, %c0_68] : memref<9x128x128xbf16, #tpu.memory_space<vmem>>, vector<1x128x128xbf16>
    %74 = vector.shape_cast %73 : vector<1x128x128xbf16> to vector<128x128xbf16>
    %cst_69 = arith.constant dense<0.000000e+00> : vector<256x128xf32>
    %75 = tpu.matmul %72, %74, %cst_69 {dimension_numbers = #tpu.dot_dimension_numbers<[1], [0], [0], [1], [0, 0, 1, 1], [], []>} : vector<256x128xbf16>, vector<128x128xbf16>, vector<256x128xf32> -> vector<256x128xf32>
    %76 = arith.addf %69, %75 : vector<256x128xf32>
    %c0_70 = arith.constant 0 : index
    %c0_71 = arith.constant 0 : index
    %77 = vector.load %arg5[%c0_70, %c0_71] : memref<1x128xf32, #tpu.memory_space<vmem>>, vector<1x128xf32>
    %78 = vector.broadcast %77 : vector<1x128xf32> to vector<256x128xf32>
    %79 = arith.addf %76, %78 : vector<256x128xf32>
    %cst_72 = arith.constant 0.000000e+00 : f32
    %80 = vector.broadcast %cst_72 : f32 to vector<256x128xf32>
    %81 = arith.maximumf %79, %80 : vector<256x128xf32>
    %c0_73 = arith.constant 0 : index
    %c0_74 = arith.constant 0 : index
    %c0_75 = arith.constant 0 : index
    %82 = vector.load %arg6[%c0_73, %c0_74, %c0_75] : memref<1x256x128xf32, #tpu.memory_space<vmem>>, vector<1x256x128xf32>
    %83 = vector.shape_cast %82 : vector<1x256x128xf32> to vector<256x128xf32>
    %84 = vector.shape_cast %81 : vector<256x128xf32> to vector<1x256x128xf32>
    tpu.vector_store %arg6[%c0_73, %c0_74, %c0_75], %84 {strides = array<i32>} : memref<1x256x128xf32, #tpu.memory_space<vmem>>, vector<1x256x128xf32>,
    return
  }
  func.func @transform_0(%arg0: i32) -> (i32, i32, i32) {
    %c0_i32 = arith.constant 0 : i32
    %c0_i32_0 = arith.constant 0 : i32
    %c0_i32_1 = arith.constant 0 : i32
    return %arg0, %c0_i32, %c0_i32_0 : i32, i32, i32
  }
  func.func @transform_1(%arg0: i32) -> (i32, i32) {
    %c0_i32 = arith.constant 0 : i32
    %c0_i32_0 = arith.constant 0 : i32
    %c0_i32_1 = arith.constant 0 : i32
    return %c0_i32, %c0_i32_0 : i32, i32
  }
  func.func @transform_2(%arg0: i32) -> (i32, i32) {
    %c0_i32 = arith.constant 0 : i32
    %c0_i32_0 = arith.constant 0 : i32
    %c0_i32_1 = arith.constant 0 : i32
    return %c0_i32, %c0_i32_0 : i32, i32
  }
  func.func @transform_3(%arg0: i32) -> (i32, i32, i32) {
    %c0_i32 = arith.constant 0 : i32
    %c0_i32_0 = arith.constant 0 : i32
    %c0_i32_1 = arith.constant 0 : i32
    %c0_i32_2 = arith.constant 0 : i32
    return %c0_i32, %c0_i32_0, %c0_i32_1 : i32, i32, i32
  }
  func.func @transform_4(%arg0: i32) -> (i32, i32) {
    %c0_i32 = arith.constant 0 : i32
    %c0_i32_0 = arith.constant 0 : i32
    %c0_i32_1 = arith.constant 0 : i32
    return %c0_i32, %c0_i32_0 : i32, i32
  }
  func.func @transform_5(%arg0: i32) -> (i32, i32, i32) {
    %c0_i32 = arith.constant 0 : i32
    %c0_i32_0 = arith.constant 0 : i32
    %c0_i32_1 = arith.constant 0 : i32
    return %arg0, %c0_i32, %c0_i32_0 : i32, i32, i32
  }
}

</mosaic_0001>

<llo_original>
// kernel: tpu_custom_call.1
$region0: #{tpu_custom_call.1}
  #allocation0 [shape = 'u32[]', space=smem, size = 0x4, offset = 0x4, fixed_abs, tag = 'smem constant byte address 0x4 - core index']
  #allocation1 [shape = 'u32[144,128]{1,0:T(1,128)}', space=vmem, size = 0x12000, scoped, tag = 'internal scratch']
  #allocation2 [shape = 'f32[18,18,128]{2,1,0:T(8,128)}', space=vmem, size = 0x36000, scoped, tag = 'scratch operand']
  %s0 = inlined_call_operand.vmem [shape: bf16[2,256,4], index: 0, kind: input, shape index: {}]
  %s1 = inlined_call_operand.vmem [shape: bf16[4,128], index: 1, kind: input, shape index: {}]
  %s2 = inlined_call_operand.vmem [shape: f32[1,128], index: 2, kind: input, shape index: {}]
  %s3 = inlined_call_operand.hbm [shape: bf16[9,128,128], index: 3, kind: input, shape index: {}]
  %s4 = inlined_call_operand.vmem [shape: f32[1,128], index: 4, kind: input, shape index: {}]
  %s5 = inlined_call_operand.hbm [shape: f32[2,256,128], index: 5, kind: output, shape index: {}]
  %s6 = sld [smem:[#allocation0]]
  $region57: #{tpu_custom_call.1} parent=0
    _
  %s8 = ssub.s32 1, %s6
  %s9 = scalar_select 0, %s8, %s6
  $region1: #{tpu_custom_call.1} parent=0
    #allocation3 [shape = 'u8[294912]{0}', space=vmem, size = 0x48000, scoped, tag = 'input window, operand 3, single buffered']
    #allocation4 [shape = 's32[2]{0}', space=sflag, size = 0x8, scoped, tag = 'scoped memory for tpu_custom_call.1']
    #allocation5 [shape = 's32[2]{0}', space=sflag, size = 0x8, scoped, tag = 'scoped memory for tpu_custom_call.1']
    #allocation6 [shape = 'u8[262144]{0}', space=vmem, size = 0x40000, scoped, tag = 'output window, operand 0']
    %10 = vsyncpa [#allocation4], 0
    %11 = vsyncpa [#allocation5], 0
    %s12 = scalar_lea.sflag [#allocation5], 1
    %13 = vsyncpa %s12, 0
    loop: start=0, step=1, limit=4
    $region2: #{tpu_custom_call.1} parent=1 // loop_pre_header
      _
    $region3: #{tpu_custom_call.1} parent=1 // loop_header
      %s15 = sphi 0, %s19
      %p16 = scmp.ge.s32.totalorder %s15, 4
      %s25 = sphi 0, %s27
      %s28 = sphi 0, %s25
      %s29 = sphi 0, %s28
      %s45 = sphi 0, %s29
      %s49 = sphi 0, %s49
      %s51 = sphi 0, %s49
      %s52 = sphi 0, %s51
      %s66 = sphi 0, %s52
      %s70 = sphi 0, %s70
      %s72 = sphi 0, %s70
      %s73 = sphi 0, %s72
      %s87 = sphi 0, %s73
      %s91 = sphi 0, %s91
      %s93 = sphi 0, %s91
      %s94 = sphi 0, %s93
      %s108 = sphi 0, %s94
      %s112 = sphi 0, %s112
      %s114 = sphi 0, %s112
      %s115 = sphi 0, %s114
      %s129 = sphi 0, %s115
      %s135 = sphi 0, %s137
      %s138 = sphi 0, %s135
      %s139 = sphi 0, %s138
      %s155 = sphi 0, %s139
    $region4: #{tpu_custom_call.1} parent=1 // loop_header_branch
      %18 = sbr.rel (%p16) target = $region8
    $region5: #{tpu_custom_call.1} parent=1 // loop_body
      %s20 = ssub.s32 %s15, 1
      %s21 = ssub.s32 %s15, 2
      %s22 = sadd.s32 %s15, 1
      %s23 = ssub.s32 %s15, %s22
      %p24 = scmp.eq.s32.totalorder %s23, 0
      %s26 = sadd.s32 %s25, 1
      %s27 = scalar_select %p24, %s25, %s26
      %p30 = pneg %p24
      %p31 = scmp.eq.s32.totalorder %s15, 1
      %p32 = por %p30, %p31
      %p33 = scmp.ne.s32.totalorder %s25, %s28
      %p34 = scmp.eq.s32.totalorder %s15, 0
      %p35 = por %p33, %p34
      %p36 = scmp.ne.s32.totalorder %s25, %s28
      %p37 = scmp.eq.s32.totalorder %s20, 1
      %p38 = por %p36, %p37
      %p39 = scmp.ne.s32.totalorder %s28, %s29
      %p40 = scmp.eq.s32.totalorder %s20, 0
      %p41 = por %p39, %p40
      %p42 = scmp.ne.s32.totalorder %s28, %s29
      %p43 = scmp.eq.s32.totalorder %s21, 1
      %p44 = por %p42, %p43
      %p46 = scmp.ne.s32.totalorder %s29, %s45
      %p47 = scmp.eq.s32.totalorder %s21, 0
      %p48 = por %p46, %p47
      %s50 = sadd.s32 %s49, 1
      %p53 = scmp.eq.s32.totalorder %s15, 1
      %p54 = scmp.ne.s32.totalorder %s49, %s51
      %p55 = scmp.eq.s32.totalorder %s15, 0
      %p56 = por %p54, %p55
      %p57 = scmp.ne.s32.totalorder %s49, %s51
      %p58 = scmp.eq.s32.totalorder %s20, 1
      %p59 = por %p57, %p58
      %p60 = scmp.ne.s32.totalorder %s51, %s52
      %p61 = scmp.eq.s32.totalorder %s20, 0
      %p62 = por %p60, %p61
      %p63 = scmp.ne.s32.totalorder %s51, %s52
      %p64 = scmp.eq.s32.totalorder %s21, 1
      %p65 = por %p63, %p64
      %p67 = scmp.ne.s32.totalorder %s52, %s66
      %p68 = scmp.eq.s32.totalorder %s21, 0
      %p69 = por %p67, %p68
      %s71 = sadd.s32 %s70, 1
      %p74 = scmp.eq.s32.totalorder %s15, 1
      %p75 = scmp.ne.s32.totalorder %s70, %s72
      %p76 = scmp.eq.s32.totalorder %s15, 0
      %p77 = por %p75, %p76
      %p78 = scmp.ne.s32.totalorder %s70, %s72
      %p79 = scmp.eq.s32.totalorder %s20, 1
      %p80 = por %p78, %p79
      %p81 = scmp.ne.s32.totalorder %s72, %s73
      %p82 = scmp.eq.s32.totalorder %s20, 0
      %p83 = por %p81, %p82
      %p84 = scmp.ne.s32.totalorder %s72, %s73
      %p85 = scmp.eq.s32.totalorder %s21, 1
      %p86 = por %p84, %p85
      %p88 = scmp.ne.s32.totalorder %s73, %s87
      %p89 = scmp.eq.s32.totalorder %s21, 0
      %p90 = por %p88, %p89
      %s92 = sadd.s32 %s91, 1
      %p95 = scmp.eq.s32.totalorder %s15, 1
      %p96 = scmp.ne.s32.totalorder %s91, %s93
      %p97 = scmp.eq.s32.totalorder %s15, 0
      %p98 = por %p96, %p97
      %p99 = scmp.ne.s32.totalorder %s91, %s93
      %p100 = scmp.eq.s32.totalorder %s20, 1
      %p101 = por %p99, %p100
      %p102 = scmp.ne.s32.totalorder %s93, %s94
      %p103 = scmp.eq.s32.totalorder %s20, 0
      %p104 = por %p102, %p103
      %p105 = scmp.ne.s32.totalorder %s93, %s94
      %p106 = scmp.eq.s32.totalorder %s21, 1
      %p107 = por %p105, %p106
      %p109 = scmp.ne.s32.totalorder %s94, %s108
      %p110 = scmp.eq.s32.totalorder %s21, 0
      %p111 = por %p109, %p110
      %s113 = sadd.s32 %s112, 1
      %p116 = scmp.eq.s32.totalorder %s15, 1
      %p117 = scmp.ne.s32.totalorder %s112, %s114
      %p118 = scmp.eq.s32.totalorder %s15, 0
      %p119 = por %p117, %p118
      %p120 = scmp.ne.s32.totalorder %s112, %s114
      %p121 = scmp.eq.s32.totalorder %s20, 1
      %p122 = por %p120, %p121
      %p123 = scmp.ne.s32.totalorder %s114, %s115
      %p124 = scmp.eq.s32.totalorder %s20, 0
      %p125 = por %p123, %p124
      %p126 = scmp.ne.s32.totalorder %s114, %s115
      %p127 = scmp.eq.s32.totalorder %s21, 1
      %p128 = por %p126, %p127
      %p130 = scmp.ne.s32.totalorder %s115, %s129
      %p131 = scmp.eq.s32.totalorder %s21, 0
      %p132 = por %p130, %p131
      %s133 = ssub.s32 %s15, %s22
      %p134 = scmp.eq.s32.totalorder %s133, 0
      %s136 = sadd.s32 %s135, 1
      %s137 = scalar_select %p134, %s135, %s136
      %p140 = pneg %p134
      %p141 = scmp.eq.s32.totalorder %s15, 1
      %p142 = por %p140, %p141
      %p143 = scmp.ne.s32.totalorder %s135, %s138
      %p144 = scmp.eq.s32.totalorder %s15, 0
      %p145 = por %p143, %p144
      %p146 = scmp.ne.s32.totalorder %s135, %s138
      %p147 = scmp.eq.s32.totalorder %s20, 1
      %p148 = por %p146, %p147
      %p149 = scmp.ne.s32.totalorder %s138, %s139
      %p150 = scmp.eq.s32.totalorder %s20, 0
      %p151 = por %p149, %p150
      %p152 = scmp.ne.s32.totalorder %s138, %s139
      %p153 = scmp.eq.s32.totalorder %s21, 1
      %p154 = por %p152, %p153
      %p156 = scmp.ne.s32.totalorder %s139, %s155
      %p157 = scmp.eq.s32.totalorder %s21, 0
      %p158 = por %p156, %p157
      %p159 = scmp.le.s32.totalorder 1, %s15
      %p160 = scmp.lt.s32.totalorder %s15, 3
      %p161 = pnand %p159, %p160
      %p162 = pneg %p161
      // Predicated region
      $region9: #{tpu_custom_call.1} parent=5 // pred_check
        _
      $region10: #{tpu_custom_call.1} parent=5 // pred_check_branch
        %164 = sbr.rel (%p161) target = $region12
      $region11: #{tpu_custom_call.1} parent=5 // pred_region
        %s165 = ssub.s32 %s15, 1
        // Predicated region
        $region13: #{tpu_custom_call.1} parent=11 // pred_check
          %p166 = pneg %p62
        $region14: #{tpu_custom_call.1} parent=11 // pred_check_branch
          %168 = sbr.rel (%p166) target = $region16
        $region15: #{tpu_custom_call.1} parent=11 // pred_region
          _
        $region16: #{tpu_custom_call.1} parent=11 // pred_fallthru
          _
        // Predicated region
        $region17: #{tpu_custom_call.1} parent=11 // pred_check
          %p169 = pneg %p83
        $region18: #{tpu_custom_call.1} parent=11 // pred_check_branch
          %171 = sbr.rel (%p169) target = $region20
        $region19: #{tpu_custom_call.1} parent=11 // pred_region
          _
        $region20: #{tpu_custom_call.1} parent=11 // pred_fallthru
          _
        // Predicated region
        $region21: #{tpu_custom_call.1} parent=11 // pred_check
          %p172 = pneg %p104
        $region22: #{tpu_custom_call.1} parent=11 // pred_check_branch
          %174 = sbr.rel (%p172) target = $region24
        $region23: #{tpu_custom_call.1} parent=11 // pred_region
          %s176 = ssub.s32 9216, 9216
          %177 = vsyncadd [#allocation4], %s176
          %s178 = sshll.u32 [#allocation3], 4
          %s179 = int_to_ptr.vmem [resolvable:$true] %s178
          %184 = dma.hbm_to_vmem [thread:$0]  %s3, 9216, %s179, [#allocation4], 64, 64, 4
        $region24: #{tpu_custom_call.1} parent=11 // pred_fallthru
          _
        // Predicated region
        $region25: #{tpu_custom_call.1} parent=11 // pred_check
          %p185 = pneg %p125
        $region26: #{tpu_custom_call.1} parent=11 // pred_check_branch
          %187 = sbr.rel (%p185) target = $region28
        $region27: #{tpu_custom_call.1} parent=11 // pred_region
          _
        $region28: #{tpu_custom_call.1} parent=11 // pred_fallthru
          _
      $region12: #{tpu_custom_call.1} parent=5 // pred_fallthru
        _
      %p188 = scmp.lt.s32.totalorder %s15, 2
      // Predicated region
      $region29: #{tpu_custom_call.1} parent=5 // pred_check
        %p189 = pneg %p188
      $region30: #{tpu_custom_call.1} parent=5 // pred_check_branch
        %191 = sbr.rel (%p189) target = $region32
      $region31: #{tpu_custom_call.1} parent=5 // pred_region
        // Predicated region
        $region33: #{tpu_custom_call.1} parent=31 // pred_check
          %p192 = pneg %p35
        $region34: #{tpu_custom_call.1} parent=31 // pred_check_branch
          %194 = sbr.rel (%p192) target = $region36
        $region35: #{tpu_custom_call.1} parent=31 // pred_region
          %p195 = scmp.lt.s32.totalorder %s15, 1
          %s196 = scalar_select %p195, %s15, 1
          %s197 = smul.addr %s196, 32
          %s198 = smul.addr %s197, 4
          %s199 = scalar_lea.vmem %s0, %s198
        $region36: #{tpu_custom_call.1} parent=31 // pred_fallthru
          _
      $region32: #{tpu_custom_call.1} parent=5 // pred_fallthru
        _
      %p200 = scmp.le.s32.totalorder 1, %s15
      %p201 = scmp.lt.s32.totalorder %s15, 3
      %p202 = pnand %p200, %p201
      %p203 = pneg %p202
      // Predicated region
      $region37: #{tpu_custom_call.1} parent=5 // pred_check
        _
      $region38: #{tpu_custom_call.1} parent=5 // pred_check_branch
        %205 = sbr.rel (%p202) target = $region40
      $region39: #{tpu_custom_call.1} parent=5 // pred_region
        %s206 = ssub.s32 %s15, 1
        // Predicated region
        $region41: #{tpu_custom_call.1} parent=39 // pred_check
          %p207 = pneg %p104
        $region42: #{tpu_custom_call.1} parent=39 // pred_check_branch
          %209 = sbr.rel (%p207) target = $region44
        $region43: #{tpu_custom_call.1} parent=39 // pred_region
          %210 = dma.done [#allocation4], 9216
        $region44: #{tpu_custom_call.1} parent=39 // pred_fallthru
          _
        %p211 = scmp.lt.s32.totalorder %s20, 1
        %s212 = scalar_select %p211, %s20, 1
        %s213 = smul.addr %s212, 32
        %s214 = smul.addr %s213, 4
        %s215 = scalar_lea.vmem %s0, %s214
        %p216 = pneg %p41
        %p217 = pneg %p38
        %p218 = pneg %p62
        %p219 = pneg %p59
        %p220 = pneg %p83
        %p221 = pneg %p80
        %p222 = pneg %p104
        %p223 = pneg %p101
        %p224 = pneg %p125
        %p225 = pneg %p122
        %p226 = pneg %p151
        %p227 = pneg %p148
        %s228 = sand.u32 %s138, 1
        %s229 = scalar_lea.sflag [#allocation5], %s228
        %s230 = sand.u32 %s138, 1
        %s231 = smul.addr %s230, 256
        %s232 = scalar_lea.vmem [#allocation6], %s231
        %p233 = scmp.lt.s32.totalorder %s20, 1
        %s234 = scalar_select %p233, %s20, 1
        %s235 = smul.addr %s234, 32
        %s236 = smul.addr %s235, 4
        %s237 = scalar_lea.vmem %s0, %s236
        %239 = vst [vmem:[#allocation2] sm:$0xff] 0.0
        %240 = vst [vmem:[#allocation2 + $0x8] sm:$0xff] 0.0
        %241 = vst [vmem:[#allocation2 + $0x10] sm:$0x3] 0.0
        %242 = vst [vmem:[#allocation2 + $0x18] sm:$0xff] 0.0
        %243 = vst [vmem:[#allocation2 + $0x20] sm:$0xff] 0.0
        %244 = vst [vmem:[#allocation2 + $0x28] sm:$0x3] 0.0
        %245 = vst [vmem:[#allocation2 + $0x30] sm:$0xff] 0.0
        %246 = vst [vmem:[#allocation2 + $0x38] sm:$0xff] 0.0
        %247 = vst [vmem:[#allocation2 + $0x40] sm:$0x3] 0.0
        %248 = vst [vmem:[#allocation2 + $0x48] sm:$0xff] 0.0
        %249 = vst [vmem:[#allocation2 + $0x50] sm:$0xff] 0.0
        %250 = vst [vmem:[#allocation2 + $0x58] sm:$0x3] 0.0
        %251 = vst [vmem:[#allocation2 + $0x60] sm:$0xff] 0.0
        %252 = vst [vmem:[#allocation2 + $0x68] sm:$0xff] 0.0
        %253 = vst [vmem:[#allocation2 + $0x70] sm:$0x3] 0.0
        %254 = vst [vmem:[#allocation2 + $0x78] sm:$0xff] 0.0
        %255 = vst [vmem:[#allocation2 + $0x80] sm:$0xff] 0.0
        %256 = vst [vmem:[#allocation2 + $0x88] sm:$0x3] 0.0
        %257 = vst [vmem:[#allocation2 + $0x90] sm:$0xff] 0.0
        %258 = vst [vmem:[#allocation2 + $0x98] sm:$0xff] 0.0
        %259 = vst [vmem:[#allocation2 + $0xa0] sm:$0x3] 0.0
        %260 = vst [vmem:[#allocation2 + $0xa8] sm:$0xff] 0.0
        %261 = vst [vmem:[#allocation2 + $0xb0] sm:$0xff] 0.0
        %262 = vst [vmem:[#allocation2 + $0xb8] sm:$0x3] 0.0
        %263 = vst [vmem:[#allocation2 + $0xc0] sm:$0xff] 0.0
        %264 = vst [vmem:[#allocation2 + $0xc8] sm:$0xff] 0.0
        %265 = vst [vmem:[#allocation2 + $0xd0] sm:$0x3] 0.0
        %266 = vst [vmem:[#allocation2 + $0xd8] sm:$0xff] 0.0
        %267 = vst [vmem:[#allocation2 + $0xe0] sm:$0xff] 0.0
        %268 = vst [vmem:[#allocation2 + $0xe8] sm:$0x3] 0.0
        %269 = vst [vmem:[#allocation2 + $0xf0] sm:$0xff] 0.0
        %270 = vst [vmem:[#allocation2 + $0xf8] sm:$0xff] 0.0
        %271 = vst [vmem:[#allocation2 + $0x100] sm:$0x3] 0.0
        %272 = vst [vmem:[#allocation2 + $0x108] sm:$0xff] 0.0
        %273 = vst [vmem:[#allocation2 + $0x110] sm:$0xff] 0.0
        %274 = vst [vmem:[#allocation2 + $0x118] sm:$0x3] 0.0
        %275 = vst [vmem:[#allocation2 + $0x120] sm:$0xff] 0.0
        %276 = vst [vmem:[#allocation2 + $0x128] sm:$0xff] 0.0
        %277 = vst [vmem:[#allocation2 + $0x130] sm:$0x3] 0.0
        %278 = vst [vmem:[#allocation2 + $0x138] sm:$0xff] 0.0
        %279 = vst [vmem:[#allocation2 + $0x140] sm:$0xff] 0.0
        %280 = vst [vmem:[#allocation2 + $0x148] sm:$0x3] 0.0
        %281 = vst [vmem:[#allocation2 + $0x150] sm:$0xff] 0.0
        %282 = vst [vmem:[#allocation2 + $0x158] sm:$0xff] 0.0
        %283 = vst [vmem:[#allocation2 + $0x160] sm:$0x3] 0.0
        %284 = vst [vmem:[#allocation2 + $0x168] sm:$0xff] 0.0
        %285 = vst [vmem:[#allocation2 + $0x170] sm:$0xff] 0.0
        %286 = vst [vmem:[#allocation2 + $0x178] sm:$0x3] 0.0
        %287 = vst [vmem:[#allocation2 + $0x180] sm:$0xff] 0.0
        %288 = vst [vmem:[#allocation2 + $0x188] sm:$0xff] 0.0
        %289 = vst [vmem:[#allocation2 + $0x190] sm:$0x3] 0.0
        %290 = vst [vmem:[#allocation2 + $0x198] sm:$0xff] 0.0
        %291 = vst [vmem:[#allocation2 + $0x1a0] sm:$0xff] 0.0
        %292 = vst [vmem:[#allocation2 + $0x1a8] sm:$0x3] 0.0
        %v293 = vld [vmem:[%s237] sm:$0xf]
        %v294 = vld [vmem:[%s237 + $0x4] sm:$0xf]
        %v295 = vld [vmem:[%s237 + $0x8] sm:$0xf]
        %v296 = vld [vmem:[%s237 + $0xc] sm:$0xf]
        %v297 = vld [vmem:[%s237 + $0x10] sm:$0xf]
        %v298 = vld [vmem:[%s237 + $0x14] sm:$0xf]
        %v299 = vld [vmem:[%s237 + $0x18] sm:$0xf]
        %v300 = vld [vmem:[%s237 + $0x1c] sm:$0xf]
        %v301 = vld [vmem:[%s237 + $0x20] sm:$0xf]
        %v302 = vld [vmem:[%s237 + $0x24] sm:$0xf]
        %v303 = vld [vmem:[%s237 + $0x28] sm:$0xf]
        %v304 = vld [vmem:[%s237 + $0x2c] sm:$0xf]
        %v305 = vld [vmem:[%s237 + $0x30] sm:$0xf]
        %v306 = vld [vmem:[%s237 + $0x34] sm:$0xf]
        %v307 = vld [vmem:[%s237 + $0x38] sm:$0xf]
        %v308 = vld [vmem:[%s237 + $0x3c] sm:$0xf]
        %v309 = vld [vmem:[%s237 + $0x40] sm:$0xf]
        %v310 = vld [vmem:[%s237 + $0x44] sm:$0xf]
        %v311 = vld [vmem:[%s237 + $0x48] sm:$0xf]
        %v312 = vld [vmem:[%s237 + $0x4c] sm:$0xf]
        %v313 = vld [vmem:[%s237 + $0x50] sm:$0xf]
        %v314 = vld [vmem:[%s237 + $0x54] sm:$0xf]
        %v315 = vld [vmem:[%s237 + $0x58] sm:$0xf]
        %v316 = vld [vmem:[%s237 + $0x5c] sm:$0xf]
        %v317 = vld [vmem:[%s237 + $0x60] sm:$0xf]
        %v318 = vld [vmem:[%s237 + $0x64] sm:$0xf]
        %v319 = vld [vmem:[%s237 + $0x68] sm:$0xf]
        %v320 = vld [vmem:[%s237 + $0x6c] sm:$0xf]
        %v321 = vld [vmem:[%s237 + $0x70] sm:$0xf]
        %v322 = vld [vmem:[%s237 + $0x74] sm:$0xf]
        %v323 = vld [vmem:[%s237 + $0x78] sm:$0xf]
        %v324 = vld [vmem:[%s237 + $0x7c] sm:$0xf]
        %v325 = vld [vmem:[%s1] sm:$0x3]
        %v326 = vld [vmem:[%s2] sm:$0x1]
        %v328 = vlaneseq
        %v329 = vshrl.u32 %v328, 7
        %v330 = vsub.s32 0, %v329
        %v331 = vrot.slane %v326, %v330
        %v365 = vunpack.c.l.b16 %v293
        %v366 = vunpack.c.l.b16 %v294
        %v367 = vunpack.c.l.b16 %v295
        %v368 = vunpack.c.l.b16 %v296
        %v369 = vunpack.c.l.b16 %v297
        %v370 = vunpack.c.l.b16 %v298
        %v371 = vunpack.c.l.b16 %v299
        %v372 = vunpack.c.l.b16 %v300
        %v373 = vunpack.c.l.b16 %v301
        %v374 = vunpack.c.l.b16 %v302
        %v375 = vunpack.c.l.b16 %v303
        %v376 = vunpack.c.l.b16 %v304
        %v377 = vunpack.c.l.b16 %v305
        %v378 = vunpack.c.l.b16 %v306
        %v379 = vunpack.c.l.b16 %v307
        %v380 = vunpack.c.l.b16 %v308
        %v381 = vunpack.c.l.b16 %v309
        %v382 = vunpack.c.l.b16 %v310
        %v383 = vunpack.c.l.b16 %v311
        %v384 = vunpack.c.l.b16 %v312
        %v385 = vunpack.c.l.b16 %v313
        %v386 = vunpack.c.l.b16 %v314
        %v387 = vunpack.c.l.b16 %v315
        %v388 = vunpack.c.l.b16 %v316
        %v389 = vunpack.c.l.b16 %v317
        %v390 = vunpack.c.l.b16 %v318
        %v391 = vunpack.c.l.b16 %v319
        %v392 = vunpack.c.l.b16 %v320
        %v393 = vunpack.c.l.b16 %v321
        %v394 = vunpack.c.l.b16 %v322
        %v395 = vunpack.c.l.b16 %v323
        %v396 = vunpack.c.l.b16 %v324
        %v397 = vpack.c.b16 %v366, %v365
        %v398 = vpack.c.b16 %v368, %v367
        %v399 = vpack.c.b16 %v370, %v369
        %v400 = vpack.c.b16 %v372, %v371
        %v401 = vpack.c.b16 %v374, %v373
        %v402 = vpack.c.b16 %v376, %v375
        %v403 = vpack.c.b16 %v378, %v377
        %v404 = vpack.c.b16 %v380, %v379
        %v405 = vpack.c.b16 %v382, %v381
        %v406 = vpack.c.b16 %v384, %v383
        %v407 = vpack.c.b16 %v386, %v385
        %v408 = vpack.c.b16 %v388, %v387
        %v409 = vpack.c.b16 %v390, %v389
        %v410 = vpack.c.b16 %v392, %v391
        %v411 = vpack.c.b16 %v394, %v393
        %v412 = vpack.c.b16 %v396, %v395
        %vm413 = vcmask 31744
        %v415 = vsel %vm413, %v397, 0
        %v418 = vsel %vm413, %v398, 0
        %v421 = vsel %vm413, %v399, 0
        %v424 = vsel %vm413, %v400, 0
        %v427 = vsel %vm413, %v401, 0
        %v430 = vsel %vm413, %v402, 0
        %v433 = vsel %vm413, %v403, 0
        %v436 = vsel %vm413, %v404, 0
        %v439 = vsel %vm413, %v405, 0
        %v442 = vsel %vm413, %v406, 0
        %v445 = vsel %vm413, %v407, 0
        %v448 = vsel %vm413, %v408, 0
        %v451 = vsel %vm413, %v409, 0
        %v454 = vsel %vm413, %v410, 0
        %v457 = vsel %vm413, %v411, 0
        %v460 = vsel %vm413, %v412, 0
        %vm462 = vcmask 1041408
        %v464 = vsel %vm462, %v325, 0
        %466 = vmatprep.subr.bf16.mxu0 0
        %467 = vmatpush1.bf16.msra.mxu0 %v464
        %468 = vmatprep.subr.bf16.mxu0 0
        %469 = vmatpush1.bf16.msra.mxu0 0
        %470 = vmatprep.subr.bf16.mxu0 0
        %471 = vmatpush1.bf16.msra.mxu0 0
        %472 = vmatprep.subr.bf16.mxu0 0
        %473 = vmatpush1.bf16.msra.mxu0 0
        %474 = vmatprep.subr.bf16.mxu0 0
        %475 = vmatpush1.bf16.msra.mxu0 0
        %476 = vmatprep.subr.bf16.mxu0 0
        %477 = vmatpush1.bf16.msra.mxu0 0
        %478 = vmatprep.subr.bf16.mxu0 0
        %479 = vmatpush1.bf16.msra.mxu0 0
        %480 = vmatprep.subr.bf16.mxu0 0
        %481 = vmatpush1.bf16.msra.mxu0 0
        %482 = vmatprep.subr.bf16.mxu0 0
        %483 = vmatpush1.bf16.msra.mxu0 0
        %484 = vmatprep.subr.bf16.mxu0 0
        %485 = vmatpush1.bf16.msra.mxu0 0
        %486 = vmatprep.subr.bf16.mxu0 0
        %487 = vmatpush1.bf16.msra.mxu0 0
        %488 = vmatprep.subr.bf16.mxu0 0
        %489 = vmatpush1.bf16.msra.mxu0 0
        %490 = vmatprep.subr.bf16.mxu0 0
        %491 = vmatpush1.bf16.msra.mxu0 0
        %492 = vmatprep.subr.bf16.mxu0 0
        %493 = vmatpush1.bf16.msra.mxu0 0
        %494 = vmatprep.subr.bf16.mxu0 0
        %495 = vmatpush1.bf16.msra.mxu0 0
        %496 = vmatprep.subr.bf16.mxu0 0
        %497 = vmatpush1.bf16.msra.mxu0 0
        %498 = vmatprep.mubr.bf16.mxu0 0
        %499 = vmatmul.mubr.bf16.gmra.mrb[0].mxu0 %v415
        %v500 = vpop.f32.mrb[0].mxu0
        %v501 = vadd.f32 %v331, %v500
        %v502 = vpop.f32.mrb[0].mxu0
        %v503 = vpop.f32.mrb[0].mxu0
        %v504 = vadd.f32 %v331, %v503
        %v505 = vpop.f32.mrb[0].mxu0
        %506 = vmatprep.mubr.bf16.mxu0 0
        %507 = vmatmul.mubr.bf16.gmra.mrb[0].mxu0 %v418
        %v508 = vpop.f32.mrb[0].mxu0
        %v509 = vadd.f32 %v331, %v508
        %v510 = vpop.f32.mrb[0].mxu0
        %v511 = vpop.f32.mrb[0].mxu0
        %v512 = vadd.f32 %v331, %v511
        %v513 = vpop.f32.mrb[0].mxu0
        %514 = vmatprep.mubr.bf16.mxu0 0
        %515 = vmatmul.mubr.bf16.gmra.mrb[0].mxu0 %v421
        %v516 = vpop.f32.mrb[0].mxu0
        %v517 = vadd.f32 %v331, %v516
        %v518 = vpop.f32.mrb[0].mxu0
        %v519 = vpop.f32.mrb[0].mxu0
        %v520 = vadd.f32 %v331, %v519
        %v521 = vpop.f32.mrb[0].mxu0
        %522 = vmatprep.mubr.bf16.mxu0 0
        %523 = vmatmul.mubr.bf16.gmra.mrb[0].mxu0 %v424
        %v524 = vpop.f32.mrb[0].mxu0
        %v525 = vadd.f32 %v331, %v524
        %v526 = vpop.f32.mrb[0].mxu0
        %v527 = vpop.f32.mrb[0].mxu0
        %v528 = vadd.f32 %v331, %v527
        %v529 = vpop.f32.mrb[0].mxu0
        %530 = vmatprep.mubr.bf16.mxu0 0
        %531 = vmatmul.mubr.bf16.gmra.mrb[0].mxu0 %v427
        %v532 = vpop.f32.mrb[0].mxu0
        %v533 = vadd.f32 %v331, %v532
        %v534 = vpop.f32.mrb[0].mxu0
        %v535 = vpop.f32.mrb[0].mxu0
        %v536 = vadd.f32 %v331, %v535
        %v537 = vpop.f32.mrb[0].mxu0
        %538 = vmatprep.mubr.bf16.mxu0 0
        %539 = vmatmul.mubr.bf16.gmra.mrb[0].mxu0 %v430
        %v540 = vpop.f32.mrb[0].mxu0
        %v541 = vadd.f32 %v331, %v540
        %v542 = vpop.f32.mrb[0].mxu0
        %v543 = vpop.f32.mrb[0].mxu0
        %v544 = vadd.f32 %v331, %v543
        %v545 = vpop.f32.mrb[0].mxu0
        %546 = vmatprep.mubr.bf16.mxu0 0
        %547 = vmatmul.mubr.bf16.gmra.mrb[0].mxu0 %v433
        %v548 = vpop.f32.mrb[0].mxu0
        %v549 = vadd.f32 %v331, %v548
        %v550 = vpop.f32.mrb[0].mxu0
        %v551 = vpop.f32.mrb[0].mxu0
        %v552 = vadd.f32 %v331, %v551
        %v553 = vpop.f32.mrb[0].mxu0
        %554 = vmatprep.mubr.bf16.mxu0 0
        %555 = vmatmul.mubr.bf16.gmra.mrb[0].mxu0 %v436
        %v556 = vpop.f32.mrb[0].mxu0
        %v557 = vadd.f32 %v331, %v556
        %v558 = vpop.f32.mrb[0].mxu0
        %v559 = vpop.f32.mrb[0].mxu0
        %v560 = vadd.f32 %v331, %v559
        %v561 = vpop.f32.mrb[0].mxu0
        %562 = vmatprep.mubr.bf16.mxu0 0
        %563 = vmatmul.mubr.bf16.gmra.mrb[0].mxu0 %v439
        %v564 = vpop.f32.mrb[0].mxu0
        %v565 = vadd.f32 %v331, %v564
        %v566 = vpop.f32.mrb[0].mxu0
        %v567 = vpop.f32.mrb[0].mxu0
        %v568 = vadd.f32 %v331, %v567
        %v569 = vpop.f32.mrb[0].mxu0
        %570 = vmatprep.mubr.bf16.mxu0 0
        %571 = vmatmul.mubr.bf16.gmra.mrb[0].mxu0 %v442
        %v572 = vpop.f32.mrb[0].mxu0
        %v573 = vadd.f32 %v331, %v572
        %v574 = vpop.f32.mrb[0].mxu0
        %v575 = vpop.f32.mrb[0].mxu0
        %v576 = vadd.f32 %v331, %v575
        %v577 = vpop.f32.mrb[0].mxu0
        %578 = vmatprep.mubr.bf16.mxu0 0
        %579 = vmatmul.mubr.bf16.gmra.mrb[0].mxu0 %v445
        %v580 = vpop.f32.mrb[0].mxu0
        %v581 = vadd.f32 %v331, %v580
        %v582 = vpop.f32.mrb[0].mxu0
        %v583 = vpop.f32.mrb[0].mxu0
        %v584 = vadd.f32 %v331, %v583
        %v585 = vpop.f32.mrb[0].mxu0
        %586 = vmatprep.mubr.bf16.mxu0 0
        %587 = vmatmul.mubr.bf16.gmra.mrb[0].mxu0 %v448
        %v588 = vpop.f32.mrb[0].mxu0
        %v589 = vadd.f32 %v331, %v588
        %v590 = vpop.f32.mrb[0].mxu0
        %v591 = vpop.f32.mrb[0].mxu0
        %v592 = vadd.f32 %v331, %v591
        %v593 = vpop.f32.mrb[0].mxu0
        %594 = vmatprep.mubr.bf16.mxu0 0
        %595 = vmatmul.mubr.bf16.gmra.mrb[0].mxu0 %v451
        %v596 = vpop.f32.mrb[0].mxu0
        %v597 = vadd.f32 %v331, %v596
        %v598 = vpop.f32.mrb[0].mxu0
        %v599 = vpop.f32.mrb[0].mxu0
        %v600 = vadd.f32 %v331, %v599
        %v601 = vpop.f32.mrb[0].mxu0
        %602 = vmatprep.mubr.bf16.mxu0 0
        %603 = vmatmul.mubr.bf16.gmra.mrb[0].mxu0 %v454
        %v604 = vpop.f32.mrb[0].mxu0
        %v605 = vadd.f32 %v331, %v604
        %v606 = vpop.f32.mrb[0].mxu0
        %v607 = vpop.f32.mrb[0].mxu0
        %v608 = vadd.f32 %v331, %v607
        %v609 = vpop.f32.mrb[0].mxu0
        %610 = vmatprep.mubr.bf16.mxu0 0
        %611 = vmatmul.mubr.bf16.gmra.mrb[0].mxu0 %v457
        %v612 = vpop.f32.mrb[0].mxu0
        %v613 = vadd.f32 %v331, %v612
        %v614 = vpop.f32.mrb[0].mxu0
        %v615 = vpop.f32.mrb[0].mxu0
        %v616 = vadd.f32 %v331, %v615
        %v617 = vpop.f32.mrb[0].mxu0
        %618 = vmatprep.mubr.bf16.mxu0 0
        %619 = vmatmul.mubr.bf16.gmra.mrb[0].mxu0 %v460
        %v620 = vpop.f32.mrb[0].mxu0
        %v621 = vadd.f32 %v331, %v620
        %v622 = vpop.f32.mrb[0].mxu0
        %v623 = vpop.f32.mrb[0].mxu0
        %v624 = vadd.f32 %v331, %v623
        %v625 = vpop.f32.mrb[0].mxu0
        %626 = vdwg.mxu0
        %v627 = vmax.f32 %v501, 0.0
        %v628 = vmax.f32 %v504, 0.0
        %v629 = vmax.f32 %v509, 0.0
        %v630 = vmax.f32 %v512, 0.0
        %v631 = vmax.f32 %v517, 0.0
        %v632 = vmax.f32 %v520, 0.0
        %v633 = vmax.f32 %v525, 0.0
        %v634 = vmax.f32 %v528, 0.0
        %v635 = vmax.f32 %v533, 0.0
        %v636 = vmax.f32 %v536, 0.0
        %v637 = vmax.f32 %v541, 0.0
        %v638 = vmax.f32 %v544, 0.0
        %v639 = vmax.f32 %v549, 0.0
        %v640 = vmax.f32 %v552, 0.0
        %v641 = vmax.f32 %v557, 0.0
        %v642 = vmax.f32 %v560, 0.0
        %v643 = vmax.f32 %v565, 0.0
        %v644 = vmax.f32 %v568, 0.0
        %v645 = vmax.f32 %v573, 0.0
        %v646 = vmax.f32 %v576, 0.0
        %v647 = vmax.f32 %v581, 0.0
        %v648 = vmax.f32 %v584, 0.0
        %v649 = vmax.f32 %v589, 0.0
        %v650 = vmax.f32 %v592, 0.0
        %v651 = vmax.f32 %v597, 0.0
        %v652 = vmax.f32 %v600, 0.0
        %v653 = vmax.f32 %v605, 0.0
        %v654 = vmax.f32 %v608, 0.0
        %v655 = vmax.f32 %v613, 0.0
        %v656 = vmax.f32 %v616, 0.0
        %v657 = vmax.f32 %v621, 0.0
        %v658 = vmax.f32 %v624, 0.0
        %s659 = scalar_lea.vmem [#allocation2], 24
        %660 = vst [vmem:[%s659 + $0x1] sm:$0xff] %v627
        %661 = vst [vmem:[%s659 + $0x9] sm:$0xff] %v628
        %662 = vst [vmem:[%s659 + $0x19] sm:$0xff] %v629
        %663 = vst [vmem:[%s659 + $0x21] sm:$0xff] %v630
        %664 = vst [vmem:[%s659 + $0x31] sm:$0xff] %v631
        %665 = vst [vmem:[%s659 + $0x39] sm:$0xff] %v632
        %666 = vst [vmem:[%s659 + $0x49] sm:$0xff] %v633
        %667 = vst [vmem:[%s659 + $0x51] sm:$0xff] %v634
        %668 = vst [vmem:[%s659 + $0x61] sm:$0xff] %v635
        %669 = vst [vmem:[%s659 + $0x69] sm:$0xff] %v636
        %670 = vst [vmem:[%s659 + $0x79] sm:$0xff] %v637
        %671 = vst [vmem:[%s659 + $0x81] sm:$0xff] %v638
        %672 = vst [vmem:[%s659 + $0x91] sm:$0xff] %v639
        %673 = vst [vmem:[%s659 + $0x99] sm:$0xff] %v640
        %674 = vst [vmem:[%s659 + $0xa9] sm:$0xff] %v641
        %675 = vst [vmem:[%s659 + $0xb1] sm:$0xff] %v642
        %676 = vst [vmem:[%s659 + $0xc1] sm:$0xff] %v643
        %677 = vst [vmem:[%s659 + $0xc9] sm:$0xff] %v644
        %678 = vst [vmem:[%s659 + $0xd9] sm:$0xff] %v645
        %679 = vst [vmem:[%s659 + $0xe1] sm:$0xff] %v646
        %680 = vst [vmem:[%s659 + $0xf1] sm:$0xff] %v647
        %681 = vst [vmem:[%s659 + $0xf9] sm:$0xff] %v648
        %682 = vst [vmem:[%s659 + $0x109] sm:$0xff] %v649
        %683 = vst [vmem:[%s659 + $0x111] sm:$0xff] %v650
        %684 = vst [vmem:[%s659 + $0x121] sm:$0xff] %v651
        %685 = vst [vmem:[%s659 + $0x129] sm:$0xff] %v652
        %686 = vst [vmem:[%s659 + $0x139] sm:$0xff] %v653
        %687 = vst [vmem:[%s659 + $0x141] sm:$0xff] %v654
        %688 = vst [vmem:[%s659 + $0x151] sm:$0xff] %v655
        %689 = vst [vmem:[%s659 + $0x159] sm:$0xff] %v656
        %690 = vst [vmem:[%s659 + $0x169] sm:$0xff] %v657
        %691 = vst [vmem:[%s659 + $0x171] sm:$0xff] %v658
        %v692 = vld [vmem:[#allocation2] sm:$0xff]
        %v693 = vld [vmem:[#allocation2 + $0x8] sm:$0xff]
        %v694 = vld [vmem:[#allocation2 + $0x18] sm:$0xff]
        %v695 = vld [vmem:[#allocation2 + $0x20] sm:$0xff]
        %v696 = vld [vmem:[#allocation2 + $0x30] sm:$0xff]
        %v697 = vld [vmem:[#allocation2 + $0x38] sm:$0xff]
        %v698 = vld [vmem:[#allocation2 + $0x48] sm:$0xff]
        %v699 = vld [vmem:[#allocation2 + $0x50] sm:$0xff]
        %v700 = vld [vmem:[#allocation2 + $0x60] sm:$0xff]
        %v701 = vld [vmem:[#allocation2 + $0x68] sm:$0xff]
        %v702 = vld [vmem:[#allocation2 + $0x78] sm:$0xff]
        %v703 = vld [vmem:[#allocation2 + $0x80] sm:$0xff]
        %v704 = vld [vmem:[#allocation2 + $0x90] sm:$0xff]
        %v705 = vld [vmem:[#allocation2 + $0x98] sm:$0xff]
        %v706 = vld [vmem:[#allocation2 + $0xa8] sm:$0xff]
        %v707 = vld [vmem:[#allocation2 + $0xb0] sm:$0xff]
        %v708 = vld [vmem:[#allocation2 + $0xc0] sm:$0xff]
        %v709 = vld [vmem:[#allocation2 + $0xc8] sm:$0xff]
        %v710 = vld [vmem:[#allocation2 + $0xd8] sm:$0xff]
        %v711 = vld [vmem:[#allocation2 + $0xe0] sm:$0xff]
        %v712 = vld [vmem:[#allocation2 + $0xf0] sm:$0xff]
        %v713 = vld [vmem:[#allocation2 + $0xf8] sm:$0xff]
        %v714 = vld [vmem:[#allocation2 + $0x108] sm:$0xff]
        %v715 = vld [vmem:[#allocation2 + $0x110] sm:$0xff]
        %v716 = vld [vmem:[#allocation2 + $0x120] sm:$0xff]
        %v717 = vld [vmem:[#allocation2 + $0x128] sm:$0xff]
        %v718 = vld [vmem:[#allocation2 + $0x138] sm:$0xff]
        %v719 = vld [vmem:[#allocation2 + $0x140] sm:$0xff]
        %v720 = vld [vmem:[#allocation2 + $0x150] sm:$0xff]
        %v721 = vld [vmem:[#allocation2 + $0x158] sm:$0xff]
        %v722 = vld [vmem:[#allocation2 + $0x168] sm:$0xff]
        %v723 = vld [vmem:[#allocation2 + $0x170] sm:$0xff]
        %v724 = vpack.c.bf16 %v693, %v692
        %v725 = vpack.c.bf16 %v695, %v694
        %v726 = vpack.c.bf16 %v697, %v696
        %v727 = vpack.c.bf16 %v699, %v698
        %v728 = vpack.c.bf16 %v701, %v700
        %v729 = vpack.c.bf16 %v703, %v702
        %v730 = vpack.c.bf16 %v705, %v704
        %v731 = vpack.c.bf16 %v707, %v706
        %v732 = vpack.c.bf16 %v709, %v708
        %v733 = vpack.c.bf16 %v711, %v710
        %v734 = vpack.c.bf16 %v713, %v712
        %v735 = vpack.c.bf16 %v715, %v714
        %v736 = vpack.c.bf16 %v717, %v716
        %v737 = vpack.c.bf16 %v719, %v718
        %v738 = vpack.c.bf16 %v721, %v720
        %v739 = vpack.c.bf16 %v723, %v722
        %v740 = vld [vmem:[#allocation3] sm:$0xf]
        %v741 = vld [vmem:[#allocation3 + $0x4] sm:$0xf]
        %v742 = vld [vmem:[#allocation3 + $0x8] sm:$0xf]
        %v743 = vld [vmem:[#allocation3 + $0xc] sm:$0xf]
        %v744 = vld [vmem:[#allocation3 + $0x10] sm:$0xf]
        %v745 = vld [vmem:[#allocation3 + $0x14] sm:$0xf]
        %v746 = vld [vmem:[#allocation3 + $0x18] sm:$0xf]
        %v747 = vld [vmem:[#allocation3 + $0x1c] sm:$0xf]
        %v748 = vld [vmem:[#allocation3 + $0x20] sm:$0xf]
        %v749 = vld [vmem:[#allocation3 + $0x24] sm:$0xf]
        %v750 = vld [vmem:[#allocation3 + $0x28] sm:$0xf]
        %v751 = vld [vmem:[#allocation3 + $0x2c] sm:$0xf]
        %v752 = vld [vmem:[#allocation3 + $0x30] sm:$0xf]
        %v753 = vld [vmem:[#allocation3 + $0x34] sm:$0xf]
        %v754 = vld [vmem:[#allocation3 + $0x38] sm:$0xf]
        %v755 = vld [vmem:[#allocation3 + $0x3c] sm:$0xf]
        %v756 = vld [vmem:[#allocation2 + $0x1] sm:$0xff]
        %v757 = vld [vmem:[#allocation2 + $0x9] sm:$0xff]
        %v758 = vld [vmem:[#allocation2 + $0x19] sm:$0xff]
        %v759 = vld [vmem:[#allocation2 + $0x21] sm:$0xff]
        %v760 = vld [vmem:[#allocation2 + $0x31] sm:$0xff]
        %v761 = vld [vmem:[#allocation2 + $0x39] sm:$0xff]
        %v762 = vld [vmem:[#allocation2 + $0x49] sm:$0xff]
        %v763 = vld [vmem:[#allocation2 + $0x51] sm:$0xff]
        %v764 = vld [vmem:[#allocation2 + $0x61] sm:$0xff]
        %v765 = vld [vmem:[#allocation2 + $0x69] sm:$0xff]
        %v766 = vld [vmem:[#allocation2 + $0x79] sm:$0xff]
        %v767 = vld [vmem:[#allocation2 + $0x81] sm:$0xff]
        %v768 = vld [vmem:[#allocation2 + $0x91] sm:$0xff]
        %v769 = vld [vmem:[#allocation2 + $0x99] sm:$0xff]
        %v770 = vld [vmem:[#allocation2 + $0xa9] sm:$0xff]
        %v771 = vld [vmem:[#allocation2 + $0xb1] sm:$0xff]
        %v772 = vld [vmem:[#allocation2 + $0xc1] sm:$0xff]
        %v773 = vld [vmem:[#allocation2 + $0xc9] sm:$0xff]
        %v774 = vld [vmem:[#allocation2 + $0xd9] sm:$0xff]
        %v775 = vld [vmem:[#allocation2 + $0xe1] sm:$0xff]
        %v776 = vld [vmem:[#allocation2 + $0xf1] sm:$0xff]
        %v777 = vld [vmem:[#allocation2 + $0xf9] sm:$0xff]
        %v778 = vld [vmem:[#allocation2 + $0x109] sm:$0xff]
        %v779 = vld [vmem:[#allocation2 + $0x111] sm:$0xff]
        %v780 = vld [vmem:[#allocation2 + $0x121] sm:$0xff]
        %v781 = vld [vmem:[#allocation2 + $0x129] sm:$0xff]
        %v782 = vld [vmem:[#allocation2 + $0x139] sm:$0xff]
        %v783 = vld [vmem:[#allocation2 + $0x141] sm:$0xff]
        %v784 = vld [vmem:[#allocation2 + $0x151] sm:$0xff]
        %v785 = vld [vmem:[#allocation2 + $0x159] sm:$0xff]
        %v786 = vld [vmem:[#allocation2 + $0x169] sm:$0xff]
        %v787 = vld [vmem:[#allocation2 + $0x171] sm:$0xff]
        %v788 = vpack.c.bf16 %v757, %v756
        %v789 = vpack.c.bf16 %v759, %v758
        %v790 = vpack.c.bf16 %v761, %v760
        %v791 = vpack.c.bf16 %v763, %v762
        %v792 = vpack.c.bf16 %v765, %v764
        %v793 = vpack.c.bf16 %v767, %v766
        %v794 = vpack.c.bf16 %v769, %v768
        %v795 = vpack.c.bf16 %v771, %v770
        %v796 = vpack.c.bf16 %v773, %v772
        %v797 = vpack.c.bf16 %v775, %v774
        %v798 = vpack.c.bf16 %v777, %v776
        %v799 = vpack.c.bf16 %v779, %v778
        %v800 = vpack.c.bf16 %v781, %v780
        %v801 = vpack.c.bf16 %v783, %v782
        %v802 = vpack.c.bf16 %v785, %v784
        %v803 = vpack.c.bf16 %v787, %v786
        %s804 = scalar_lea.vmem [#allocation3], 64
        %v805 = vld [vmem:[%s804] sm:$0xf]
        %v806 = vld [vmem:[%s804 + $0x4] sm:$0xf]
        %v807 = vld [vmem:[%s804 + $0x8] sm:$0xf]
        %v808 = vld [vmem:[%s804 + $0xc] sm:$0xf]
        %v809 = vld [vmem:[%s804 + $0x10] sm:$0xf]
        %v810 = vld [vmem:[%s804 + $0x14] sm:$0xf]
        %v811 = vld [vmem:[%s804 + $0x18] sm:$0xf]
        %v812 = vld [vmem:[%s804 + $0x1c] sm:$0xf]
        %v813 = vld [vmem:[%s804 + $0x20] sm:$0xf]
        %v814 = vld [vmem:[%s804 + $0x24] sm:$0xf]
        %v815 = vld [vmem:[%s804 + $0x28] sm:$0xf]
        %v816 = vld [vmem:[%s804 + $0x2c] sm:$0xf]
        %v817 = vld [vmem:[%s804 + $0x30] sm:$0xf]
        %v818 = vld [vmem:[%s804 + $0x34] sm:$0xf]
        %v819 = vld [vmem:[%s804 + $0x38] sm:$0xf]
        %v820 = vld [vmem:[%s804 + $0x3c] sm:$0xf]
        %v837 = vunpack.c.l.b16 %v805
        %v838 = vunpack.c.l.b16 %v806
        %v839 = vunpack.c.l.b16 %v807
        %v840 = vunpack.c.l.b16 %v808
        %v841 = vunpack.c.l.b16 %v809
        %v842 = vunpack.c.l.b16 %v810
        %v843 = vunpack.c.l.b16 %v811
        %v844 = vunpack.c.l.b16 %v812
        %v845 = vunpack.c.l.b16 %v813
        %v846 = vunpack.c.l.b16 %v814
        %v847 = vunpack.c.l.b16 %v815
        %v848 = vunpack.c.l.b16 %v816
        %v849 = vunpack.c.l.b16 %v817
        %v850 = vunpack.c.l.b16 %v818
        %v851 = vunpack.c.l.b16 %v819
        %v852 = vunpack.c.l.b16 %v820
        %v853 = vpack.c.b16 %v838, %v837
        %v854 = vpack.c.b16 %v840, %v839
        %v855 = vpack.c.b16 %v842, %v841
        %v856 = vpack.c.b16 %v844, %v843
        %v857 = vpack.c.b16 %v846, %v845
        %v858 = vpack.c.b16 %v848, %v847
        %v859 = vpack.c.b16 %v850, %v849
        %v860 = vpack.c.b16 %v852, %v851
        %869 = vmatprep.subr.bf16.mxu0 0
        %870 = vmatpush1.bf16.msra.mxu0 %v853
        %871 = vmatprep.subr.bf16.mxu0 0
        %872 = vmatpush1.bf16.msra.mxu0 %v854
        %873 = vmatprep.subr.bf16.mxu0 0
        %874 = vmatpush1.bf16.msra.mxu0 %v855
        %875 = vmatprep.subr.bf16.mxu0 0
        %876 = vmatpush1.bf16.msra.mxu0 %v856
        %877 = vmatprep.subr.bf16.mxu0 0
        %878 = vmatpush1.bf16.msra.mxu0 %v857
        %879 = vmatprep.subr.bf16.mxu0 0
        %880 = vmatpush1.bf16.msra.mxu0 %v858
        %881 = vmatprep.subr.bf16.mxu0 0
        %882 = vmatpush1.bf16.msra.mxu0 %v859
        %883 = vmatprep.subr.bf16.mxu0 0
        %884 = vmatpush1.bf16.msra.mxu0 %v860
        %885 = vmatprep.subr.bf16.mxu0 0
        %886 = vmatpush1.bf16.msra.mxu0 0
        %887 = vmatprep.subr.bf16.mxu0 0
        %888 = vmatpush1.bf16.msra.mxu0 0
        %889 = vmatprep.subr.bf16.mxu0 0
        %890 = vmatpush1.bf16.msra.mxu0 0
        %891 = vmatprep.subr.bf16.mxu0 0
        %892 = vmatpush1.bf16.msra.mxu0 0
        %893 = vmatprep.subr.bf16.mxu0 0
        %894 = vmatpush1.bf16.msra.mxu0 0
        %895 = vmatprep.subr.bf16.mxu0 0
        %896 = vmatpush1.bf16.msra.mxu0 0
        %897 = vmatprep.subr.bf16.mxu0 0
        %898 = vmatpush1.bf16.msra.mxu0 0
        %899 = vmatprep.subr.bf16.mxu0 0
        %900 = vmatpush1.bf16.msra.mxu0 0
        %901 = vmatprep.mubr.bf16.mxu0 0
        %902 = vmatmul.mubr.bf16.gmra.mrb[0].mxu0 %v788
        %v903 = vpop.f32.mrb[0].mxu0
        %v904 = vadd.f32 0.0, %v903
        %v905 = vpop.f32.mrb[0].mxu0
        %v906 = vpop.f32.mrb[0].mxu0
        %v907 = vadd.f32 0.0, %v906
        %v908 = vpop.f32.mrb[0].mxu0
        %909 = vmatprep.mubr.bf16.mxu0 0
        %910 = vmatmul.mubr.bf16.gmra.mrb[0].mxu0 %v789
        %v911 = vpop.f32.mrb[0].mxu0
        %v912 = vadd.f32 0.0, %v911
        %v913 = vpop.f32.mrb[0].mxu0
        %v914 = vpop.f32.mrb[0].mxu0
        %v915 = vadd.f32 0.0, %v914
        %v916 = vpop.f32.mrb[0].mxu0
        %917 = vmatprep.mubr.bf16.mxu0 0
        %918 = vmatmul.mubr.bf16.gmra.mrb[0].mxu0 %v790
        %v919 = vpop.f32.mrb[0].mxu0
        %v920 = vadd.f32 0.0, %v919
        %v921 = vpop.f32.mrb[0].mxu0
        %v922 = vpop.f32.mrb[0].mxu0
        %v923 = vadd.f32 0.0, %v922
        %v924 = vpop.f32.mrb[0].mxu0
        %925 = vmatprep.mubr.bf16.mxu0 0
        %926 = vmatmul.mubr.bf16.gmra.mrb[0].mxu0 %v791
        %v927 = vpop.f32.mrb[0].mxu0
        %v928 = vadd.f32 0.0, %v927
        %v929 = vpop.f32.mrb[0].mxu0
        %v930 = vpop.f32.mrb[0].mxu0
        %v931 = vadd.f32 0.0, %v930
        %v932 = vpop.f32.mrb[0].mxu0
        %933 = vmatprep.mubr.bf16.mxu0 0
        %934 = vmatmul.mubr.bf16.gmra.mrb[0].mxu0 %v792
        %v935 = vpop.f32.mrb[0].mxu0
        %v936 = vadd.f32 0.0, %v935
        %v937 = vpop.f32.mrb[0].mxu0
        %v938 = vpop.f32.mrb[0].mxu0
        %v939 = vadd.f32 0.0, %v938
        %v940 = vpop.f32.mrb[0].mxu0
        %941 = vmatprep.mubr.bf16.mxu0 0
        %942 = vmatmul.mubr.bf16.gmra.mrb[0].mxu0 %v793
        %v943 = vpop.f32.mrb[0].mxu0
        %v944 = vadd.f32 0.0, %v943
        %v945 = vpop.f32.mrb[0].mxu0
        %v946 = vpop.f32.mrb[0].mxu0
        %v947 = vadd.f32 0.0, %v946
        %v948 = vpop.f32.mrb[0].mxu0
        %949 = vmatprep.mubr.bf16.mxu0 0
        %950 = vmatmul.mubr.bf16.gmra.mrb[0].mxu0 %v794
        %v951 = vpop.f32.mrb[0].mxu0
        %v952 = vadd.f32 0.0, %v951
        %v953 = vpop.f32.mrb[0].mxu0
        %v954 = vpop.f32.mrb[0].mxu0
        %v955 = vadd.f32 0.0, %v954
        %v956 = vpop.f32.mrb[0].mxu0
        %957 = vmatprep.mubr.bf16.mxu0 0
        %958 = vmatmul.mubr.bf16.gmra.mrb[0].mxu0 %v795
        %v959 = vpop.f32.mrb[0].mxu0
        %v960 = vadd.f32 0.0, %v959
        %v961 = vpop.f32.mrb[0].mxu0
        %v962 = vpop.f32.mrb[0].mxu0
        %v963 = vadd.f32 0.0, %v962
        %v964 = vpop.f32.mrb[0].mxu0
        %965 = vmatprep.mubr.bf16.mxu0 0
        %966 = vmatmul.mubr.bf16.gmra.mrb[0].mxu0 %v796
        %v967 = vpop.f32.mrb[0].mxu0
        %v968 = vadd.f32 0.0, %v967
        %v969 = vpop.f32.mrb[0].mxu0
        %v970 = vpop.f32.mrb[0].mxu0
        %v971 = vadd.f32 0.0, %v970
        %v972 = vpop.f32.mrb[0].mxu0
        %973 = vmatprep.mubr.bf16.mxu0 0
        %974 = vmatmul.mubr.bf16.gmra.mrb[0].mxu0 %v797
        %v975 = vpop.f32.mrb[0].mxu0
        %v976 = vadd.f32 0.0, %v975
        %v977 = vpop.f32.mrb[0].mxu0
        %v978 = vpop.f32.mrb[0].mxu0
        %v979 = vadd.f32 0.0, %v978
        %v980 = vpop.f32.mrb[0].mxu0
        %981 = vmatprep.mubr.bf16.mxu0 0
        %982 = vmatmul.mubr.bf16.gmra.mrb[0].mxu0 %v798
        %v983 = vpop.f32.mrb[0].mxu0
        %v984 = vadd.f32 0.0, %v983
        %v985 = vpop.f32.mrb[0].mxu0
        %v986 = vpop.f32.mrb[0].mxu0
        %v987 = vadd.f32 0.0, %v986
        %v988 = vpop.f32.mrb[0].mxu0
        %989 = vmatprep.mubr.bf16.mxu0 0
        %990 = vmatmul.mubr.bf16.gmra.mrb[0].mxu0 %v799
        %v991 = vpop.f32.mrb[0].mxu0
        %v992 = vadd.f32 0.0, %v991
        %v993 = vpop.f32.mrb[0].mxu0
        %v994 = vpop.f32.mrb[0].mxu0
        %v995 = vadd.f32 0.0, %v994
        %v996 = vpop.f32.mrb[0].mxu0
        %997 = vmatprep.mubr.bf16.mxu0 0
        %998 = vmatmul.mubr.bf16.gmra.mrb[0].mxu0 %v800
        %v999 = vpop.f32.mrb[0].mxu0
        %v1000 = vadd.f32 0.0, %v999
        %v1001 = vpop.f32.mrb[0].mxu0
        %v1002 = vpop.f32.mrb[0].mxu0
        %v1003 = vadd.f32 0.0, %v1002
        %v1004 = vpop.f32.mrb[0].mxu0
        %1005 = vmatprep.mubr.bf16.mxu0 0
        %1006 = vmatmul.mubr.bf16.gmra.mrb[0].mxu0 %v801
        %v1007 = vpop.f32.mrb[0].mxu0
        %v1008 = vadd.f32 0.0, %v1007
        %v1009 = vpop.f32.mrb[0].mxu0
        %v1010 = vpop.f32.mrb[0].mxu0
        %v1011 = vadd.f32 0.0, %v1010
        %v1012 = vpop.f32.mrb[0].mxu0
        %1013 = vmatprep.mubr.bf16.mxu0 0
        %1014 = vmatmul.mubr.bf16.gmra.mrb[0].mxu0 %v802
        %v1015 = vpop.f32.mrb[0].mxu0
        %v1016 = vadd.f32 0.0, %v1015
        %v1017 = vpop.f32.mrb[0].mxu0
        %v1018 = vpop.f32.mrb[0].mxu0
        %v1019 = vadd.f32 0.0, %v1018
        %v1020 = vpop.f32.mrb[0].mxu0
        %1021 = vmatprep.mubr.bf16.mxu0 0
        %1022 = vmatmul.mubr.bf16.gmra.mrb[0].mxu0 %v803
        %v1023 = vpop.f32.mrb[0].mxu0
        %v1024 = vadd.f32 0.0, %v1023
        %v1025 = vpop.f32.mrb[0].mxu0
        %v1026 = vpop.f32.mrb[0].mxu0
        %v1027 = vadd.f32 0.0, %v1026
        %v1028 = vpop.f32.mrb[0].mxu0
        %1029 = vdwg.mxu0
        %v1046 = vunpack.c.l.b16 %v740
        %v1047 = vunpack.c.l.b16 %v741
        %v1048 = vunpack.c.l.b16 %v742
        %v1049 = vunpack.c.l.b16 %v743
        %v1050 = vunpack.c.l.b16 %v744
        %v1051 = vunpack.c.l.b16 %v745
        %v1052 = vunpack.c.l.b16 %v746
        %v1053 = vunpack.c.l.b16 %v747
        %v1054 = vunpack.c.l.b16 %v748
        %v1055 = vunpack.c.l.b16 %v749
        %v1056 = vunpack.c.l.b16 %v750
        %v1057 = vunpack.c.l.b16 %v751
        %v1058 = vunpack.c.l.b16 %v752
        %v1059 = vunpack.c.l.b16 %v753
        %v1060 = vunpack.c.l.b16 %v754
        %v1061 = vunpack.c.l.b16 %v755
        %v1062 = vpack.c.b16 %v1047, %v1046
        %v1063 = vpack.c.b16 %v1049, %v1048
        %v1064 = vpack.c.b16 %v1051, %v1050
        %v1065 = vpack.c.b16 %v1053, %v1052
        %v1066 = vpack.c.b16 %v1055, %v1054
        %v1067 = vpack.c.b16 %v1057, %v1056
        %v1068 = vpack.c.b16 %v1059, %v1058
        %v1069 = vpack.c.b16 %v1061, %v1060
        %1078 = vmatprep.subr.bf16.mxu0 0
        %1079 = vmatpush1.bf16.msra.mxu0 %v1062
        %1080 = vmatprep.subr.bf16.mxu0 0
        %1081 = vmatpush1.bf16.msra.mxu0 %v1063
        %1082 = vmatprep.subr.bf16.mxu0 0
        %1083 = vmatpush1.bf16.msra.mxu0 %v1064
        %1084 = vmatprep.subr.bf16.mxu0 0
        %1085 = vmatpush1.bf16.msra.mxu0 %v1065
        %1086 = vmatprep.subr.bf16.mxu0 0
        %1087 = vmatpush1.bf16.msra.mxu0 %v1066
        %1088 = vmatprep.subr.bf16.mxu0 0
        %1089 = vmatpush1.bf16.msra.mxu0 %v1067
        %1090 = vmatprep.subr.bf16.mxu0 0
        %1091 = vmatpush1.bf16.msra.mxu0 %v1068
        %1092 = vmatprep.subr.bf16.mxu0 0
        %1093 = vmatpush1.bf16.msra.mxu0 %v1069
        %1094 = vmatprep.subr.bf16.mxu0 0
        %1095 = vmatpush1.bf16.msra.mxu0 0
        %1096 = vmatprep.subr.bf16.mxu0 0
        %1097 = vmatpush1.bf16.msra.mxu0 0
        %1098 = vmatprep.subr.bf16.mxu0 0
        %1099 = vmatpush1.bf16.msra.mxu0 0
        %1100 = vmatprep.subr.bf16.mxu0 0
        %1101 = vmatpush1.bf16.msra.mxu0 0
        %1102 = vmatprep.subr.bf16.mxu0 0
        %1103 = vmatpush1.bf16.msra.mxu0 0
        %1104 = vmatprep.subr.bf16.mxu0 0
        %1105 = vmatpush1.bf16.msra.mxu0 0
        %1106 = vmatprep.subr.bf16.mxu0 0
        %1107 = vmatpush1.bf16.msra.mxu0 0
        %1108 = vmatprep.subr.bf16.mxu0 0
        %1109 = vmatpush1.bf16.msra.mxu0 0
        %1110 = vmatprep.mubr.bf16.mxu0 0
        %1111 = vmatmul.mubr.bf16.gmra.mrb[0].mxu0 %v724
        %v1112 = vpop.f32.mrb[0].mxu0
        %v1113 = vadd.f32 %v904, %v1112
        %v1114 = vpop.f32.mrb[0].mxu0
        %v1115 = vpop.f32.mrb[0].mxu0
        %v1116 = vadd.f32 %v907, %v1115
        %v1117 = vpop.f32.mrb[0].mxu0
        %1118 = vmatprep.mubr.bf16.mxu0 0
        %1119 = vmatmul.mubr.bf16.gmra.mrb[0].mxu0 %v725
        %v1120 = vpop.f32.mrb[0].mxu0
        %v1121 = vadd.f32 %v912, %v1120
        %v1122 = vpop.f32.mrb[0].mxu0
        %v1123 = vpop.f32.mrb[0].mxu0
        %v1124 = vadd.f32 %v915, %v1123
        %v1125 = vpop.f32.mrb[0].mxu0
        %1126 = vmatprep.mubr.bf16.mxu0 0
        %1127 = vmatmul.mubr.bf16.gmra.mrb[0].mxu0 %v726
        %v1128 = vpop.f32.mrb[0].mxu0
        %v1129 = vadd.f32 %v920, %v1128
        %v1130 = vpop.f32.mrb[0].mxu0
        %v1131 = vpop.f32.mrb[0].mxu0
        %v1132 = vadd.f32 %v923, %v1131
        %v1133 = vpop.f32.mrb[0].mxu0
        %1134 = vmatprep.mubr.bf16.mxu0 0
        %1135 = vmatmul.mubr.bf16.gmra.mrb[0].mxu0 %v727
        %v1136 = vpop.f32.mrb[0].mxu0
        %v1137 = vadd.f32 %v928, %v1136
        %v1138 = vpop.f32.mrb[0].mxu0
        %v1139 = vpop.f32.mrb[0].mxu0
        %v1140 = vadd.f32 %v931, %v1139
        %v1141 = vpop.f32.mrb[0].mxu0
        %1142 = vmatprep.mubr.bf16.mxu0 0
        %1143 = vmatmul.mubr.bf16.gmra.mrb[0].mxu0 %v728
        %v1144 = vpop.f32.mrb[0].mxu0
        %v1145 = vadd.f32 %v936, %v1144
        %v1146 = vpop.f32.mrb[0].mxu0
        %v1147 = vpop.f32.mrb[0].mxu0
        %v1148 = vadd.f32 %v939, %v1147
        %v1149 = vpop.f32.mrb[0].mxu0
        %1150 = vmatprep.mubr.bf16.mxu0 0
        %1151 = vmatmul.mubr.bf16.gmra.mrb[0].mxu0 %v729
        %v1152 = vpop.f32.mrb[0].mxu0
        %v1153 = vadd.f32 %v944, %v1152
        %v1154 = vpop.f32.mrb[0].mxu0
        %v1155 = vpop.f32.mrb[0].mxu0
        %v1156 = vadd.f32 %v947, %v1155
        %v1157 = vpop.f32.mrb[0].mxu0
        %1158 = vmatprep.mubr.bf16.mxu0 0
        %1159 = vmatmul.mubr.bf16.gmra.mrb[0].mxu0 %v730
        %v1160 = vpop.f32.mrb[0].mxu0
        %v1161 = vadd.f32 %v952, %v1160
        %v1162 = vpop.f32.mrb[0].mxu0
        %v1163 = vpop.f32.mrb[0].mxu0
        %v1164 = vadd.f32 %v955, %v1163
        %v1165 = vpop.f32.mrb[0].mxu0
        %1166 = vmatprep.mubr.bf16.mxu0 0
        %1167 = vmatmul.mubr.bf16.gmra.mrb[0].mxu0 %v731
        %v1168 = vpop.f32.mrb[0].mxu0
        %v1169 = vadd.f32 %v960, %v1168
        %v1170 = vpop.f32.mrb[0].mxu0
        %v1171 = vpop.f32.mrb[0].mxu0
        %v1172 = vadd.f32 %v963, %v1171
        %v1173 = vpop.f32.mrb[0].mxu0
        %1174 = vmatprep.mubr.bf16.mxu0 0
        %1175 = vmatmul.mubr.bf16.gmra.mrb[0].mxu0 %v732
        %v1176 = vpop.f32.mrb[0].mxu0
        %v1177 = vadd.f32 %v968, %v1176
        %v1178 = vpop.f32.mrb[0].mxu0
        %v1179 = vpop.f32.mrb[0].mxu0
        %v1180 = vadd.f32 %v971, %v1179
        %v1181 = vpop.f32.mrb[0].mxu0
        %1182 = vmatprep.mubr.bf16.mxu0 0
        %1183 = vmatmul.mubr.bf16.gmra.mrb[0].mxu0 %v733
        %v1184 = vpop.f32.mrb[0].mxu0
        %v1185 = vadd.f32 %v976, %v1184
        %v1186 = vpop.f32.mrb[0].mxu0
        %v1187 = vpop.f32.mrb[0].mxu0
        %v1188 = vadd.f32 %v979, %v1187
        %v1189 = vpop.f32.mrb[0].mxu0
        %1190 = vmatprep.mubr.bf16.mxu0 0
        %1191 = vmatmul.mubr.bf16.gmra.mrb[0].mxu0 %v734
        %v1192 = vpop.f32.mrb[0].mxu0
        %v1193 = vadd.f32 %v984, %v1192
        %v1194 = vpop.f32.mrb[0].mxu0
        %v1195 = vpop.f32.mrb[0].mxu0
        %v1196 = vadd.f32 %v987, %v1195
        %v1197 = vpop.f32.mrb[0].mxu0
        %1198 = vmatprep.mubr.bf16.mxu0 0
        %1199 = vmatmul.mubr.bf16.gmra.mrb[0].mxu0 %v735
        %v1200 = vpop.f32.mrb[0].mxu0
        %v1201 = vadd.f32 %v992, %v1200
        %v1202 = vpop.f32.mrb[0].mxu0
        %v1203 = vpop.f32.mrb[0].mxu0
        %v1204 = vadd.f32 %v995, %v1203
        %v1205 = vpop.f32.mrb[0].mxu0
        %1206 = vmatprep.mubr.bf16.mxu0 0
        %1207 = vmatmul.mubr.bf16.gmra.mrb[0].mxu0 %v736
        %v1208 = vpop.f32.mrb[0].mxu0
        %v1209 = vadd.f32 %v1000, %v1208
        %v1210 = vpop.f32.mrb[0].mxu0
        %v1211 = vpop.f32.mrb[0].mxu0
        %v1212 = vadd.f32 %v1003, %v1211
        %v1213 = vpop.f32.mrb[0].mxu0
        %1214 = vmatprep.mubr.bf16.mxu0 0
        %1215 = vmatmul.mubr.bf16.gmra.mrb[0].mxu0 %v737
        %v1216 = vpop.f32.mrb[0].mxu0
        %v1217 = vadd.f32 %v1008, %v1216
        %v1218 = vpop.f32.mrb[0].mxu0
        %v1219 = vpop.f32.mrb[0].mxu0
        %v1220 = vadd.f32 %v1011, %v1219
        %v1221 = vpop.f32.mrb[0].mxu0
        %1222 = vmatprep.mubr.bf16.mxu0 0
        %1223 = vmatmul.mubr.bf16.gmra.mrb[0].mxu0 %v738
        %v1224 = vpop.f32.mrb[0].mxu0
        %v1225 = vadd.f32 %v1016, %v1224
        %v1226 = vpop.f32.mrb[0].mxu0
        %v1227 = vpop.f32.mrb[0].mxu0
        %v1228 = vadd.f32 %v1019, %v1227
        %v1229 = vpop.f32.mrb[0].mxu0
        %1230 = vmatprep.mubr.bf16.mxu0 0
        %1231 = vmatmul.mubr.bf16.gmra.mrb[0].mxu0 %v739
        %v1232 = vpop.f32.mrb[0].mxu0
        %v1233 = vadd.f32 %v1024, %v1232
        %v1234 = vpop.f32.mrb[0].mxu0
        %v1235 = vpop.f32.mrb[0].mxu0
        %v1236 = vadd.f32 %v1027, %v1235
        %v1237 = vpop.f32.mrb[0].mxu0
        %1238 = vdwg.mxu0
        %v1239 = vld [vmem:[#allocation2 + $0x2] sm:$0xff]
        %v1240 = vld [vmem:[#allocation2 + $0xa] sm:$0xff]
        %v1241 = vld [vmem:[#allocation2 + $0x1a] sm:$0xff]
        %v1242 = vld [vmem:[#allocation2 + $0x22] sm:$0xff]
        %v1243 = vld [vmem:[#allocation2 + $0x32] sm:$0xff]
        %v1244 = vld [vmem:[#allocation2 + $0x3a] sm:$0xff]
        %v1245 = vld [vmem:[#allocation2 + $0x4a] sm:$0xff]
        %v1246 = vld [vmem:[#allocation2 + $0x52] sm:$0xff]
        %v1247 = vld [vmem:[#allocation2 + $0x62] sm:$0xff]
        %v1248 = vld [vmem:[#allocation2 + $0x6a] sm:$0xff]
        %v1249 = vld [vmem:[#allocation2 + $0x7a] sm:$0xff]
        %v1250 = vld [vmem:[#allocation2 + $0x82] sm:$0xff]
        %v1251 = vld [vmem:[#allocation2 + $0x92] sm:$0xff]
        %v1252 = vld [vmem:[#allocation2 + $0x9a] sm:$0xff]
        %v1253 = vld [vmem:[#allocation2 + $0xaa] sm:$0xff]
        %v1254 = vld [vmem:[#allocation2 + $0xb2] sm:$0xff]
        %v1255 = vld [vmem:[#allocation2 + $0xc2] sm:$0xff]
        %v1256 = vld [vmem:[#allocation2 + $0xca] sm:$0xff]
        %v1257 = vld [vmem:[#allocation2 + $0xda] sm:$0xff]
        %v1258 = vld [vmem:[#allocation2 + $0xe2] sm:$0xff]
        %v1259 = vld [vmem:[#allocation2 + $0xf2] sm:$0xff]
        %v1260 = vld [vmem:[#allocation2 + $0xfa] sm:$0xff]
        %v1261 = vld [vmem:[#allocation2 + $0x10a] sm:$0xff]
        %v1262 = vld [vmem:[#allocation2 + $0x112] sm:$0xff]
        %v1263 = vld [vmem:[#allocation2 + $0x122] sm:$0xff]
        %v1264 = vld [vmem:[#allocation2 + $0x12a] sm:$0xff]
        %v1265 = vld [vmem:[#allocation2 + $0x13a] sm:$0xff]
        %v1266 = vld [vmem:[#allocation2 + $0x142] sm:$0xff]
        %v1267 = vld [vmem:[#allocation2 + $0x152] sm:$0xff]
        %v1268 = vld [vmem:[#allocation2 + $0x15a] sm:$0xff]
        %v1269 = vld [vmem:[#allocation2 + $0x16a] sm:$0xff]
        %v1270 = vld [vmem:[#allocation2 + $0x172] sm:$0xff]
        %v1271 = vpack.c.bf16 %v1240, %v1239
        %v1272 = vpack.c.bf16 %v1242, %v1241
        %v1273 = vpack.c.bf16 %v1244, %v1243
        %v1274 = vpack.c.bf16 %v1246, %v1245
        %v1275 = vpack.c.bf16 %v1248, %v1247
        %v1276 = vpack.c.bf16 %v1250, %v1249
        %v1277 = vpack.c.bf16 %v1252, %v1251
        %v1278 = vpack.c.bf16 %v1254, %v1253
        %v1279 = vpack.c.bf16 %v1256, %v1255
        %v1280 = vpack.c.bf16 %v1258, %v1257
        %v1281 = vpack.c.bf16 %v1260, %v1259
        %v1282 = vpack.c.bf16 %v1262, %v1261
        %v1283 = vpack.c.bf16 %v1264, %v1263
        %v1284 = vpack.c.bf16 %v1266, %v1265
        %v1285 = vpack.c.bf16 %v1268, %v1267
        %v1286 = vpack.c.bf16 %v1270, %v1269
        %s1287 = scalar_lea.vmem [#allocation3], 128
        %v1288 = vld [vmem:[%s1287] sm:$0xf]
        %v1289 = vld [vmem:[%s1287 + $0x4] sm:$0xf]
        %v1290 = vld [vmem:[%s1287 + $0x8] sm:$0xf]
        %v1291 = vld [vmem:[%s1287 + $0xc] sm:$0xf]
        %v1292 = vld [vmem:[%s1287 + $0x10] sm:$0xf]
        %v1293 = vld [vmem:[%s1287 + $0x14] sm:$0xf]
        %v1294 = vld [vmem:[%s1287 + $0x18] sm:$0xf]
        %v1295 = vld [vmem:[%s1287 + $0x1c] sm:$0xf]
        %v1296 = vld [vmem:[%s1287 + $0x20] sm:$0xf]
        %v1297 = vld [vmem:[%s1287 + $0x24] sm:$0xf]
        %v1298 = vld [vmem:[%s1287 + $0x28] sm:$0xf]
        %v1299 = vld [vmem:[%s1287 + $0x2c] sm:$0xf]
        %v1300 = vld [vmem:[%s1287 + $0x30] sm:$0xf]
        %v1301 = vld [vmem:[%s1287 + $0x34] sm:$0xf]
        %v1302 = vld [vmem:[%s1287 + $0x38] sm:$0xf]
        %v1303 = vld [vmem:[%s1287 + $0x3c] sm:$0xf]
        %v1320 = vunpack.c.l.b16 %v1288
        %v1321 = vunpack.c.l.b16 %v1289
        %v1322 = vunpack.c.l.b16 %v1290
        %v1323 = vunpack.c.l.b16 %v1291
        %v1324 = vunpack.c.l.b16 %v1292
        %v1325 = vunpack.c.l.b16 %v1293
        %v1326 = vunpack.c.l.b16 %v1294
        %v1327 = vunpack.c.l.b16 %v1295
        %v1328 = vunpack.c.l.b16 %v1296
        %v1329 = vunpack.c.l.b16 %v1297
        %v1330 = vunpack.c.l.b16 %v1298
        %v1331 = vunpack.c.l.b16 %v1299
        %v1332 = vunpack.c.l.b16 %v1300
        %v1333 = vunpack.c.l.b16 %v1301
        %v1334 = vunpack.c.l.b16 %v1302
        %v1335 = vunpack.c.l.b16 %v1303
        %v1336 = vpack.c.b16 %v1321, %v1320
        %v1337 = vpack.c.b16 %v1323, %v1322
        %v1338 = vpack.c.b16 %v1325, %v1324
        %v1339 = vpack.c.b16 %v1327, %v1326
        %v1340 = vpack.c.b16 %v1329, %v1328
        %v1341 = vpack.c.b16 %v1331, %v1330
        %v1342 = vpack.c.b16 %v1333, %v1332
        %v1343 = vpack.c.b16 %v1335, %v1334
        %1352 = vmatprep.subr.bf16.mxu0 0
        %1353 = vmatpush1.bf16.msra.mxu0 %v1336
        %1354 = vmatprep.subr.bf16.mxu0 0
        %1355 = vmatpush1.bf16.msra.mxu0 %v1337
        %1356 = vmatprep.subr.bf16.mxu0 0
        %1357 = vmatpush1.bf16.msra.mxu0 %v1338
        %1358 = vmatprep.subr.bf16.mxu0 0
        %1359 = vmatpush1.bf16.msra.mxu0 %v1339
        %1360 = vmatprep.subr.bf16.mxu0 0
        %1361 = vmatpush1.bf16.msra.mxu0 %v1340
        %1362 = vmatprep.subr.bf16.mxu0 0
        %1363 = vmatpush1.bf16.msra.mxu0 %v1341
        %1364 = vmatprep.subr.bf16.mxu0 0
        %1365 = vmatpush1.bf16.msra.mxu0 %v1342
        %1366 = vmatprep.subr.bf16.mxu0 0
        %1367 = vmatpush1.bf16.msra.mxu0 %v1343
        %1368 = vmatprep.subr.bf16.mxu0 0
        %1369 = vmatpush1.bf16.msra.mxu0 0
        %1370 = vmatprep.subr.bf16.mxu0 0
        %1371 = vmatpush1.bf16.msra.mxu0 0
        %1372 = vmatprep.subr.bf16.mxu0 0
        %1373 = vmatpush1.bf16.msra.mxu0 0
        %1374 = vmatprep.subr.bf16.mxu0 0
        %1375 = vmatpush1.bf16.msra.mxu0 0
        %1376 = vmatprep.subr.bf16.mxu0 0
        %1377 = vmatpush1.bf16.msra.mxu0 0
        %1378 = vmatprep.subr.bf16.mxu0 0
        %1379 = vmatpush1.bf16.msra.mxu0 0
        %1380 = vmatprep.subr.bf16.mxu0 0
        %1381 = vmatpush1.bf16.msra.mxu0 0
        %1382 = vmatprep.subr.bf16.mxu0 0
        %1383 = vmatpush1.bf16.msra.mxu0 0
        %1384 = vmatprep.mubr.bf16.mxu0 0
        %1385 = vmatmul.mubr.bf16.gmra.mrb[0].mxu0 %v1271
        %v1386 = vpop.f32.mrb[0].mxu0
        %v1387 = vadd.f32 0.0, %v1386
        %v1388 = vpop.f32.mrb[0].mxu0
        %v1389 = vpop.f32.mrb[0].mxu0
        %v1390 = vadd.f32 0.0, %v1389
        %v1391 = vpop.f32.mrb[0].mxu0
        %1392 = vmatprep.mubr.bf16.mxu0 0
        %1393 = vmatmul.mubr.bf16.gmra.mrb[0].mxu0 %v1272
        %v1394 = vpop.f32.mrb[0].mxu0
        %v1395 = vadd.f32 0.0, %v1394
        %v1396 = vpop.f32.mrb[0].mxu0
        %v1397 = vpop.f32.mrb[0].mxu0
        %v1398 = vadd.f32 0.0, %v1397
        %v1399 = vpop.f32.mrb[0].mxu0
        %1400 = vmatprep.mubr.bf16.mxu0 0
        %1401 = vmatmul.mubr.bf16.gmra.mrb[0].mxu0 %v1273
        %v1402 = vpop.f32.mrb[0].mxu0
        %v1403 = vadd.f32 0.0, %v1402
        %v1404 = vpop.f32.mrb[0].mxu0
        %v1405 = vpop.f32.mrb[0].mxu0
        %v1406 = vadd.f32 0.0, %v1405
        %v1407 = vpop.f32.mrb[0].mxu0
        %1408 = vmatprep.mubr.bf16.mxu0 0
        %1409 = vmatmul.mubr.bf16.gmra.mrb[0].mxu0 %v1274
        %v1410 = vpop.f32.mrb[0].mxu0
        %v1411 = vadd.f32 0.0, %v1410
        %v1412 = vpop.f32.mrb[0].mxu0
        %v1413 = vpop.f32.mrb[0].mxu0
        %v1414 = vadd.f32 0.0, %v1413
        %v1415 = vpop.f32.mrb[0].mxu0
        %1416 = vmatprep.mubr.bf16.mxu0 0
        %1417 = vmatmul.mubr.bf16.gmra.mrb[0].mxu0 %v1275
        %v1418 = vpop.f32.mrb[0].mxu0
        %v1419 = vadd.f32 0.0, %v1418
        %v1420 = vpop.f32.mrb[0].mxu0
        %v1421 = vpop.f32.mrb[0].mxu0
        %v1422 = vadd.f32 0.0, %v1421
        %v1423 = vpop.f32.mrb[0].mxu0
        %1424 = vmatprep.mubr.bf16.mxu0 0
        %1425 = vmatmul.mubr.bf16.gmra.mrb[0].mxu0 %v1276
        %v1426 = vpop.f32.mrb[0].mxu0
        %v1427 = vadd.f32 0.0, %v1426
        %v1428 = vpop.f32.mrb[0].mxu0
        %v1429 = vpop.f32.mrb[0].mxu0
        %v1430 = vadd.f32 0.0, %v1429
        %v1431 = vpop.f32.mrb[0].mxu0
        %1432 = vmatprep.mubr.bf16.mxu0 0
        %1433 = vmatmul.mubr.bf16.gmra.mrb[0].mxu0 %v1277
        %v1434 = vpop.f32.mrb[0].mxu0
        %v1435 = vadd.f32 0.0, %v1434
        %v1436 = vpop.f32.mrb[0].mxu0
        %v1437 = vpop.f32.mrb[0].mxu0
        %v1438 = vadd.f32 0.0, %v1437
        %v1439 = vpop.f32.mrb[0].mxu0
        %1440 = vmatprep.mubr.bf16.mxu0 0
        %1441 = vmatmul.mubr.bf16.gmra.mrb[0].mxu0 %v1278
        %v1442 = vpop.f32.mrb[0].mxu0
        %v1443 = vadd.f32 0.0, %v1442
        %v1444 = vpop.f32.mrb[0].mxu0
        %v1445 = vpop.f32.mrb[0].mxu0
        %v1446 = vadd.f32 0.0, %v1445
        %v1447 = vpop.f32.mrb[0].mxu0
        %1448 = vmatprep.mubr.bf16.mxu0 0
        %1449 = vmatmul.mubr.bf16.gmra.mrb[0].mxu0 %v1279
        %v1450 = vpop.f32.mrb[0].mxu0
        %v1451 = vadd.f32 0.0, %v1450
        %v1452 = vpop.f32.mrb[0].mxu0
        %v1453 = vpop.f32.mrb[0].mxu0
        %v1454 = vadd.f32 0.0, %v1453
        %v1455 = vpop.f32.mrb[0].mxu0
        %1456 = vmatprep.mubr.bf16.mxu0 0
        %1457 = vmatmul.mubr.bf16.gmra.mrb[0].mxu0 %v1280
        %v1458 = vpop.f32.mrb[0].mxu0
        %v1459 = vadd.f32 0.0, %v1458
        %v1460 = vpop.f32.mrb[0].mxu0
        %v1461 = vpop.f32.mrb[0].mxu0
        %v1462 = vadd.f32 0.0, %v1461
        %v1463 = vpop.f32.mrb[0].mxu0
        %1464 = vmatprep.mubr.bf16.mxu0 0
        %1465 = vmatmul.mubr.bf16.gmra.mrb[0].mxu0 %v1281
        %v1466 = vpop.f32.mrb[0].mxu0
        %v1467 = vadd.f32 0.0, %v1466
        %v1468 = vpop.f32.mrb[0].mxu0
        %v1469 = vpop.f32.mrb[0].mxu0
        %v1470 = vadd.f32 0.0, %v1469
        %v1471 = vpop.f32.mrb[0].mxu0
        %1472 = vmatprep.mubr.bf16.mxu0 0
        %1473 = vmatmul.mubr.bf16.gmra.mrb[0].mxu0 %v1282
        %v1474 = vpop.f32.mrb[0].mxu0
        %v1475 = vadd.f32 0.0, %v1474
        %v1476 = vpop.f32.mrb[0].mxu0
        %v1477 = vpop.f32.mrb[0].mxu0
        %v1478 = vadd.f32 0.0, %v1477
        %v1479 = vpop.f32.mrb[0].mxu0
        %1480 = vmatprep.mubr.bf16.mxu0 0
        %1481 = vmatmul.mubr.bf16.gmra.mrb[0].mxu0 %v1283
        %v1482 = vpop.f32.mrb[0].mxu0
        %v1483 = vadd.f32 0.0, %v1482
        %v1484 = vpop.f32.mrb[0].mxu0
        %v1485 = vpop.f32.mrb[0].mxu0
        %v1486 = vadd.f32 0.0, %v1485
        %v1487 = vpop.f32.mrb[0].mxu0
        %1488 = vmatprep.mubr.bf16.mxu0 0
        %1489 = vmatmul.mubr.bf16.gmra.mrb[0].mxu0 %v1284
        %v1490 = vpop.f32.mrb[0].mxu0
        %v1491 = vadd.f32 0.0, %v1490
        %v1492 = vpop.f32.mrb[0].mxu0
        %v1493 = vpop.f32.mrb[0].mxu0
        %v1494 = vadd.f32 0.0, %v1493
        %v1495 = vpop.f32.mrb[0].mxu0
        %1496 = vmatprep.mubr.bf16.mxu0 0
        %1497 = vmatmul.mubr.bf16.gmra.mrb[0].mxu0 %v1285
        %v1498 = vpop.f32.mrb[0].mxu0
        %v1499 = vadd.f32 0.0, %v1498
        %v1500 = vpop.f32.mrb[0].mxu0
        %v1501 = vpop.f32.mrb[0].mxu0
        %v1502 = vadd.f32 0.0, %v1501
        %v1503 = vpop.f32.mrb[0].mxu0
        %1504 = vmatprep.mubr.bf16.mxu0 0
        %1505 = vmatmul.mubr.bf16.gmra.mrb[0].mxu0 %v1286
        %v1506 = vpop.f32.mrb[0].mxu0
        %v1507 = vadd.f32 0.0, %v1506
        %v1508 = vpop.f32.mrb[0].mxu0
        %v1509 = vpop.f32.mrb[0].mxu0
        %v1510 = vadd.f32 0.0, %v1509
        %v1511 = vpop.f32.mrb[0].mxu0
        %1512 = vdwg.mxu0
        %v1513 = vadd.f32 %v1113, %v1387
        %v1514 = vadd.f32 %v1116, %v1390
        %v1515 = vadd.f32 %v1121, %v1395
        %v1516 = vadd.f32 %v1124, %v1398
        %v1517 = vadd.f32 %v1129, %v1403
        %v1518 = vadd.f32 %v1132, %v1406
        %v1519 = vadd.f32 %v1137, %v1411
        %v1520 = vadd.f32 %v1140, %v1414
        %v1521 = vadd.f32 %v1145, %v1419
        %v1522 = vadd.f32 %v1148, %v1422
        %v1523 = vadd.f32 %v1153, %v1427
        %v1524 = vadd.f32 %v1156, %v1430
        %v1525 = vadd.f32 %v1161, %v1435
        %v1526 = vadd.f32 %v1164, %v1438
        %v1527 = vadd.f32 %v1169, %v1443
        %v1528 = vadd.f32 %v1172, %v1446
        %v1529 = vadd.f32 %v1177, %v1451
        %v1530 = vadd.f32 %v1180, %v1454
        %v1531 = vadd.f32 %v1185, %v1459
        %v1532 = vadd.f32 %v1188, %v1462
        %v1533 = vadd.f32 %v1193, %v1467
        %v1534 = vadd.f32 %v1196, %v1470
        %v1535 = vadd.f32 %v1201, %v1475
        %v1536 = vadd.f32 %v1204, %v1478
        %v1537 = vadd.f32 %v1209, %v1483
        %v1538 = vadd.f32 %v1212, %v1486
        %v1539 = vadd.f32 %v1217, %v1491
        %v1540 = vadd.f32 %v1220, %v1494
        %v1541 = vadd.f32 %v1225, %v1499
        %v1542 = vadd.f32 %v1228, %v1502
        %v1543 = vadd.f32 %v1233, %v1507
        %v1544 = vadd.f32 %v1236, %v1510
        %v1545 = vld [vmem:[%s659] sm:$0xff]
        %v1546 = vld [vmem:[%s659 + $0x8] sm:$0xff]
        %v1547 = vld [vmem:[%s659 + $0x18] sm:$0xff]
        %v1548 = vld [vmem:[%s659 + $0x20] sm:$0xff]
        %v1549 = vld [vmem:[%s659 + $0x30] sm:$0xff]
        %v1550 = vld [vmem:[%s659 + $0x38] sm:$0xff]
        %v1551 = vld [vmem:[%s659 + $0x48] sm:$0xff]
        %v1552 = vld [vmem:[%s659 + $0x50] sm:$0xff]
        %v1553 = vld [vmem:[%s659 + $0x60] sm:$0xff]
        %v1554 = vld [vmem:[%s659 + $0x68] sm:$0xff]
        %v1555 = vld [vmem:[%s659 + $0x78] sm:$0xff]
        %v1556 = vld [vmem:[%s659 + $0x80] sm:$0xff]
        %v1557 = vld [vmem:[%s659 + $0x90] sm:$0xff]
        %v1558 = vld [vmem:[%s659 + $0x98] sm:$0xff]
        %v1559 = vld [vmem:[%s659 + $0xa8] sm:$0xff]
        %v1560 = vld [vmem:[%s659 + $0xb0] sm:$0xff]
        %v1561 = vld [vmem:[%s659 + $0xc0] sm:$0xff]
        %v1562 = vld [vmem:[%s659 + $0xc8] sm:$0xff]
        %v1563 = vld [vmem:[%s659 + $0xd8] sm:$0xff]
        %v1564 = vld [vmem:[%s659 + $0xe0] sm:$0xff]
        %v1565 = vld [vmem:[%s659 + $0xf0] sm:$0xff]
        %v1566 = vld [vmem:[%s659 + $0xf8] sm:$0xff]
        %v1567 = vld [vmem:[%s659 + $0x108] sm:$0xff]
        %v1568 = vld [vmem:[%s659 + $0x110] sm:$0xff]
        %v1569 = vld [vmem:[%s659 + $0x120] sm:$0xff]
        %v1570 = vld [vmem:[%s659 + $0x128] sm:$0xff]
        %v1571 = vld [vmem:[%s659 + $0x138] sm:$0xff]
        %v1572 = vld [vmem:[%s659 + $0x140] sm:$0xff]
        %v1573 = vld [vmem:[%s659 + $0x150] sm:$0xff]
        %v1574 = vld [vmem:[%s659 + $0x158] sm:$0xff]
        %v1575 = vld [vmem:[%s659 + $0x168] sm:$0xff]
        %v1576 = vld [vmem:[%s659 + $0x170] sm:$0xff]
        %v1577 = vpack.c.bf16 %v1546, %v1545
        %v1578 = vpack.c.bf16 %v1548, %v1547
        %v1579 = vpack.c.bf16 %v1550, %v1549
        %v1580 = vpack.c.bf16 %v1552, %v1551
        %v1581 = vpack.c.bf16 %v1554, %v1553
        %v1582 = vpack.c.bf16 %v1556, %v1555
        %v1583 = vpack.c.bf16 %v1558, %v1557
        %v1584 = vpack.c.bf16 %v1560, %v1559
        %v1585 = vpack.c.bf16 %v1562, %v1561
        %v1586 = vpack.c.bf16 %v1564, %v1563
        %v1587 = vpack.c.bf16 %v1566, %v1565
        %v1588 = vpack.c.bf16 %v1568, %v1567
        %v1589 = vpack.c.bf16 %v1570, %v1569
        %v1590 = vpack.c.bf16 %v1572, %v1571
        %v1591 = vpack.c.bf16 %v1574, %v1573
        %v1592 = vpack.c.bf16 %v1576, %v1575
        %s1593 = scalar_lea.vmem [#allocation3], 192
        %v1594 = vld [vmem:[%s1593] sm:$0xf]
        %v1595 = vld [vmem:[%s1593 + $0x4] sm:$0xf]
        %v1596 = vld [vmem:[%s1593 + $0x8] sm:$0xf]
        %v1597 = vld [vmem:[%s1593 + $0xc] sm:$0xf]
        %v1598 = vld [vmem:[%s1593 + $0x10] sm:$0xf]
        %v1599 = vld [vmem:[%s1593 + $0x14] sm:$0xf]
        %v1600 = vld [vmem:[%s1593 + $0x18] sm:$0xf]
        %v1601 = vld [vmem:[%s1593 + $0x1c] sm:$0xf]
        %v1602 = vld [vmem:[%s1593 + $0x20] sm:$0xf]
        %v1603 = vld [vmem:[%s1593 + $0x24] sm:$0xf]
        %v1604 = vld [vmem:[%s1593 + $0x28] sm:$0xf]
        %v1605 = vld [vmem:[%s1593 + $0x2c] sm:$0xf]
        %v1606 = vld [vmem:[%s1593 + $0x30] sm:$0xf]
        %v1607 = vld [vmem:[%s1593 + $0x34] sm:$0xf]
        %v1608 = vld [vmem:[%s1593 + $0x38] sm:$0xf]
        %v1609 = vld [vmem:[%s1593 + $0x3c] sm:$0xf]
        %v1626 = vunpack.c.l.b16 %v1594
        %v1627 = vunpack.c.l.b16 %v1595
        %v1628 = vunpack.c.l.b16 %v1596
        %v1629 = vunpack.c.l.b16 %v1597
        %v1630 = vunpack.c.l.b16 %v1598
        %v1631 = vunpack.c.l.b16 %v1599
        %v1632 = vunpack.c.l.b16 %v1600
        %v1633 = vunpack.c.l.b16 %v1601
        %v1634 = vunpack.c.l.b16 %v1602
        %v1635 = vunpack.c.l.b16 %v1603
        %v1636 = vunpack.c.l.b16 %v1604
        %v1637 = vunpack.c.l.b16 %v1605
        %v1638 = vunpack.c.l.b16 %v1606
        %v1639 = vunpack.c.l.b16 %v1607
        %v1640 = vunpack.c.l.b16 %v1608
        %v1641 = vunpack.c.l.b16 %v1609
        %v1642 = vpack.c.b16 %v1627, %v1626
        %v1643 = vpack.c.b16 %v1629, %v1628
        %v1644 = vpack.c.b16 %v1631, %v1630
        %v1645 = vpack.c.b16 %v1633, %v1632
        %v1646 = vpack.c.b16 %v1635, %v1634
        %v1647 = vpack.c.b16 %v1637, %v1636
        %v1648 = vpack.c.b16 %v1639, %v1638
        %v1649 = vpack.c.b16 %v1641, %v1640
        %1658 = vmatprep.subr.bf16.mxu0 0
        %1659 = vmatpush1.bf16.msra.mxu0 %v1642
        %1660 = vmatprep.subr.bf16.mxu0 0
        %1661 = vmatpush1.bf16.msra.mxu0 %v1643
        %1662 = vmatprep.subr.bf16.mxu0 0
        %1663 = vmatpush1.bf16.msra.mxu0 %v1644
        %1664 = vmatprep.subr.bf16.mxu0 0
        %1665 = vmatpush1.bf16.msra.mxu0 %v1645
        %1666 = vmatprep.subr.bf16.mxu0 0
        %1667 = vmatpush1.bf16.msra.mxu0 %v1646
        %1668 = vmatprep.subr.bf16.mxu0 0
        %1669 = vmatpush1.bf16.msra.mxu0 %v1647
        %1670 = vmatprep.subr.bf16.mxu0 0
        %1671 = vmatpush1.bf16.msra.mxu0 %v1648
        %1672 = vmatprep.subr.bf16.mxu0 0
        %1673 = vmatpush1.bf16.msra.mxu0 %v1649
        %1674 = vmatprep.subr.bf16.mxu0 0
        %1675 = vmatpush1.bf16.msra.mxu0 0
        %1676 = vmatprep.subr.bf16.mxu0 0
        %1677 = vmatpush1.bf16.msra.mxu0 0
        %1678 = vmatprep.subr.bf16.mxu0 0
        %1679 = vmatpush1.bf16.msra.mxu0 0
        %1680 = vmatprep.subr.bf16.mxu0 0
        %1681 = vmatpush1.bf16.msra.mxu0 0
        %1682 = vmatprep.subr.bf16.mxu0 0
        %1683 = vmatpush1.bf16.msra.mxu0 0
        %1684 = vmatprep.subr.bf16.mxu0 0
        %1685 = vmatpush1.bf16.msra.mxu0 0
        %1686 = vmatprep.subr.bf16.mxu0 0
        %1687 = vmatpush1.bf16.msra.mxu0 0
        %1688 = vmatprep.subr.bf16.mxu0 0
        %1689 = vmatpush1.bf16.msra.mxu0 0
        %1690 = vmatprep.mubr.bf16.mxu0 0
        %1691 = vmatmul.mubr.bf16.gmra.mrb[0].mxu0 %v1577
        %v1692 = vpop.f32.mrb[0].mxu0
        %v1693 = vadd.f32 0.0, %v1692
        %v1694 = vpop.f32.mrb[0].mxu0
        %v1695 = vpop.f32.mrb[0].mxu0
        %v1696 = vadd.f32 0.0, %v1695
        %v1697 = vpop.f32.mrb[0].mxu0
        %1698 = vmatprep.mubr.bf16.mxu0 0
        %1699 = vmatmul.mubr.bf16.gmra.mrb[0].mxu0 %v1578
        %v1700 = vpop.f32.mrb[0].mxu0
        %v1701 = vadd.f32 0.0, %v1700
        %v1702 = vpop.f32.mrb[0].mxu0
        %v1703 = vpop.f32.mrb[0].mxu0
        %v1704 = vadd.f32 0.0, %v1703
        %v1705 = vpop.f32.mrb[0].mxu0
        %1706 = vmatprep.mubr.bf16.mxu0 0
        %1707 = vmatmul.mubr.bf16.gmra.mrb[0].mxu0 %v1579
        %v1708 = vpop.f32.mrb[0].mxu0
        %v1709 = vadd.f32 0.0, %v1708
        %v1710 = vpop.f32.mrb[0].mxu0
        %v1711 = vpop.f32.mrb[0].mxu0
        %v1712 = vadd.f32 0.0, %v1711
        %v1713 = vpop.f32.mrb[0].mxu0
        %1714 = vmatprep.mubr.bf16.mxu0 0
        %1715 = vmatmul.mubr.bf16.gmra.mrb[0].mxu0 %v1580
        %v1716 = vpop.f32.mrb[0].mxu0
        %v1717 = vadd.f32 0.0, %v1716
        %v1718 = vpop.f32.mrb[0].mxu0
        %v1719 = vpop.f32.mrb[0].mxu0
        %v1720 = vadd.f32 0.0, %v1719
        %v1721 = vpop.f32.mrb[0].mxu0
        %1722 = vmatprep.mubr.bf16.mxu0 0
        %1723 = vmatmul.mubr.bf16.gmra.mrb[0].mxu0 %v1581
        %v1724 = vpop.f32.mrb[0].mxu0
        %v1725 = vadd.f32 0.0, %v1724
        %v1726 = vpop.f32.mrb[0].mxu0
        %v1727 = vpop.f32.mrb[0].mxu0
        %v1728 = vadd.f32 0.0, %v1727
        %v1729 = vpop.f32.mrb[0].mxu0
        %1730 = vmatprep.mubr.bf16.mxu0 0
        %1731 = vmatmul.mubr.bf16.gmra.mrb[0].mxu0 %v1582
        %v1732 = vpop.f32.mrb[0].mxu0
        %v1733 = vadd.f32 0.0, %v1732
        %v1734 = vpop.f32.mrb[0].mxu0
        %v1735 = vpop.f32.mrb[0].mxu0
        %v1736 = vadd.f32 0.0, %v1735
        %v1737 = vpop.f32.mrb[0].mxu0
        %1738 = vmatprep.mubr.bf16.mxu0 0
        %1739 = vmatmul.mubr.bf16.gmra.mrb[0].mxu0 %v1583
        %v1740 = vpop.f32.mrb[0].mxu0
        %v1741 = vadd.f32 0.0, %v1740
        %v1742 = vpop.f32.mrb[0].mxu0
        %v1743 = vpop.f32.mrb[0].mxu0
        %v1744 = vadd.f32 0.0, %v1743
        %v1745 = vpop.f32.mrb[0].mxu0
        %1746 = vmatprep.mubr.bf16.mxu0 0
        %1747 = vmatmul.mubr.bf16.gmra.mrb[0].mxu0 %v1584
        %v1748 = vpop.f32.mrb[0].mxu0
        %v1749 = vadd.f32 0.0, %v1748
        %v1750 = vpop.f32.mrb[0].mxu0
        %v1751 = vpop.f32.mrb[0].mxu0
        %v1752 = vadd.f32 0.0, %v1751
        %v1753 = vpop.f32.mrb[0].mxu0
        %1754 = vmatprep.mubr.bf16.mxu0 0
        %1755 = vmatmul.mubr.bf16.gmra.mrb[0].mxu0 %v1585
        %v1756 = vpop.f32.mrb[0].mxu0
        %v1757 = vadd.f32 0.0, %v1756
        %v1758 = vpop.f32.mrb[0].mxu0
        %v1759 = vpop.f32.mrb[0].mxu0
        %v1760 = vadd.f32 0.0, %v1759
        %v1761 = vpop.f32.mrb[0].mxu0
        %1762 = vmatprep.mubr.bf16.mxu0 0
        %1763 = vmatmul.mubr.bf16.gmra.mrb[0].mxu0 %v1586
        %v1764 = vpop.f32.mrb[0].mxu0
        %v1765 = vadd.f32 0.0, %v1764
        %v1766 = vpop.f32.mrb[0].mxu0
        %v1767 = vpop.f32.mrb[0].mxu0
        %v1768 = vadd.f32 0.0, %v1767
        %v1769 = vpop.f32.mrb[0].mxu0
        %1770 = vmatprep.mubr.bf16.mxu0 0
        %1771 = vmatmul.mubr.bf16.gmra.mrb[0].mxu0 %v1587
        %v1772 = vpop.f32.mrb[0].mxu0
        %v1773 = vadd.f32 0.0, %v1772
        %v1774 = vpop.f32.mrb[0].mxu0
        %v1775 = vpop.f32.mrb[0].mxu0
        %v1776 = vadd.f32 0.0, %v1775
        %v1777 = vpop.f32.mrb[0].mxu0
        %1778 = vmatprep.mubr.bf16.mxu0 0
        %1779 = vmatmul.mubr.bf16.gmra.mrb[0].mxu0 %v1588
        %v1780 = vpop.f32.mrb[0].mxu0
        %v1781 = vadd.f32 0.0, %v1780
        %v1782 = vpop.f32.mrb[0].mxu0
        %v1783 = vpop.f32.mrb[0].mxu0
        %v1784 = vadd.f32 0.0, %v1783
        %v1785 = vpop.f32.mrb[0].mxu0
        %1786 = vmatprep.mubr.bf16.mxu0 0
        %1787 = vmatmul.mubr.bf16.gmra.mrb[0].mxu0 %v1589
        %v1788 = vpop.f32.mrb[0].mxu0
        %v1789 = vadd.f32 0.0, %v1788
        %v1790 = vpop.f32.mrb[0].mxu0
        %v1791 = vpop.f32.mrb[0].mxu0
        %v1792 = vadd.f32 0.0, %v1791
        %v1793 = vpop.f32.mrb[0].mxu0
        %1794 = vmatprep.mubr.bf16.mxu0 0
        %1795 = vmatmul.mubr.bf16.gmra.mrb[0].mxu0 %v1590
        %v1796 = vpop.f32.mrb[0].mxu0
        %v1797 = vadd.f32 0.0, %v1796
        %v1798 = vpop.f32.mrb[0].mxu0
        %v1799 = vpop.f32.mrb[0].mxu0
        %v1800 = vadd.f32 0.0, %v1799
        %v1801 = vpop.f32.mrb[0].mxu0
        %1802 = vmatprep.mubr.bf16.mxu0 0
        %1803 = vmatmul.mubr.bf16.gmra.mrb[0].mxu0 %v1591
        %v1804 = vpop.f32.mrb[0].mxu0
        %v1805 = vadd.f32 0.0, %v1804
        %v1806 = vpop.f32.mrb[0].mxu0
        %v1807 = vpop.f32.mrb[0].mxu0
        %v1808 = vadd.f32 0.0, %v1807
        %v1809 = vpop.f32.mrb[0].mxu0
        %1810 = vmatprep.mubr.bf16.mxu0 0
        %1811 = vmatmul.mubr.bf16.gmra.mrb[0].mxu0 %v1592
        %v1812 = vpop.f32.mrb[0].mxu0
        %v1813 = vadd.f32 0.0, %v1812
        %v1814 = vpop.f32.mrb[0].mxu0
        %v1815 = vpop.f32.mrb[0].mxu0
        %v1816 = vadd.f32 0.0, %v1815
        %v1817 = vpop.f32.mrb[0].mxu0
        %1818 = vdwg.mxu0
        %v1819 = vadd.f32 %v1513, %v1693
        %v1820 = vadd.f32 %v1514, %v1696
        %v1821 = vadd.f32 %v1515, %v1701
        %v1822 = vadd.f32 %v1516, %v1704
        %v1823 = vadd.f32 %v1517, %v1709
        %v1824 = vadd.f32 %v1518, %v1712
        %v1825 = vadd.f32 %v1519, %v1717
        %v1826 = vadd.f32 %v1520, %v1720
        %v1827 = vadd.f32 %v1521, %v1725
        %v1828 = vadd.f32 %v1522, %v1728
        %v1829 = vadd.f32 %v1523, %v1733
        %v1830 = vadd.f32 %v1524, %v1736
        %v1831 = vadd.f32 %v1525, %v1741
        %v1832 = vadd.f32 %v1526, %v1744
        %v1833 = vadd.f32 %v1527, %v1749
        %v1834 = vadd.f32 %v1528, %v1752
        %v1835 = vadd.f32 %v1529, %v1757
        %v1836 = vadd.f32 %v1530, %v1760
        %v1837 = vadd.f32 %v1531, %v1765
        %v1838 = vadd.f32 %v1532, %v1768
        %v1839 = vadd.f32 %v1533, %v1773
        %v1840 = vadd.f32 %v1534, %v1776
        %v1841 = vadd.f32 %v1535, %v1781
        %v1842 = vadd.f32 %v1536, %v1784
        %v1843 = vadd.f32 %v1537, %v1789
        %v1844 = vadd.f32 %v1538, %v1792
        %v1845 = vadd.f32 %v1539, %v1797
        %v1846 = vadd.f32 %v1540, %v1800
        %v1847 = vadd.f32 %v1541, %v1805
        %v1848 = vadd.f32 %v1542, %v1808
        %v1849 = vadd.f32 %v1543, %v1813
        %v1850 = vadd.f32 %v1544, %v1816
        %v1851 = vld [vmem:[%s659 + $0x1] sm:$0xff]
        %v1852 = vld [vmem:[%s659 + $0x9] sm:$0xff]
        %v1853 = vld [vmem:[%s659 + $0x19] sm:$0xff]
        %v1854 = vld [vmem:[%s659 + $0x21] sm:$0xff]
        %v1855 = vld [vmem:[%s659 + $0x31] sm:$0xff]
        %v1856 = vld [vmem:[%s659 + $0x39] sm:$0xff]
        %v1857 = vld [vmem:[%s659 + $0x49] sm:$0xff]
        %v1858 = vld [vmem:[%s659 + $0x51] sm:$0xff]
        %v1859 = vld [vmem:[%s659 + $0x61] sm:$0xff]
        %v1860 = vld [vmem:[%s659 + $0x69] sm:$0xff]
        %v1861 = vld [vmem:[%s659 + $0x79] sm:$0xff]
        %v1862 = vld [vmem:[%s659 + $0x81] sm:$0xff]
        %v1863 = vld [vmem:[%s659 + $0x91] sm:$0xff]
        %v1864 = vld [vmem:[%s659 + $0x99] sm:$0xff]
        %v1865 = vld [vmem:[%s659 + $0xa9] sm:$0xff]
        %v1866 = vld [vmem:[%s659 + $0xb1] sm:$0xff]
        %v1867 = vld [vmem:[%s659 + $0xc1] sm:$0xff]
        %v1868 = vld [vmem:[%s659 + $0xc9] sm:$0xff]
        %v1869 = vld [vmem:[%s659 + $0xd9] sm:$0xff]
        %v1870 = vld [vmem:[%s659 + $0xe1] sm:$0xff]
        %v1871 = vld [vmem:[%s659 + $0xf1] sm:$0xff]
        %v1872 = vld [vmem:[%s659 + $0xf9] sm:$0xff]
        %v1873 = vld [vmem:[%s659 + $0x109] sm:$0xff]
        %v1874 = vld [vmem:[%s659 + $0x111] sm:$0xff]
        %v1875 = vld [vmem:[%s659 + $0x121] sm:$0xff]
        %v1876 = vld [vmem:[%s659 + $0x129] sm:$0xff]
        %v1877 = vld [vmem:[%s659 + $0x139] sm:$0xff]
        %v1878 = vld [vmem:[%s659 + $0x141] sm:$0xff]
        %v1879 = vld [vmem:[%s659 + $0x151] sm:$0xff]
        %v1880 = vld [vmem:[%s659 + $0x159] sm:$0xff]
        %v1881 = vld [vmem:[%s659 + $0x169] sm:$0xff]
        %v1882 = vld [vmem:[%s659 + $0x171] sm:$0xff]
        %v1883 = vpack.c.bf16 %v1852, %v1851
        %v1884 = vpack.c.bf16 %v1854, %v1853
        %v1885 = vpack.c.bf16 %v1856, %v1855
        %v1886 = vpack.c.bf16 %v1858, %v1857
        %v1887 = vpack.c.bf16 %v1860, %v1859
        %v1888 = vpack.c.bf16 %v1862, %v1861
        %v1889 = vpack.c.bf16 %v1864, %v1863
        %v1890 = vpack.c.bf16 %v1866, %v1865
        %v1891 = vpack.c.bf16 %v1868, %v1867
        %v1892 = vpack.c.bf16 %v1870, %v1869
        %v1893 = vpack.c.bf16 %v1872, %v1871
        %v1894 = vpack.c.bf16 %v1874, %v1873
        %v1895 = vpack.c.bf16 %v1876, %v1875
        %v1896 = vpack.c.bf16 %v1878, %v1877
        %v1897 = vpack.c.bf16 %v1880, %v1879
        %v1898 = vpack.c.bf16 %v1882, %v1881
        %s1899 = scalar_lea.vmem [#allocation3], 256
        %v1900 = vld [vmem:[%s1899] sm:$0xf]
        %v1901 = vld [vmem:[%s1899 + $0x4] sm:$0xf]
        %v1902 = vld [vmem:[%s1899 + $0x8] sm:$0xf]
        %v1903 = vld [vmem:[%s1899 + $0xc] sm:$0xf]
        %v1904 = vld [vmem:[%s1899 + $0x10] sm:$0xf]
        %v1905 = vld [vmem:[%s1899 + $0x14] sm:$0xf]
        %v1906 = vld [vmem:[%s1899 + $0x18] sm:$0xf]
        %v1907 = vld [vmem:[%s1899 + $0x1c] sm:$0xf]
        %v1908 = vld [vmem:[%s1899 + $0x20] sm:$0xf]
        %v1909 = vld [vmem:[%s1899 + $0x24] sm:$0xf]
        %v1910 = vld [vmem:[%s1899 + $0x28] sm:$0xf]
        %v1911 = vld [vmem:[%s1899 + $0x2c] sm:$0xf]
        %v1912 = vld [vmem:[%s1899 + $0x30] sm:$0xf]
        %v1913 = vld [vmem:[%s1899 + $0x34] sm:$0xf]
        %v1914 = vld [vmem:[%s1899 + $0x38] sm:$0xf]
        %v1915 = vld [vmem:[%s1899 + $0x3c] sm:$0xf]
        %v1932 = vunpack.c.l.b16 %v1900
        %v1933 = vunpack.c.l.b16 %v1901
        %v1934 = vunpack.c.l.b16 %v1902
        %v1935 = vunpack.c.l.b16 %v1903
        %v1936 = vunpack.c.l.b16 %v1904
        %v1937 = vunpack.c.l.b16 %v1905
        %v1938 = vunpack.c.l.b16 %v1906
        %v1939 = vunpack.c.l.b16 %v1907
        %v1940 = vunpack.c.l.b16 %v1908
        %v1941 = vunpack.c.l.b16 %v1909
        %v1942 = vunpack.c.l.b16 %v1910
        %v1943 = vunpack.c.l.b16 %v1911
        %v1944 = vunpack.c.l.b16 %v1912
        %v1945 = vunpack.c.l.b16 %v1913
        %v1946 = vunpack.c.l.b16 %v1914
        %v1947 = vunpack.c.l.b16 %v1915
        %v1948 = vpack.c.b16 %v1933, %v1932
        %v1949 = vpack.c.b16 %v1935, %v1934
        %v1950 = vpack.c.b16 %v1937, %v1936
        %v1951 = vpack.c.b16 %v1939, %v1938
        %v1952 = vpack.c.b16 %v1941, %v1940
        %v1953 = vpack.c.b16 %v1943, %v1942
        %v1954 = vpack.c.b16 %v1945, %v1944
        %v1955 = vpack.c.b16 %v1947, %v1946
        %1964 = vmatprep.subr.bf16.mxu0 0
        %1965 = vmatpush1.bf16.msra.mxu0 %v1948
        %1966 = vmatprep.subr.bf16.mxu0 0
        %1967 = vmatpush1.bf16.msra.mxu0 %v1949
        %1968 = vmatprep.subr.bf16.mxu0 0
        %1969 = vmatpush1.bf16.msra.mxu0 %v1950
        %1970 = vmatprep.subr.bf16.mxu0 0
        %1971 = vmatpush1.bf16.msra.mxu0 %v1951
        %1972 = vmatprep.subr.bf16.mxu0 0
        %1973 = vmatpush1.bf16.msra.mxu0 %v1952
        %1974 = vmatprep.subr.bf16.mxu0 0
        %1975 = vmatpush1.bf16.msra.mxu0 %v1953
        %1976 = vmatprep.subr.bf16.mxu0 0
        %1977 = vmatpush1.bf16.msra.mxu0 %v1954
        %1978 = vmatprep.subr.bf16.mxu0 0
        %1979 = vmatpush1.bf16.msra.mxu0 %v1955
        %1980 = vmatprep.subr.bf16.mxu0 0
        %1981 = vmatpush1.bf16.msra.mxu0 0
        %1982 = vmatprep.subr.bf16.mxu0 0
        %1983 = vmatpush1.bf16.msra.mxu0 0
        %1984 = vmatprep.subr.bf16.mxu0 0
        %1985 = vmatpush1.bf16.msra.mxu0 0
        %1986 = vmatprep.subr.bf16.mxu0 0
        %1987 = vmatpush1.bf16.msra.mxu0 0
        %1988 = vmatprep.subr.bf16.mxu0 0
        %1989 = vmatpush1.bf16.msra.mxu0 0
        %1990 = vmatprep.subr.bf16.mxu0 0
        %1991 = vmatpush1.bf16.msra.mxu0 0
        %1992 = vmatprep.subr.bf16.mxu0 0
        %1993 = vmatpush1.bf16.msra.mxu0 0
        %1994 = vmatprep.subr.bf16.mxu0 0
        %1995 = vmatpush1.bf16.msra.mxu0 0
        %1996 = vmatprep.mubr.bf16.mxu0 0
        %1997 = vmatmul.mubr.bf16.gmra.mrb[0].mxu0 %v1883
        %v1998 = vpop.f32.mrb[0].mxu0
        %v1999 = vadd.f32 0.0, %v1998
        %v2000 = vpop.f32.mrb[0].mxu0
        %v2001 = vpop.f32.mrb[0].mxu0
        %v2002 = vadd.f32 0.0, %v2001
        %v2003 = vpop.f32.mrb[0].mxu0
        %2004 = vmatprep.mubr.bf16.mxu0 0
        %2005 = vmatmul.mubr.bf16.gmra.mrb[0].mxu0 %v1884
        %v2006 = vpop.f32.mrb[0].mxu0
        %v2007 = vadd.f32 0.0, %v2006
        %v2008 = vpop.f32.mrb[0].mxu0
        %v2009 = vpop.f32.mrb[0].mxu0
        %v2010 = vadd.f32 0.0, %v2009
        %v2011 = vpop.f32.mrb[0].mxu0
        %2012 = vmatprep.mubr.bf16.mxu0 0
        %2013 = vmatmul.mubr.bf16.gmra.mrb[0].mxu0 %v1885
        %v2014 = vpop.f32.mrb[0].mxu0
        %v2015 = vadd.f32 0.0, %v2014
        %v2016 = vpop.f32.mrb[0].mxu0
        %v2017 = vpop.f32.mrb[0].mxu0
        %v2018 = vadd.f32 0.0, %v2017
        %v2019 = vpop.f32.mrb[0].mxu0
        %2020 = vmatprep.mubr.bf16.mxu0 0
        %2021 = vmatmul.mubr.bf16.gmra.mrb[0].mxu0 %v1886
        %v2022 = vpop.f32.mrb[0].mxu0
        %v2023 = vadd.f32 0.0, %v2022
        %v2024 = vpop.f32.mrb[0].mxu0
        %v2025 = vpop.f32.mrb[0].mxu0
        %v2026 = vadd.f32 0.0, %v2025
        %v2027 = vpop.f32.mrb[0].mxu0
        %2028 = vmatprep.mubr.bf16.mxu0 0
        %2029 = vmatmul.mubr.bf16.gmra.mrb[0].mxu0 %v1887
        %v2030 = vpop.f32.mrb[0].mxu0
        %v2031 = vadd.f32 0.0, %v2030
        %v2032 = vpop.f32.mrb[0].mxu0
        %v2033 = vpop.f32.mrb[0].mxu0
        %v2034 = vadd.f32 0.0, %v2033
        %v2035 = vpop.f32.mrb[0].mxu0
        %2036 = vmatprep.mubr.bf16.mxu0 0
        %2037 = vmatmul.mubr.bf16.gmra.mrb[0].mxu0 %v1888
        %v2038 = vpop.f32.mrb[0].mxu0
        %v2039 = vadd.f32 0.0, %v2038
        %v2040 = vpop.f32.mrb[0].mxu0
        %v2041 = vpop.f32.mrb[0].mxu0
        %v2042 = vadd.f32 0.0, %v2041
        %v2043 = vpop.f32.mrb[0].mxu0
        %2044 = vmatprep.mubr.bf16.mxu0 0
        %2045 = vmatmul.mubr.bf16.gmra.mrb[0].mxu0 %v1889
        %v2046 = vpop.f32.mrb[0].mxu0
        %v2047 = vadd.f32 0.0, %v2046
        %v2048 = vpop.f32.mrb[0].mxu0
        %v2049 = vpop.f32.mrb[0].mxu0
        %v2050 = vadd.f32 0.0, %v2049
        %v2051 = vpop.f32.mrb[0].mxu0
        %2052 = vmatprep.mubr.bf16.mxu0 0
        %2053 = vmatmul.mubr.bf16.gmra.mrb[0].mxu0 %v1890
        %v2054 = vpop.f32.mrb[0].mxu0
        %v2055 = vadd.f32 0.0, %v2054
        %v2056 = vpop.f32.mrb[0].mxu0
        %v2057 = vpop.f32.mrb[0].mxu0
        %v2058 = vadd.f32 0.0, %v2057
        %v2059 = vpop.f32.mrb[0].mxu0
        %2060 = vmatprep.mubr.bf16.mxu0 0
        %2061 = vmatmul.mubr.bf16.gmra.mrb[0].mxu0 %v1891
        %v2062 = vpop.f32.mrb[0].mxu0
        %v2063 = vadd.f32 0.0, %v2062
        %v2064 = vpop.f32.mrb[0].mxu0
        %v2065 = vpop.f32.mrb[0].mxu0
        %v2066 = vadd.f32 0.0, %v2065
        %v2067 = vpop.f32.mrb[0].mxu0
        %2068 = vmatprep.mubr.bf16.mxu0 0
        %2069 = vmatmul.mubr.bf16.gmra.mrb[0].mxu0 %v1892
        %v2070 = vpop.f32.mrb[0].mxu0
        %v2071 = vadd.f32 0.0, %v2070
        %v2072 = vpop.f32.mrb[0].mxu0
        %v2073 = vpop.f32.mrb[0].mxu0
        %v2074 = vadd.f32 0.0, %v2073
        %v2075 = vpop.f32.mrb[0].mxu0
        %2076 = vmatprep.mubr.bf16.mxu0 0
        %2077 = vmatmul.mubr.bf16.gmra.mrb[0].mxu0 %v1893
        %v2078 = vpop.f32.mrb[0].mxu0
        %v2079 = vadd.f32 0.0, %v2078
        %v2080 = vpop.f32.mrb[0].mxu0
        %v2081 = vpop.f32.mrb[0].mxu0
        %v2082 = vadd.f32 0.0, %v2081
        %v2083 = vpop.f32.mrb[0].mxu0
        %2084 = vmatprep.mubr.bf16.mxu0 0
        %2085 = vmatmul.mubr.bf16.gmra.mrb[0].mxu0 %v1894
        %v2086 = vpop.f32.mrb[0].mxu0
        %v2087 = vadd.f32 0.0, %v2086
        %v2088 = vpop.f32.mrb[0].mxu0
        %v2089 = vpop.f32.mrb[0].mxu0
        %v2090 = vadd.f32 0.0, %v2089
        %v2091 = vpop.f32.mrb[0].mxu0
        %2092 = vmatprep.mubr.bf16.mxu0 0
        %2093 = vmatmul.mubr.bf16.gmra.mrb[0].mxu0 %v1895
        %v2094 = vpop.f32.mrb[0].mxu0
        %v2095 = vadd.f32 0.0, %v2094
        %v2096 = vpop.f32.mrb[0].mxu0
        %v2097 = vpop.f32.mrb[0].mxu0
        %v2098 = vadd.f32 0.0, %v2097
        %v2099 = vpop.f32.mrb[0].mxu0
        %2100 = vmatprep.mubr.bf16.mxu0 0
        %2101 = vmatmul.mubr.bf16.gmra.mrb[0].mxu0 %v1896
        %v2102 = vpop.f32.mrb[0].mxu0
        %v2103 = vadd.f32 0.0, %v2102
        %v2104 = vpop.f32.mrb[0].mxu0
        %v2105 = vpop.f32.mrb[0].mxu0
        %v2106 = vadd.f32 0.0, %v2105
        %v2107 = vpop.f32.mrb[0].mxu0
        %2108 = vmatprep.mubr.bf16.mxu0 0
        %2109 = vmatmul.mubr.bf16.gmra.mrb[0].mxu0 %v1897
        %v2110 = vpop.f32.mrb[0].mxu0
        %v2111 = vadd.f32 0.0, %v2110
        %v2112 = vpop.f32.mrb[0].mxu0
        %v2113 = vpop.f32.mrb[0].mxu0
        %v2114 = vadd.f32 0.0, %v2113
        %v2115 = vpop.f32.mrb[0].mxu0
        %2116 = vmatprep.mubr.bf16.mxu0 0
        %2117 = vmatmul.mubr.bf16.gmra.mrb[0].mxu0 %v1898
        %v2118 = vpop.f32.mrb[0].mxu0
        %v2119 = vadd.f32 0.0, %v2118
        %v2120 = vpop.f32.mrb[0].mxu0
        %v2121 = vpop.f32.mrb[0].mxu0
        %v2122 = vadd.f32 0.0, %v2121
        %v2123 = vpop.f32.mrb[0].mxu0
        %2124 = vdwg.mxu0
        %v2125 = vadd.f32 %v1819, %v1999
        %v2126 = vadd.f32 %v1820, %v2002
        %v2127 = vadd.f32 %v1821, %v2007
        %v2128 = vadd.f32 %v1822, %v2010
        %v2129 = vadd.f32 %v1823, %v2015
        %v2130 = vadd.f32 %v1824, %v2018
        %v2131 = vadd.f32 %v1825, %v2023
        %v2132 = vadd.f32 %v1826, %v2026
        %v2133 = vadd.f32 %v1827, %v2031
        %v2134 = vadd.f32 %v1828, %v2034
        %v2135 = vadd.f32 %v1829, %v2039
        %v2136 = vadd.f32 %v1830, %v2042
        %v2137 = vadd.f32 %v1831, %v2047
        %v2138 = vadd.f32 %v1832, %v2050
        %v2139 = vadd.f32 %v1833, %v2055
        %v2140 = vadd.f32 %v1834, %v2058
        %v2141 = vadd.f32 %v1835, %v2063
        %v2142 = vadd.f32 %v1836, %v2066
        %v2143 = vadd.f32 %v1837, %v2071
        %v2144 = vadd.f32 %v1838, %v2074
        %v2145 = vadd.f32 %v1839, %v2079
        %v2146 = vadd.f32 %v1840, %v2082
        %v2147 = vadd.f32 %v1841, %v2087
        %v2148 = vadd.f32 %v1842, %v2090
        %v2149 = vadd.f32 %v1843, %v2095
        %v2150 = vadd.f32 %v1844, %v2098
        %v2151 = vadd.f32 %v1845, %v2103
        %v2152 = vadd.f32 %v1846, %v2106
        %v2153 = vadd.f32 %v1847, %v2111
        %v2154 = vadd.f32 %v1848, %v2114
        %v2155 = vadd.f32 %v1849, %v2119
        %v2156 = vadd.f32 %v1850, %v2122
        %v2157 = vld [vmem:[%s659 + $0x2] sm:$0xff]
        %v2158 = vld [vmem:[%s659 + $0xa] sm:$0xff]
        %v2159 = vld [vmem:[%s659 + $0x1a] sm:$0xff]
        %v2160 = vld [vmem:[%s659 + $0x22] sm:$0xff]
        %v2161 = vld [vmem:[%s659 + $0x32] sm:$0xff]
        %v2162 = vld [vmem:[%s659 + $0x3a] sm:$0xff]
        %v2163 = vld [vmem:[%s659 + $0x4a] sm:$0xff]
        %v2164 = vld [vmem:[%s659 + $0x52] sm:$0xff]
        %v2165 = vld [vmem:[%s659 + $0x62] sm:$0xff]
        %v2166 = vld [vmem:[%s659 + $0x6a] sm:$0xff]
        %v2167 = vld [vmem:[%s659 + $0x7a] sm:$0xff]
        %v2168 = vld [vmem:[%s659 + $0x82] sm:$0xff]
        %v2169 = vld [vmem:[%s659 + $0x92] sm:$0xff]
        %v2170 = vld [vmem:[%s659 + $0x9a] sm:$0xff]
        %v2171 = vld [vmem:[%s659 + $0xaa] sm:$0xff]
        %v2172 = vld [vmem:[%s659 + $0xb2] sm:$0xff]
        %v2173 = vld [vmem:[%s659 + $0xc2] sm:$0xff]
        %v2174 = vld [vmem:[%s659 + $0xca] sm:$0xff]
        %v2175 = vld [vmem:[%s659 + $0xda] sm:$0xff]
        %v2176 = vld [vmem:[%s659 + $0xe2] sm:$0xff]
        %v2177 = vld [vmem:[%s659 + $0xf2] sm:$0xff]
        %v2178 = vld [vmem:[%s659 + $0xfa] sm:$0xff]
        %v2179 = vld [vmem:[%s659 + $0x10a] sm:$0xff]
        %v2180 = vld [vmem:[%s659 + $0x112] sm:$0xff]
        %v2181 = vld [vmem:[%s659 + $0x122] sm:$0xff]
        %v2182 = vld [vmem:[%s659 + $0x12a] sm:$0xff]
        %v2183 = vld [vmem:[%s659 + $0x13a] sm:$0xff]
        %v2184 = vld [vmem:[%s659 + $0x142] sm:$0xff]
        %v2185 = vld [vmem:[%s659 + $0x152] sm:$0xff]
        %v2186 = vld [vmem:[%s659 + $0x15a] sm:$0xff]
        %v2187 = vld [vmem:[%s659 + $0x16a] sm:$0xff]
        %v2188 = vld [vmem:[%s659 + $0x172] sm:$0xff]
        %v2189 = vpack.c.bf16 %v2158, %v2157
        %v2190 = vpack.c.bf16 %v2160, %v2159
        %v2191 = vpack.c.bf16 %v2162, %v2161
        %v2192 = vpack.c.bf16 %v2164, %v2163
        %v2193 = vpack.c.bf16 %v2166, %v2165
        %v2194 = vpack.c.bf16 %v2168, %v2167
        %v2195 = vpack.c.bf16 %v2170, %v2169
        %v2196 = vpack.c.bf16 %v2172, %v2171
        %v2197 = vpack.c.bf16 %v2174, %v2173
        %v2198 = vpack.c.bf16 %v2176, %v2175
        %v2199 = vpack.c.bf16 %v2178, %v2177
        %v2200 = vpack.c.bf16 %v2180, %v2179
        %v2201 = vpack.c.bf16 %v2182, %v2181
        %v2202 = vpack.c.bf16 %v2184, %v2183
        %v2203 = vpack.c.bf16 %v2186, %v2185
        %v2204 = vpack.c.bf16 %v2188, %v2187
        %s2205 = scalar_lea.vmem [#allocation3], 320
        %v2206 = vld [vmem:[%s2205] sm:$0xf]
        %v2207 = vld [vmem:[%s2205 + $0x4] sm:$0xf]
        %v2208 = vld [vmem:[%s2205 + $0x8] sm:$0xf]
        %v2209 = vld [vmem:[%s2205 + $0xc] sm:$0xf]
        %v2210 = vld [vmem:[%s2205 + $0x10] sm:$0xf]
        %v2211 = vld [vmem:[%s2205 + $0x14] sm:$0xf]
        %v2212 = vld [vmem:[%s2205 + $0x18] sm:$0xf]
        %v2213 = vld [vmem:[%s2205 + $0x1c] sm:$0xf]
        %v2214 = vld [vmem:[%s2205 + $0x20] sm:$0xf]
        %v2215 = vld [vmem:[%s2205 + $0x24] sm:$0xf]
        %v2216 = vld [vmem:[%s2205 + $0x28] sm:$0xf]
        %v2217 = vld [vmem:[%s2205 + $0x2c] sm:$0xf]
        %v2218 = vld [vmem:[%s2205 + $0x30] sm:$0xf]
        %v2219 = vld [vmem:[%s2205 + $0x34] sm:$0xf]
        %v2220 = vld [vmem:[%s2205 + $0x38] sm:$0xf]
        %v2221 = vld [vmem:[%s2205 + $0x3c] sm:$0xf]
        %v2238 = vunpack.c.l.b16 %v2206
        %v2239 = vunpack.c.l.b16 %v2207
        %v2240 = vunpack.c.l.b16 %v2208
        %v2241 = vunpack.c.l.b16 %v2209
        %v2242 = vunpack.c.l.b16 %v2210
        %v2243 = vunpack.c.l.b16 %v2211
        %v2244 = vunpack.c.l.b16 %v2212
        %v2245 = vunpack.c.l.b16 %v2213
        %v2246 = vunpack.c.l.b16 %v2214
        %v2247 = vunpack.c.l.b16 %v2215
        %v2248 = vunpack.c.l.b16 %v2216
        %v2249 = vunpack.c.l.b16 %v2217
        %v2250 = vunpack.c.l.b16 %v2218
        %v2251 = vunpack.c.l.b16 %v2219
        %v2252 = vunpack.c.l.b16 %v2220
        %v2253 = vunpack.c.l.b16 %v2221
        %v2254 = vpack.c.b16 %v2239, %v2238
        %v2255 = vpack.c.b16 %v2241, %v2240
        %v2256 = vpack.c.b16 %v2243, %v2242
        %v2257 = vpack.c.b16 %v2245, %v2244
        %v2258 = vpack.c.b16 %v2247, %v2246
        %v2259 = vpack.c.b16 %v2249, %v2248
        %v2260 = vpack.c.b16 %v2251, %v2250
        %v2261 = vpack.c.b16 %v2253, %v2252
        %2270 = vmatprep.subr.bf16.mxu0 0
        %2271 = vmatpush1.bf16.msra.mxu0 %v2254
        %2272 = vmatprep.subr.bf16.mxu0 0
        %2273 = vmatpush1.bf16.msra.mxu0 %v2255
        %2274 = vmatprep.subr.bf16.mxu0 0
        %2275 = vmatpush1.bf16.msra.mxu0 %v2256
        %2276 = vmatprep.subr.bf16.mxu0 0
        %2277 = vmatpush1.bf16.msra.mxu0 %v2257
        %2278 = vmatprep.subr.bf16.mxu0 0
        %2279 = vmatpush1.bf16.msra.mxu0 %v2258
        %2280 = vmatprep.subr.bf16.mxu0 0
        %2281 = vmatpush1.bf16.msra.mxu0 %v2259
        %2282 = vmatprep.subr.bf16.mxu0 0
        %2283 = vmatpush1.bf16.msra.mxu0 %v2260
        %2284 = vmatprep.subr.bf16.mxu0 0
        %2285 = vmatpush1.bf16.msra.mxu0 %v2261
        %2286 = vmatprep.subr.bf16.mxu0 0
        %2287 = vmatpush1.bf16.msra.mxu0 0
        %2288 = vmatprep.subr.bf16.mxu0 0
        %2289 = vmatpush1.bf16.msra.mxu0 0
        %2290 = vmatprep.subr.bf16.mxu0 0
        %2291 = vmatpush1.bf16.msra.mxu0 0
        %2292 = vmatprep.subr.bf16.mxu0 0
        %2293 = vmatpush1.bf16.msra.mxu0 0
        %2294 = vmatprep.subr.bf16.mxu0 0
        %2295 = vmatpush1.bf16.msra.mxu0 0
        %2296 = vmatprep.subr.bf16.mxu0 0
        %2297 = vmatpush1.bf16.msra.mxu0 0
        %2298 = vmatprep.subr.bf16.mxu0 0
        %2299 = vmatpush1.bf16.msra.mxu0 0
        %2300 = vmatprep.subr.bf16.mxu0 0
        %2301 = vmatpush1.bf16.msra.mxu0 0
        %2302 = vmatprep.mubr.bf16.mxu0 0
        %2303 = vmatmul.mubr.bf16.gmra.mrb[0].mxu0 %v2189
        %v2304 = vpop.f32.mrb[0].mxu0
        %v2305 = vadd.f32 0.0, %v2304
        %v2306 = vpop.f32.mrb[0].mxu0
        %v2307 = vpop.f32.mrb[0].mxu0
        %v2308 = vadd.f32 0.0, %v2307
        %v2309 = vpop.f32.mrb[0].mxu0
        %2310 = vmatprep.mubr.bf16.mxu0 0
        %2311 = vmatmul.mubr.bf16.gmra.mrb[0].mxu0 %v2190
        %v2312 = vpop.f32.mrb[0].mxu0
        %v2313 = vadd.f32 0.0, %v2312
        %v2314 = vpop.f32.mrb[0].mxu0
        %v2315 = vpop.f32.mrb[0].mxu0
        %v2316 = vadd.f32 0.0, %v2315
        %v2317 = vpop.f32.mrb[0].mxu0
        %2318 = vmatprep.mubr.bf16.mxu0 0
        %2319 = vmatmul.mubr.bf16.gmra.mrb[0].mxu0 %v2191
        %v2320 = vpop.f32.mrb[0].mxu0
        %v2321 = vadd.f32 0.0, %v2320
        %v2322 = vpop.f32.mrb[0].mxu0
        %v2323 = vpop.f32.mrb[0].mxu0
        %v2324 = vadd.f32 0.0, %v2323
        %v2325 = vpop.f32.mrb[0].mxu0
        %2326 = vmatprep.mubr.bf16.mxu0 0
        %2327 = vmatmul.mubr.bf16.gmra.mrb[0].mxu0 %v2192
        %v2328 = vpop.f32.mrb[0].mxu0
        %v2329 = vadd.f32 0.0, %v2328
        %v2330 = vpop.f32.mrb[0].mxu0
        %v2331 = vpop.f32.mrb[0].mxu0
        %v2332 = vadd.f32 0.0, %v2331
        %v2333 = vpop.f32.mrb[0].mxu0
        %2334 = vmatprep.mubr.bf16.mxu0 0
        %2335 = vmatmul.mubr.bf16.gmra.mrb[0].mxu0 %v2193
        %v2336 = vpop.f32.mrb[0].mxu0
        %v2337 = vadd.f32 0.0, %v2336
        %v2338 = vpop.f32.mrb[0].mxu0
        %v2339 = vpop.f32.mrb[0].mxu0
        %v2340 = vadd.f32 0.0, %v2339
        %v2341 = vpop.f32.mrb[0].mxu0
        %2342 = vmatprep.mubr.bf16.mxu0 0
        %2343 = vmatmul.mubr.bf16.gmra.mrb[0].mxu0 %v2194
        %v2344 = vpop.f32.mrb[0].mxu0
        %v2345 = vadd.f32 0.0, %v2344
        %v2346 = vpop.f32.mrb[0].mxu0
        %v2347 = vpop.f32.mrb[0].mxu0
        %v2348 = vadd.f32 0.0, %v2347
        %v2349 = vpop.f32.mrb[0].mxu0
        %2350 = vmatprep.mubr.bf16.mxu0 0
        %2351 = vmatmul.mubr.bf16.gmra.mrb[0].mxu0 %v2195
        %v2352 = vpop.f32.mrb[0].mxu0
        %v2353 = vadd.f32 0.0, %v2352
        %v2354 = vpop.f32.mrb[0].mxu0
        %v2355 = vpop.f32.mrb[0].mxu0
        %v2356 = vadd.f32 0.0, %v2355
        %v2357 = vpop.f32.mrb[0].mxu0
        %2358 = vmatprep.mubr.bf16.mxu0 0
        %2359 = vmatmul.mubr.bf16.gmra.mrb[0].mxu0 %v2196
        %v2360 = vpop.f32.mrb[0].mxu0
        %v2361 = vadd.f32 0.0, %v2360
        %v2362 = vpop.f32.mrb[0].mxu0
        %v2363 = vpop.f32.mrb[0].mxu0
        %v2364 = vadd.f32 0.0, %v2363
        %v2365 = vpop.f32.mrb[0].mxu0
        %2366 = vmatprep.mubr.bf16.mxu0 0
        %2367 = vmatmul.mubr.bf16.gmra.mrb[0].mxu0 %v2197
        %v2368 = vpop.f32.mrb[0].mxu0
        %v2369 = vadd.f32 0.0, %v2368
        %v2370 = vpop.f32.mrb[0].mxu0
        %v2371 = vpop.f32.mrb[0].mxu0
        %v2372 = vadd.f32 0.0, %v2371
        %v2373 = vpop.f32.mrb[0].mxu0
        %2374 = vmatprep.mubr.bf16.mxu0 0
        %2375 = vmatmul.mubr.bf16.gmra.mrb[0].mxu0 %v2198
        %v2376 = vpop.f32.mrb[0].mxu0
        %v2377 = vadd.f32 0.0, %v2376
        %v2378 = vpop.f32.mrb[0].mxu0
        %v2379 = vpop.f32.mrb[0].mxu0
        %v2380 = vadd.f32 0.0, %v2379
        %v2381 = vpop.f32.mrb[0].mxu0
        %2382 = vmatprep.mubr.bf16.mxu0 0
        %2383 = vmatmul.mubr.bf16.gmra.mrb[0].mxu0 %v2199
        %v2384 = vpop.f32.mrb[0].mxu0
        %v2385 = vadd.f32 0.0, %v2384
        %v2386 = vpop.f32.mrb[0].mxu0
        %v2387 = vpop.f32.mrb[0].mxu0
        %v2388 = vadd.f32 0.0, %v2387
        %v2389 = vpop.f32.mrb[0].mxu0
        %2390 = vmatprep.mubr.bf16.mxu0 0
        %2391 = vmatmul.mubr.bf16.gmra.mrb[0].mxu0 %v2200
        %v2392 = vpop.f32.mrb[0].mxu0
        %v2393 = vadd.f32 0.0, %v2392
        %v2394 = vpop.f32.mrb[0].mxu0
        %v2395 = vpop.f32.mrb[0].mxu0
        %v2396 = vadd.f32 0.0, %v2395
        %v2397 = vpop.f32.mrb[0].mxu0
        %2398 = vmatprep.mubr.bf16.mxu0 0
        %2399 = vmatmul.mubr.bf16.gmra.mrb[0].mxu0 %v2201
        %v2400 = vpop.f32.mrb[0].mxu0
        %v2401 = vadd.f32 0.0, %v2400
        %v2402 = vpop.f32.mrb[0].mxu0
        %v2403 = vpop.f32.mrb[0].mxu0
        %v2404 = vadd.f32 0.0, %v2403
        %v2405 = vpop.f32.mrb[0].mxu0
        %2406 = vmatprep.mubr.bf16.mxu0 0
        %2407 = vmatmul.mubr.bf16.gmra.mrb[0].mxu0 %v2202
        %v2408 = vpop.f32.mrb[0].mxu0
        %v2409 = vadd.f32 0.0, %v2408
        %v2410 = vpop.f32.mrb[0].mxu0
        %v2411 = vpop.f32.mrb[0].mxu0
        %v2412 = vadd.f32 0.0, %v2411
        %v2413 = vpop.f32.mrb[0].mxu0
        %2414 = vmatprep.mubr.bf16.mxu0 0
        %2415 = vmatmul.mubr.bf16.gmra.mrb[0].mxu0 %v2203
        %v2416 = vpop.f32.mrb[0].mxu0
        %v2417 = vadd.f32 0.0, %v2416
        %v2418 = vpop.f32.mrb[0].mxu0
        %v2419 = vpop.f32.mrb[0].mxu0
        %v2420 = vadd.f32 0.0, %v2419
        %v2421 = vpop.f32.mrb[0].mxu0
        %2422 = vmatprep.mubr.bf16.mxu0 0
        %2423 = vmatmul.mubr.bf16.gmra.mrb[0].mxu0 %v2204
        %v2424 = vpop.f32.mrb[0].mxu0
        %v2425 = vadd.f32 0.0, %v2424
        %v2426 = vpop.f32.mrb[0].mxu0
        %v2427 = vpop.f32.mrb[0].mxu0
        %v2428 = vadd.f32 0.0, %v2427
        %v2429 = vpop.f32.mrb[0].mxu0
        %2430 = vdwg.mxu0
        %v2431 = vadd.f32 %v2125, %v2305
        %v2432 = vadd.f32 %v2126, %v2308
        %v2433 = vadd.f32 %v2127, %v2313
        %v2434 = vadd.f32 %v2128, %v2316
        %v2435 = vadd.f32 %v2129, %v2321
        %v2436 = vadd.f32 %v2130, %v2324
        %v2437 = vadd.f32 %v2131, %v2329
        %v2438 = vadd.f32 %v2132, %v2332
        %v2439 = vadd.f32 %v2133, %v2337
        %v2440 = vadd.f32 %v2134, %v2340
        %v2441 = vadd.f32 %v2135, %v2345
        %v2442 = vadd.f32 %v2136, %v2348
        %v2443 = vadd.f32 %v2137, %v2353
        %v2444 = vadd.f32 %v2138, %v2356
        %v2445 = vadd.f32 %v2139, %v2361
        %v2446 = vadd.f32 %v2140, %v2364
        %v2447 = vadd.f32 %v2141, %v2369
        %v2448 = vadd.f32 %v2142, %v2372
        %v2449 = vadd.f32 %v2143, %v2377
        %v2450 = vadd.f32 %v2144, %v2380
        %v2451 = vadd.f32 %v2145, %v2385
        %v2452 = vadd.f32 %v2146, %v2388
        %v2453 = vadd.f32 %v2147, %v2393
        %v2454 = vadd.f32 %v2148, %v2396
        %v2455 = vadd.f32 %v2149, %v2401
        %v2456 = vadd.f32 %v2150, %v2404
        %v2457 = vadd.f32 %v2151, %v2409
        %v2458 = vadd.f32 %v2152, %v2412
        %v2459 = vadd.f32 %v2153, %v2417
        %v2460 = vadd.f32 %v2154, %v2420
        %v2461 = vadd.f32 %v2155, %v2425
        %v2462 = vadd.f32 %v2156, %v2428
        %s2463 = scalar_lea.vmem [#allocation2], 48
        %v2464 = vld [vmem:[%s2463] sm:$0xff]
        %v2465 = vld [vmem:[%s2463 + $0x8] sm:$0xff]
        %v2466 = vld [vmem:[%s2463 + $0x18] sm:$0xff]
        %v2467 = vld [vmem:[%s2463 + $0x20] sm:$0xff]
        %v2468 = vld [vmem:[%s2463 + $0x30] sm:$0xff]
        %v2469 = vld [vmem:[%s2463 + $0x38] sm:$0xff]
        %v2470 = vld [vmem:[%s2463 + $0x48] sm:$0xff]
        %v2471 = vld [vmem:[%s2463 + $0x50] sm:$0xff]
        %v2472 = vld [vmem:[%s2463 + $0x60] sm:$0xff]
        %v2473 = vld [vmem:[%s2463 + $0x68] sm:$0xff]
        %v2474 = vld [vmem:[%s2463 + $0x78] sm:$0xff]
        %v2475 = vld [vmem:[%s2463 + $0x80] sm:$0xff]
        %v2476 = vld [vmem:[%s2463 + $0x90] sm:$0xff]
        %v2477 = vld [vmem:[%s2463 + $0x98] sm:$0xff]
        %v2478 = vld [vmem:[%s2463 + $0xa8] sm:$0xff]
        %v2479 = vld [vmem:[%s2463 + $0xb0] sm:$0xff]
        %v2480 = vld [vmem:[%s2463 + $0xc0] sm:$0xff]
        %v2481 = vld [vmem:[%s2463 + $0xc8] sm:$0xff]
        %v2482 = vld [vmem:[%s2463 + $0xd8] sm:$0xff]
        %v2483 = vld [vmem:[%s2463 + $0xe0] sm:$0xff]
        %v2484 = vld [vmem:[%s2463 + $0xf0] sm:$0xff]
        %v2485 = vld [vmem:[%s2463 + $0xf8] sm:$0xff]
        %v2486 = vld [vmem:[%s2463 + $0x108] sm:$0xff]
        %v2487 = vld [vmem:[%s2463 + $0x110] sm:$0xff]
        %v2488 = vld [vmem:[%s2463 + $0x120] sm:$0xff]
        %v2489 = vld [vmem:[%s2463 + $0x128] sm:$0xff]
        %v2490 = vld [vmem:[%s2463 + $0x138] sm:$0xff]
        %v2491 = vld [vmem:[%s2463 + $0x140] sm:$0xff]
        %v2492 = vld [vmem:[%s2463 + $0x150] sm:$0xff]
        %v2493 = vld [vmem:[%s2463 + $0x158] sm:$0xff]
        %v2494 = vld [vmem:[%s2463 + $0x168] sm:$0xff]
        %v2495 = vld [vmem:[%s2463 + $0x170] sm:$0xff]
        %v2496 = vpack.c.bf16 %v2465, %v2464
        %v2497 = vpack.c.bf16 %v2467, %v2466
        %v2498 = vpack.c.bf16 %v2469, %v2468
        %v2499 = vpack.c.bf16 %v2471, %v2470
        %v2500 = vpack.c.bf16 %v2473, %v2472
        %v2501 = vpack.c.bf16 %v2475, %v2474
        %v2502 = vpack.c.bf16 %v2477, %v2476
        %v2503 = vpack.c.bf16 %v2479, %v2478
        %v2504 = vpack.c.bf16 %v2481, %v2480
        %v2505 = vpack.c.bf16 %v2483, %v2482
        %v2506 = vpack.c.bf16 %v2485, %v2484
        %v2507 = vpack.c.bf16 %v2487, %v2486
        %v2508 = vpack.c.bf16 %v2489, %v2488
        %v2509 = vpack.c.bf16 %v2491, %v2490
        %v2510 = vpack.c.bf16 %v2493, %v2492
        %v2511 = vpack.c.bf16 %v2495, %v2494
        %s2512 = scalar_lea.vmem [#allocation3], 384
        %v2513 = vld [vmem:[%s2512] sm:$0xf]
        %v2514 = vld [vmem:[%s2512 + $0x4] sm:$0xf]
        %v2515 = vld [vmem:[%s2512 + $0x8] sm:$0xf]
        %v2516 = vld [vmem:[%s2512 + $0xc] sm:$0xf]
        %v2517 = vld [vmem:[%s2512 + $0x10] sm:$0xf]
        %v2518 = vld [vmem:[%s2512 + $0x14] sm:$0xf]
        %v2519 = vld [vmem:[%s2512 + $0x18] sm:$0xf]
        %v2520 = vld [vmem:[%s2512 + $0x1c] sm:$0xf]
        %v2521 = vld [vmem:[%s2512 + $0x20] sm:$0xf]
        %v2522 = vld [vmem:[%s2512 + $0x24] sm:$0xf]
        %v2523 = vld [vmem:[%s2512 + $0x28] sm:$0xf]
        %v2524 = vld [vmem:[%s2512 + $0x2c] sm:$0xf]
        %v2525 = vld [vmem:[%s2512 + $0x30] sm:$0xf]
        %v2526 = vld [vmem:[%s2512 + $0x34] sm:$0xf]
        %v2527 = vld [vmem:[%s2512 + $0x38] sm:$0xf]
        %v2528 = vld [vmem:[%s2512 + $0x3c] sm:$0xf]
        %v2545 = vunpack.c.l.b16 %v2513
        %v2546 = vunpack.c.l.b16 %v2514
        %v2547 = vunpack.c.l.b16 %v2515
        %v2548 = vunpack.c.l.b16 %v2516
        %v2549 = vunpack.c.l.b16 %v2517
        %v2550 = vunpack.c.l.b16 %v2518
        %v2551 = vunpack.c.l.b16 %v2519
        %v2552 = vunpack.c.l.b16 %v2520
        %v2553 = vunpack.c.l.b16 %v2521
        %v2554 = vunpack.c.l.b16 %v2522
        %v2555 = vunpack.c.l.b16 %v2523
        %v2556 = vunpack.c.l.b16 %v2524
        %v2557 = vunpack.c.l.b16 %v2525
        %v2558 = vunpack.c.l.b16 %v2526
        %v2559 = vunpack.c.l.b16 %v2527
        %v2560 = vunpack.c.l.b16 %v2528
        %v2561 = vpack.c.b16 %v2546, %v2545
        %v2562 = vpack.c.b16 %v2548, %v2547
        %v2563 = vpack.c.b16 %v2550, %v2549
        %v2564 = vpack.c.b16 %v2552, %v2551
        %v2565 = vpack.c.b16 %v2554, %v2553
        %v2566 = vpack.c.b16 %v2556, %v2555
        %v2567 = vpack.c.b16 %v2558, %v2557
        %v2568 = vpack.c.b16 %v2560, %v2559
        %2577 = vmatprep.subr.bf16.mxu0 0
        %2578 = vmatpush1.bf16.msra.mxu0 %v2561
        %2579 = vmatprep.subr.bf16.mxu0 0
        %2580 = vmatpush1.bf16.msra.mxu0 %v2562
        %2581 = vmatprep.subr.bf16.mxu0 0
        %2582 = vmatpush1.bf16.msra.mxu0 %v2563
        %2583 = vmatprep.subr.bf16.mxu0 0
        %2584 = vmatpush1.bf16.msra.mxu0 %v2564
        %2585 = vmatprep.subr.bf16.mxu0 0
        %2586 = vmatpush1.bf16.msra.mxu0 %v2565
        %2587 = vmatprep.subr.bf16.mxu0 0
        %2588 = vmatpush1.bf16.msra.mxu0 %v2566
        %2589 = vmatprep.subr.bf16.mxu0 0
        %2590 = vmatpush1.bf16.msra.mxu0 %v2567
        %2591 = vmatprep.subr.bf16.mxu0 0
        %2592 = vmatpush1.bf16.msra.mxu0 %v2568
        %2593 = vmatprep.subr.bf16.mxu0 0
        %2594 = vmatpush1.bf16.msra.mxu0 0
        %2595 = vmatprep.subr.bf16.mxu0 0
        %2596 = vmatpush1.bf16.msra.mxu0 0
        %2597 = vmatprep.subr.bf16.mxu0 0
        %2598 = vmatpush1.bf16.msra.mxu0 0
        %2599 = vmatprep.subr.bf16.mxu0 0
        %2600 = vmatpush1.bf16.msra.mxu0 0
        %2601 = vmatprep.subr.bf16.mxu0 0
        %2602 = vmatpush1.bf16.msra.mxu0 0
        %2603 = vmatprep.subr.bf16.mxu0 0
        %2604 = vmatpush1.bf16.msra.mxu0 0
        %2605 = vmatprep.subr.bf16.mxu0 0
        %2606 = vmatpush1.bf16.msra.mxu0 0
        %2607 = vmatprep.subr.bf16.mxu0 0
        %2608 = vmatpush1.bf16.msra.mxu0 0
        %2609 = vmatprep.mubr.bf16.mxu0 0
        %2610 = vmatmul.mubr.bf16.gmra.mrb[0].mxu0 %v2496
        %v2611 = vpop.f32.mrb[0].mxu0
        %v2612 = vadd.f32 0.0, %v2611
        %v2613 = vpop.f32.mrb[0].mxu0
        %v2614 = vpop.f32.mrb[0].mxu0
        %v2615 = vadd.f32 0.0, %v2614
        %v2616 = vpop.f32.mrb[0].mxu0
        %2617 = vmatprep.mubr.bf16.mxu0 0
        %2618 = vmatmul.mubr.bf16.gmra.mrb[0].mxu0 %v2497
        %v2619 = vpop.f32.mrb[0].mxu0
        %v2620 = vadd.f32 0.0, %v2619
        %v2621 = vpop.f32.mrb[0].mxu0
        %v2622 = vpop.f32.mrb[0].mxu0
        %v2623 = vadd.f32 0.0, %v2622
        %v2624 = vpop.f32.mrb[0].mxu0
        %2625 = vmatprep.mubr.bf16.mxu0 0
        %2626 = vmatmul.mubr.bf16.gmra.mrb[0].mxu0 %v2498
        %v2627 = vpop.f32.mrb[0].mxu0
        %v2628 = vadd.f32 0.0, %v2627
        %v2629 = vpop.f32.mrb[0].mxu0
        %v2630 = vpop.f32.mrb[0].mxu0
        %v2631 = vadd.f32 0.0, %v2630
        %v2632 = vpop.f32.mrb[0].mxu0
        %2633 = vmatprep.mubr.bf16.mxu0 0
        %2634 = vmatmul.mubr.bf16.gmra.mrb[0].mxu0 %v2499
        %v2635 = vpop.f32.mrb[0].mxu0
        %v2636 = vadd.f32 0.0, %v2635
        %v2637 = vpop.f32.mrb[0].mxu0
        %v2638 = vpop.f32.mrb[0].mxu0
        %v2639 = vadd.f32 0.0, %v2638
        %v2640 = vpop.f32.mrb[0].mxu0
        %2641 = vmatprep.mubr.bf16.mxu0 0
        %2642 = vmatmul.mubr.bf16.gmra.mrb[0].mxu0 %v2500
        %v2643 = vpop.f32.mrb[0].mxu0
        %v2644 = vadd.f32 0.0, %v2643
        %v2645 = vpop.f32.mrb[0].mxu0
        %v2646 = vpop.f32.mrb[0].mxu0
        %v2647 = vadd.f32 0.0, %v2646
        %v2648 = vpop.f32.mrb[0].mxu0
        %2649 = vmatprep.mubr.bf16.mxu0 0
        %2650 = vmatmul.mubr.bf16.gmra.mrb[0].mxu0 %v2501
        %v2651 = vpop.f32.mrb[0].mxu0
        %v2652 = vadd.f32 0.0, %v2651
        %v2653 = vpop.f32.mrb[0].mxu0
        %v2654 = vpop.f32.mrb[0].mxu0
        %v2655 = vadd.f32 0.0, %v2654
        %v2656 = vpop.f32.mrb[0].mxu0
        %2657 = vmatprep.mubr.bf16.mxu0 0
        %2658 = vmatmul.mubr.bf16.gmra.mrb[0].mxu0 %v2502
        %v2659 = vpop.f32.mrb[0].mxu0
        %v2660 = vadd.f32 0.0, %v2659
        %v2661 = vpop.f32.mrb[0].mxu0
        %v2662 = vpop.f32.mrb[0].mxu0
        %v2663 = vadd.f32 0.0, %v2662
        %v2664 = vpop.f32.mrb[0].mxu0
        %2665 = vmatprep.mubr.bf16.mxu0 0
        %2666 = vmatmul.mubr.bf16.gmra.mrb[0].mxu0 %v2503
        %v2667 = vpop.f32.mrb[0].mxu0
        %v2668 = vadd.f32 0.0, %v2667
        %v2669 = vpop.f32.mrb[0].mxu0
        %v2670 = vpop.f32.mrb[0].mxu0
        %v2671 = vadd.f32 0.0, %v2670
        %v2672 = vpop.f32.mrb[0].mxu0
        %2673 = vmatprep.mubr.bf16.mxu0 0
        %2674 = vmatmul.mubr.bf16.gmra.mrb[0].mxu0 %v2504
        %v2675 = vpop.f32.mrb[0].mxu0
        %v2676 = vadd.f32 0.0, %v2675
        %v2677 = vpop.f32.mrb[0].mxu0
        %v2678 = vpop.f32.mrb[0].mxu0
        %v2679 = vadd.f32 0.0, %v2678
        %v2680 = vpop.f32.mrb[0].mxu0
        %2681 = vmatprep.mubr.bf16.mxu0 0
        %2682 = vmatmul.mubr.bf16.gmra.mrb[0].mxu0 %v2505
        %v2683 = vpop.f32.mrb[0].mxu0
        %v2684 = vadd.f32 0.0, %v2683
        %v2685 = vpop.f32.mrb[0].mxu0
        %v2686 = vpop.f32.mrb[0].mxu0
        %v2687 = vadd.f32 0.0, %v2686
        %v2688 = vpop.f32.mrb[0].mxu0
        %2689 = vmatprep.mubr.bf16.mxu0 0
        %2690 = vmatmul.mubr.bf16.gmra.mrb[0].mxu0 %v2506
        %v2691 = vpop.f32.mrb[0].mxu0
        %v2692 = vadd.f32 0.0, %v2691
        %v2693 = vpop.f32.mrb[0].mxu0
        %v2694 = vpop.f32.mrb[0].mxu0
        %v2695 = vadd.f32 0.0, %v2694
        %v2696 = vpop.f32.mrb[0].mxu0
        %2697 = vmatprep.mubr.bf16.mxu0 0
        %2698 = vmatmul.mubr.bf16.gmra.mrb[0].mxu0 %v2507
        %v2699 = vpop.f32.mrb[0].mxu0
        %v2700 = vadd.f32 0.0, %v2699
        %v2701 = vpop.f32.mrb[0].mxu0
        %v2702 = vpop.f32.mrb[0].mxu0
        %v2703 = vadd.f32 0.0, %v2702
        %v2704 = vpop.f32.mrb[0].mxu0
        %2705 = vmatprep.mubr.bf16.mxu0 0
        %2706 = vmatmul.mubr.bf16.gmra.mrb[0].mxu0 %v2508
        %v2707 = vpop.f32.mrb[0].mxu0
        %v2708 = vadd.f32 0.0, %v2707
        %v2709 = vpop.f32.mrb[0].mxu0
        %v2710 = vpop.f32.mrb[0].mxu0
        %v2711 = vadd.f32 0.0, %v2710
        %v2712 = vpop.f32.mrb[0].mxu0
        %2713 = vmatprep.mubr.bf16.mxu0 0
        %2714 = vmatmul.mubr.bf16.gmra.mrb[0].mxu0 %v2509
        %v2715 = vpop.f32.mrb[0].mxu0
        %v2716 = vadd.f32 0.0, %v2715
        %v2717 = vpop.f32.mrb[0].mxu0
        %v2718 = vpop.f32.mrb[0].mxu0
        %v2719 = vadd.f32 0.0, %v2718
        %v2720 = vpop.f32.mrb[0].mxu0
        %2721 = vmatprep.mubr.bf16.mxu0 0
        %2722 = vmatmul.mubr.bf16.gmra.mrb[0].mxu0 %v2510
        %v2723 = vpop.f32.mrb[0].mxu0
        %v2724 = vadd.f32 0.0, %v2723
        %v2725 = vpop.f32.mrb[0].mxu0
        %v2726 = vpop.f32.mrb[0].mxu0
        %v2727 = vadd.f32 0.0, %v2726
        %v2728 = vpop.f32.mrb[0].mxu0
        %2729 = vmatprep.mubr.bf16.mxu0 0
        %2730 = vmatmul.mubr.bf16.gmra.mrb[0].mxu0 %v2511
        %v2731 = vpop.f32.mrb[0].mxu0
        %v2732 = vadd.f32 0.0, %v2731
        %v2733 = vpop.f32.mrb[0].mxu0
        %v2734 = vpop.f32.mrb[0].mxu0
        %v2735 = vadd.f32 0.0, %v2734
        %v2736 = vpop.f32.mrb[0].mxu0
        %2737 = vdwg.mxu0
        %v2738 = vadd.f32 %v2431, %v2612
        %v2739 = vadd.f32 %v2432, %v2615
        %v2740 = vadd.f32 %v2433, %v2620
        %v2741 = vadd.f32 %v2434, %v2623
        %v2742 = vadd.f32 %v2435, %v2628
        %v2743 = vadd.f32 %v2436, %v2631
        %v2744 = vadd.f32 %v2437, %v2636
        %v2745 = vadd.f32 %v2438, %v2639
        %v2746 = vadd.f32 %v2439, %v2644
        %v2747 = vadd.f32 %v2440, %v2647
        %v2748 = vadd.f32 %v2441, %v2652
        %v2749 = vadd.f32 %v2442, %v2655
        %v2750 = vadd.f32 %v2443, %v2660
        %v2751 = vadd.f32 %v2444, %v2663
        %v2752 = vadd.f32 %v2445, %v2668
        %v2753 = vadd.f32 %v2446, %v2671
        %v2754 = vadd.f32 %v2447, %v2676
        %v2755 = vadd.f32 %v2448, %v2679
        %v2756 = vadd.f32 %v2449, %v2684
        %v2757 = vadd.f32 %v2450, %v2687
        %v2758 = vadd.f32 %v2451, %v2692
        %v2759 = vadd.f32 %v2452, %v2695
        %v2760 = vadd.f32 %v2453, %v2700
        %v2761 = vadd.f32 %v2454, %v2703
        %v2762 = vadd.f32 %v2455, %v2708
        %v2763 = vadd.f32 %v2456, %v2711
        %v2764 = vadd.f32 %v2457, %v2716
        %v2765 = vadd.f32 %v2458, %v2719
        %v2766 = vadd.f32 %v2459, %v2724
        %v2767 = vadd.f32 %v2460, %v2727
        %v2768 = vadd.f32 %v2461, %v2732
        %v2769 = vadd.f32 %v2462, %v2735
        %v2770 = vld [vmem:[%s2463 + $0x1] sm:$0xff]
        %v2771 = vld [vmem:[%s2463 + $0x9] sm:$0xff]
        %v2772 = vld [vmem:[%s2463 + $0x19] sm:$0xff]
        %v2773 = vld [vmem:[%s2463 + $0x21] sm:$0xff]
        %v2774 = vld [vmem:[%s2463 + $0x31] sm:$0xff]
        %v2775 = vld [vmem:[%s2463 + $0x39] sm:$0xff]
        %v2776 = vld [vmem:[%s2463 + $0x49] sm:$0xff]
        %v2777 = vld [vmem:[%s2463 + $0x51] sm:$0xff]
        %v2778 = vld [vmem:[%s2463 + $0x61] sm:$0xff]
        %v2779 = vld [vmem:[%s2463 + $0x69] sm:$0xff]
        %v2780 = vld [vmem:[%s2463 + $0x79] sm:$0xff]
        %v2781 = vld [vmem:[%s2463 + $0x81] sm:$0xff]
        %v2782 = vld [vmem:[%s2463 + $0x91] sm:$0xff]
        %v2783 = vld [vmem:[%s2463 + $0x99] sm:$0xff]
        %v2784 = vld [vmem:[%s2463 + $0xa9] sm:$0xff]
        %v2785 = vld [vmem:[%s2463 + $0xb1] sm:$0xff]
        %v2786 = vld [vmem:[%s2463 + $0xc1] sm:$0xff]
        %v2787 = vld [vmem:[%s2463 + $0xc9] sm:$0xff]
        %v2788 = vld [vmem:[%s2463 + $0xd9] sm:$0xff]
        %v2789 = vld [vmem:[%s2463 + $0xe1] sm:$0xff]
        %v2790 = vld [vmem:[%s2463 + $0xf1] sm:$0xff]
        %v2791 = vld [vmem:[%s2463 + $0xf9] sm:$0xff]
        %v2792 = vld [vmem:[%s2463 + $0x109] sm:$0xff]
        %v2793 = vld [vmem:[%s2463 + $0x111] sm:$0xff]
        %v2794 = vld [vmem:[%s2463 + $0x121] sm:$0xff]
        %v2795 = vld [vmem:[%s2463 + $0x129] sm:$0xff]
        %v2796 = vld [vmem:[%s2463 + $0x139] sm:$0xff]
        %v2797 = vld [vmem:[%s2463 + $0x141] sm:$0xff]
        %v2798 = vld [vmem:[%s2463 + $0x151] sm:$0xff]
        %v2799 = vld [vmem:[%s2463 + $0x159] sm:$0xff]
        %v2800 = vld [vmem:[%s2463 + $0x169] sm:$0xff]
        %v2801 = vld [vmem:[%s2463 + $0x171] sm:$0xff]
        %v2802 = vpack.c.bf16 %v2771, %v2770
        %v2803 = vpack.c.bf16 %v2773, %v2772
        %v2804 = vpack.c.bf16 %v2775, %v2774
        %v2805 = vpack.c.bf16 %v2777, %v2776
        %v2806 = vpack.c.bf16 %v2779, %v2778
        %v2807 = vpack.c.bf16 %v2781, %v2780
        %v2808 = vpack.c.bf16 %v2783, %v2782
        %v2809 = vpack.c.bf16 %v2785, %v2784
        %v2810 = vpack.c.bf16 %v2787, %v2786
        %v2811 = vpack.c.bf16 %v2789, %v2788
        %v2812 = vpack.c.bf16 %v2791, %v2790
        %v2813 = vpack.c.bf16 %v2793, %v2792
        %v2814 = vpack.c.bf16 %v2795, %v2794
        %v2815 = vpack.c.bf16 %v2797, %v2796
        %v2816 = vpack.c.bf16 %v2799, %v2798
        %v2817 = vpack.c.bf16 %v2801, %v2800
        %s2818 = scalar_lea.vmem [#allocation3], 448
        %v2819 = vld [vmem:[%s2818] sm:$0xf]
        %v2820 = vld [vmem:[%s2818 + $0x4] sm:$0xf]
        %v2821 = vld [vmem:[%s2818 + $0x8] sm:$0xf]
        %v2822 = vld [vmem:[%s2818 + $0xc] sm:$0xf]
        %v2823 = vld [vmem:[%s2818 + $0x10] sm:$0xf]
        %v2824 = vld [vmem:[%s2818 + $0x14] sm:$0xf]
        %v2825 = vld [vmem:[%s2818 + $0x18] sm:$0xf]
        %v2826 = vld [vmem:[%s2818 + $0x1c] sm:$0xf]
        %v2827 = vld [vmem:[%s2818 + $0x20] sm:$0xf]
        %v2828 = vld [vmem:[%s2818 + $0x24] sm:$0xf]
        %v2829 = vld [vmem:[%s2818 + $0x28] sm:$0xf]
        %v2830 = vld [vmem:[%s2818 + $0x2c] sm:$0xf]
        %v2831 = vld [vmem:[%s2818 + $0x30] sm:$0xf]
        %v2832 = vld [vmem:[%s2818 + $0x34] sm:$0xf]
        %v2833 = vld [vmem:[%s2818 + $0x38] sm:$0xf]
        %v2834 = vld [vmem:[%s2818 + $0x3c] sm:$0xf]
        %v2851 = vunpack.c.l.b16 %v2819
        %v2852 = vunpack.c.l.b16 %v2820
        %v2853 = vunpack.c.l.b16 %v2821
        %v2854 = vunpack.c.l.b16 %v2822
        %v2855 = vunpack.c.l.b16 %v2823
        %v2856 = vunpack.c.l.b16 %v2824
        %v2857 = vunpack.c.l.b16 %v2825
        %v2858 = vunpack.c.l.b16 %v2826
        %v2859 = vunpack.c.l.b16 %v2827
        %v2860 = vunpack.c.l.b16 %v2828
        %v2861 = vunpack.c.l.b16 %v2829
        %v2862 = vunpack.c.l.b16 %v2830
        %v2863 = vunpack.c.l.b16 %v2831
        %v2864 = vunpack.c.l.b16 %v2832
        %v2865 = vunpack.c.l.b16 %v2833
        %v2866 = vunpack.c.l.b16 %v2834
        %v2867 = vpack.c.b16 %v2852, %v2851
        %v2868 = vpack.c.b16 %v2854, %v2853
        %v2869 = vpack.c.b16 %v2856, %v2855
        %v2870 = vpack.c.b16 %v2858, %v2857
        %v2871 = vpack.c.b16 %v2860, %v2859
        %v2872 = vpack.c.b16 %v2862, %v2861
        %v2873 = vpack.c.b16 %v2864, %v2863
        %v2874 = vpack.c.b16 %v2866, %v2865
        %2883 = vmatprep.subr.bf16.mxu0 0
        %2884 = vmatpush1.bf16.msra.mxu0 %v2867
        %2885 = vmatprep.subr.bf16.mxu0 0
        %2886 = vmatpush1.bf16.msra.mxu0 %v2868
        %2887 = vmatprep.subr.bf16.mxu0 0
        %2888 = vmatpush1.bf16.msra.mxu0 %v2869
        %2889 = vmatprep.subr.bf16.mxu0 0
        %2890 = vmatpush1.bf16.msra.mxu0 %v2870
        %2891 = vmatprep.subr.bf16.mxu0 0
        %2892 = vmatpush1.bf16.msra.mxu0 %v2871
        %2893 = vmatprep.subr.bf16.mxu0 0
        %2894 = vmatpush1.bf16.msra.mxu0 %v2872
        %2895 = vmatprep.subr.bf16.mxu0 0
        %2896 = vmatpush1.bf16.msra.mxu0 %v2873
        %2897 = vmatprep.subr.bf16.mxu0 0
        %2898 = vmatpush1.bf16.msra.mxu0 %v2874
        %2899 = vmatprep.subr.bf16.mxu0 0
        %2900 = vmatpush1.bf16.msra.mxu0 0
        %2901 = vmatprep.subr.bf16.mxu0 0
        %2902 = vmatpush1.bf16.msra.mxu0 0
        %2903 = vmatprep.subr.bf16.mxu0 0
        %2904 = vmatpush1.bf16.msra.mxu0 0
        %2905 = vmatprep.subr.bf16.mxu0 0
        %2906 = vmatpush1.bf16.msra.mxu0 0
        %2907 = vmatprep.subr.bf16.mxu0 0
        %2908 = vmatpush1.bf16.msra.mxu0 0
        %2909 = vmatprep.subr.bf16.mxu0 0
        %2910 = vmatpush1.bf16.msra.mxu0 0
        %2911 = vmatprep.subr.bf16.mxu0 0
        %2912 = vmatpush1.bf16.msra.mxu0 0
        %2913 = vmatprep.subr.bf16.mxu0 0
        %2914 = vmatpush1.bf16.msra.mxu0 0
        %2915 = vmatprep.mubr.bf16.mxu0 0
        %2916 = vmatmul.mubr.bf16.gmra.mrb[0].mxu0 %v2802
        %v2917 = vpop.f32.mrb[0].mxu0
        %v2918 = vadd.f32 0.0, %v2917
        %v2919 = vpop.f32.mrb[0].mxu0
        %v2920 = vpop.f32.mrb[0].mxu0
        %v2921 = vadd.f32 0.0, %v2920
        %v2922 = vpop.f32.mrb[0].mxu0
        %2923 = vmatprep.mubr.bf16.mxu0 0
        %2924 = vmatmul.mubr.bf16.gmra.mrb[0].mxu0 %v2803
        %v2925 = vpop.f32.mrb[0].mxu0
        %v2926 = vadd.f32 0.0, %v2925
        %v2927 = vpop.f32.mrb[0].mxu0
        %v2928 = vpop.f32.mrb[0].mxu0
        %v2929 = vadd.f32 0.0, %v2928
        %v2930 = vpop.f32.mrb[0].mxu0
        %2931 = vmatprep.mubr.bf16.mxu0 0
        %2932 = vmatmul.mubr.bf16.gmra.mrb[0].mxu0 %v2804
        %v2933 = vpop.f32.mrb[0].mxu0
        %v2934 = vadd.f32 0.0, %v2933
        %v2935 = vpop.f32.mrb[0].mxu0
        %v2936 = vpop.f32.mrb[0].mxu0
        %v2937 = vadd.f32 0.0, %v2936
        %v2938 = vpop.f32.mrb[0].mxu0
        %2939 = vmatprep.mubr.bf16.mxu0 0
        %2940 = vmatmul.mubr.bf16.gmra.mrb[0].mxu0 %v2805
        %v2941 = vpop.f32.mrb[0].mxu0
        %v2942 = vadd.f32 0.0, %v2941
        %v2943 = vpop.f32.mrb[0].mxu0
        %v2944 = vpop.f32.mrb[0].mxu0
        %v2945 = vadd.f32 0.0, %v2944
        %v2946 = vpop.f32.mrb[0].mxu0
        %2947 = vmatprep.mubr.bf16.mxu0 0
        %2948 = vmatmul.mubr.bf16.gmra.mrb[0].mxu0 %v2806
        %v2949 = vpop.f32.mrb[0].mxu0
        %v2950 = vadd.f32 0.0, %v2949
        %v2951 = vpop.f32.mrb[0].mxu0
        %v2952 = vpop.f32.mrb[0].mxu0
        %v2953 = vadd.f32 0.0, %v2952
        %v2954 = vpop.f32.mrb[0].mxu0
        %2955 = vmatprep.mubr.bf16.mxu0 0
        %2956 = vmatmul.mubr.bf16.gmra.mrb[0].mxu0 %v2807
        %v2957 = vpop.f32.mrb[0].mxu0
        %v2958 = vadd.f32 0.0, %v2957
        %v2959 = vpop.f32.mrb[0].mxu0
        %v2960 = vpop.f32.mrb[0].mxu0
        %v2961 = vadd.f32 0.0, %v2960
        %v2962 = vpop.f32.mrb[0].mxu0
        %2963 = vmatprep.mubr.bf16.mxu0 0
        %2964 = vmatmul.mubr.bf16.gmra.mrb[0].mxu0 %v2808
        %v2965 = vpop.f32.mrb[0].mxu0
        %v2966 = vadd.f32 0.0, %v2965
        %v2967 = vpop.f32.mrb[0].mxu0
        %v2968 = vpop.f32.mrb[0].mxu0
        %v2969 = vadd.f32 0.0, %v2968
        %v2970 = vpop.f32.mrb[0].mxu0
        %2971 = vmatprep.mubr.bf16.mxu0 0
        %2972 = vmatmul.mubr.bf16.gmra.mrb[0].mxu0 %v2809
        %v2973 = vpop.f32.mrb[0].mxu0
        %v2974 = vadd.f32 0.0, %v2973
        %v2975 = vpop.f32.mrb[0].mxu0
        %v2976 = vpop.f32.mrb[0].mxu0
        %v2977 = vadd.f32 0.0, %v2976
        %v2978 = vpop.f32.mrb[0].mxu0
        %2979 = vmatprep.mubr.bf16.mxu0 0
        %2980 = vmatmul.mubr.bf16.gmra.mrb[0].mxu0 %v2810
        %v2981 = vpop.f32.mrb[0].mxu0
        %v2982 = vadd.f32 0.0, %v2981
        %v2983 = vpop.f32.mrb[0].mxu0
        %v2984 = vpop.f32.mrb[0].mxu0
        %v2985 = vadd.f32 0.0, %v2984
        %v2986 = vpop.f32.mrb[0].mxu0
        %2987 = vmatprep.mubr.bf16.mxu0 0
        %2988 = vmatmul.mubr.bf16.gmra.mrb[0].mxu0 %v2811
        %v2989 = vpop.f32.mrb[0].mxu0
        %v2990 = vadd.f32 0.0, %v2989
        %v2991 = vpop.f32.mrb[0].mxu0
        %v2992 = vpop.f32.mrb[0].mxu0
        %v2993 = vadd.f32 0.0, %v2992
        %v2994 = vpop.f32.mrb[0].mxu0
        %2995 = vmatprep.mubr.bf16.mxu0 0
        %2996 = vmatmul.mubr.bf16.gmra.mrb[0].mxu0 %v2812
        %v2997 = vpop.f32.mrb[0].mxu0
        %v2998 = vadd.f32 0.0, %v2997
        %v2999 = vpop.f32.mrb[0].mxu0
        %v3000 = vpop.f32.mrb[0].mxu0
        %v3001 = vadd.f32 0.0, %v3000
        %v3002 = vpop.f32.mrb[0].mxu0
        %3003 = vmatprep.mubr.bf16.mxu0 0
        %3004 = vmatmul.mubr.bf16.gmra.mrb[0].mxu0 %v2813
        %v3005 = vpop.f32.mrb[0].mxu0
        %v3006 = vadd.f32 0.0, %v3005
        %v3007 = vpop.f32.mrb[0].mxu0
        %v3008 = vpop.f32.mrb[0].mxu0
        %v3009 = vadd.f32 0.0, %v3008
        %v3010 = vpop.f32.mrb[0].mxu0
        %3011 = vmatprep.mubr.bf16.mxu0 0
        %3012 = vmatmul.mubr.bf16.gmra.mrb[0].mxu0 %v2814
        %v3013 = vpop.f32.mrb[0].mxu0
        %v3014 = vadd.f32 0.0, %v3013
        %v3015 = vpop.f32.mrb[0].mxu0
        %v3016 = vpop.f32.mrb[0].mxu0
        %v3017 = vadd.f32 0.0, %v3016
        %v3018 = vpop.f32.mrb[0].mxu0
        %3019 = vmatprep.mubr.bf16.mxu0 0
        %3020 = vmatmul.mubr.bf16.gmra.mrb[0].mxu0 %v2815
        %v3021 = vpop.f32.mrb[0].mxu0
        %v3022 = vadd.f32 0.0, %v3021
        %v3023 = vpop.f32.mrb[0].mxu0
        %v3024 = vpop.f32.mrb[0].mxu0
        %v3025 = vadd.f32 0.0, %v3024
        %v3026 = vpop.f32.mrb[0].mxu0
        %3027 = vmatprep.mubr.bf16.mxu0 0
        %3028 = vmatmul.mubr.bf16.gmra.mrb[0].mxu0 %v2816
        %v3029 = vpop.f32.mrb[0].mxu0
        %v3030 = vadd.f32 0.0, %v3029
        %v3031 = vpop.f32.mrb[0].mxu0
        %v3032 = vpop.f32.mrb[0].mxu0
        %v3033 = vadd.f32 0.0, %v3032
        %v3034 = vpop.f32.mrb[0].mxu0
        %3035 = vmatprep.mubr.bf16.mxu0 0
        %3036 = vmatmul.mubr.bf16.gmra.mrb[0].mxu0 %v2817
        %v3037 = vpop.f32.mrb[0].mxu0
        %v3038 = vadd.f32 0.0, %v3037
        %v3039 = vpop.f32.mrb[0].mxu0
        %v3040 = vpop.f32.mrb[0].mxu0
        %v3041 = vadd.f32 0.0, %v3040
        %v3042 = vpop.f32.mrb[0].mxu0
        %3043 = vdwg.mxu0
        %v3044 = vadd.f32 %v2738, %v2918
        %v3045 = vadd.f32 %v2739, %v2921
        %v3046 = vadd.f32 %v2740, %v2926
        %v3047 = vadd.f32 %v2741, %v2929
        %v3048 = vadd.f32 %v2742, %v2934
        %v3049 = vadd.f32 %v2743, %v2937
        %v3050 = vadd.f32 %v2744, %v2942
        %v3051 = vadd.f32 %v2745, %v2945
        %v3052 = vadd.f32 %v2746, %v2950
        %v3053 = vadd.f32 %v2747, %v2953
        %v3054 = vadd.f32 %v2748, %v2958
        %v3055 = vadd.f32 %v2749, %v2961
        %v3056 = vadd.f32 %v2750, %v2966
        %v3057 = vadd.f32 %v2751, %v2969
        %v3058 = vadd.f32 %v2752, %v2974
        %v3059 = vadd.f32 %v2753, %v2977
        %v3060 = vadd.f32 %v2754, %v2982
        %v3061 = vadd.f32 %v2755, %v2985
        %v3062 = vadd.f32 %v2756, %v2990
        %v3063 = vadd.f32 %v2757, %v2993
        %v3064 = vadd.f32 %v2758, %v2998
        %v3065 = vadd.f32 %v2759, %v3001
        %v3066 = vadd.f32 %v2760, %v3006
        %v3067 = vadd.f32 %v2761, %v3009
        %v3068 = vadd.f32 %v2762, %v3014
        %v3069 = vadd.f32 %v2763, %v3017
        %v3070 = vadd.f32 %v2764, %v3022
        %v3071 = vadd.f32 %v2765, %v3025
        %v3072 = vadd.f32 %v2766, %v3030
        %v3073 = vadd.f32 %v2767, %v3033
        %v3074 = vadd.f32 %v2768, %v3038
        %v3075 = vadd.f32 %v2769, %v3041
        %v3076 = vld [vmem:[%s2463 + $0x2] sm:$0xff]
        %v3077 = vld [vmem:[%s2463 + $0xa] sm:$0xff]
        %v3078 = vld [vmem:[%s2463 + $0x1a] sm:$0xff]
        %v3079 = vld [vmem:[%s2463 + $0x22] sm:$0xff]
        %v3080 = vld [vmem:[%s2463 + $0x32] sm:$0xff]
        %v3081 = vld [vmem:[%s2463 + $0x3a] sm:$0xff]
        %v3082 = vld [vmem:[%s2463 + $0x4a] sm:$0xff]
        %v3083 = vld [vmem:[%s2463 + $0x52] sm:$0xff]
        %v3084 = vld [vmem:[%s2463 + $0x62] sm:$0xff]
        %v3085 = vld [vmem:[%s2463 + $0x6a] sm:$0xff]
        %v3086 = vld [vmem:[%s2463 + $0x7a] sm:$0xff]
        %v3087 = vld [vmem:[%s2463 + $0x82] sm:$0xff]
        %v3088 = vld [vmem:[%s2463 + $0x92] sm:$0xff]
        %v3089 = vld [vmem:[%s2463 + $0x9a] sm:$0xff]
        %v3090 = vld [vmem:[%s2463 + $0xaa] sm:$0xff]
        %v3091 = vld [vmem:[%s2463 + $0xb2] sm:$0xff]
        %v3092 = vld [vmem:[%s2463 + $0xc2] sm:$0xff]
        %v3093 = vld [vmem:[%s2463 + $0xca] sm:$0xff]
        %v3094 = vld [vmem:[%s2463 + $0xda] sm:$0xff]
        %v3095 = vld [vmem:[%s2463 + $0xe2] sm:$0xff]
        %v3096 = vld [vmem:[%s2463 + $0xf2] sm:$0xff]
        %v3097 = vld [vmem:[%s2463 + $0xfa] sm:$0xff]
        %v3098 = vld [vmem:[%s2463 + $0x10a] sm:$0xff]
        %v3099 = vld [vmem:[%s2463 + $0x112] sm:$0xff]
        %v3100 = vld [vmem:[%s2463 + $0x122] sm:$0xff]
        %v3101 = vld [vmem:[%s2463 + $0x12a] sm:$0xff]
        %v3102 = vld [vmem:[%s2463 + $0x13a] sm:$0xff]
        %v3103 = vld [vmem:[%s2463 + $0x142] sm:$0xff]
        %v3104 = vld [vmem:[%s2463 + $0x152] sm:$0xff]
        %v3105 = vld [vmem:[%s2463 + $0x15a] sm:$0xff]
        %v3106 = vld [vmem:[%s2463 + $0x16a] sm:$0xff]
        %v3107 = vld [vmem:[%s2463 + $0x172] sm:$0xff]
        %v3108 = vpack.c.bf16 %v3077, %v3076
        %v3109 = vpack.c.bf16 %v3079, %v3078
        %v3110 = vpack.c.bf16 %v3081, %v3080
        %v3111 = vpack.c.bf16 %v3083, %v3082
        %v3112 = vpack.c.bf16 %v3085, %v3084
        %v3113 = vpack.c.bf16 %v3087, %v3086
        %v3114 = vpack.c.bf16 %v3089, %v3088
        %v3115 = vpack.c.bf16 %v3091, %v3090
        %v3116 = vpack.c.bf16 %v3093, %v3092
        %v3117 = vpack.c.bf16 %v3095, %v3094
        %v3118 = vpack.c.bf16 %v3097, %v3096
        %v3119 = vpack.c.bf16 %v3099, %v3098
        %v3120 = vpack.c.bf16 %v3101, %v3100
        %v3121 = vpack.c.bf16 %v3103, %v3102
        %v3122 = vpack.c.bf16 %v3105, %v3104
        %v3123 = vpack.c.bf16 %v3107, %v3106
        %s3124 = scalar_lea.vmem [#allocation3], 512
        %v3125 = vld [vmem:[%s3124] sm:$0xf]
        %v3126 = vld [vmem:[%s3124 + $0x4] sm:$0xf]
        %v3127 = vld [vmem:[%s3124 + $0x8] sm:$0xf]
        %v3128 = vld [vmem:[%s3124 + $0xc] sm:$0xf]
        %v3129 = vld [vmem:[%s3124 + $0x10] sm:$0xf]
        %v3130 = vld [vmem:[%s3124 + $0x14] sm:$0xf]
        %v3131 = vld [vmem:[%s3124 + $0x18] sm:$0xf]
        %v3132 = vld [vmem:[%s3124 + $0x1c] sm:$0xf]
        %v3133 = vld [vmem:[%s3124 + $0x20] sm:$0xf]
        %v3134 = vld [vmem:[%s3124 + $0x24] sm:$0xf]
        %v3135 = vld [vmem:[%s3124 + $0x28] sm:$0xf]
        %v3136 = vld [vmem:[%s3124 + $0x2c] sm:$0xf]
        %v3137 = vld [vmem:[%s3124 + $0x30] sm:$0xf]
        %v3138 = vld [vmem:[%s3124 + $0x34] sm:$0xf]
        %v3139 = vld [vmem:[%s3124 + $0x38] sm:$0xf]
        %v3140 = vld [vmem:[%s3124 + $0x3c] sm:$0xf]
        %v3157 = vunpack.c.l.b16 %v3125
        %v3158 = vunpack.c.l.b16 %v3126
        %v3159 = vunpack.c.l.b16 %v3127
        %v3160 = vunpack.c.l.b16 %v3128
        %v3161 = vunpack.c.l.b16 %v3129
        %v3162 = vunpack.c.l.b16 %v3130
        %v3163 = vunpack.c.l.b16 %v3131
        %v3164 = vunpack.c.l.b16 %v3132
        %v3165 = vunpack.c.l.b16 %v3133
        %v3166 = vunpack.c.l.b16 %v3134
        %v3167 = vunpack.c.l.b16 %v3135
        %v3168 = vunpack.c.l.b16 %v3136
        %v3169 = vunpack.c.l.b16 %v3137
        %v3170 = vunpack.c.l.b16 %v3138
        %v3171 = vunpack.c.l.b16 %v3139
        %v3172 = vunpack.c.l.b16 %v3140
        %v3173 = vpack.c.b16 %v3158, %v3157
        %v3174 = vpack.c.b16 %v3160, %v3159
        %v3175 = vpack.c.b16 %v3162, %v3161
        %v3176 = vpack.c.b16 %v3164, %v3163
        %v3177 = vpack.c.b16 %v3166, %v3165
        %v3178 = vpack.c.b16 %v3168, %v3167
        %v3179 = vpack.c.b16 %v3170, %v3169
        %v3180 = vpack.c.b16 %v3172, %v3171
        %3189 = vmatprep.subr.bf16.mxu0 0
        %3190 = vmatpush1.bf16.msra.mxu0 %v3173
        %3191 = vmatprep.subr.bf16.mxu0 0
        %3192 = vmatpush1.bf16.msra.mxu0 %v3174
        %3193 = vmatprep.subr.bf16.mxu0 0
        %3194 = vmatpush1.bf16.msra.mxu0 %v3175
        %3195 = vmatprep.subr.bf16.mxu0 0
        %3196 = vmatpush1.bf16.msra.mxu0 %v3176
        %3197 = vmatprep.subr.bf16.mxu0 0
        %3198 = vmatpush1.bf16.msra.mxu0 %v3177
        %3199 = vmatprep.subr.bf16.mxu0 0
        %3200 = vmatpush1.bf16.msra.mxu0 %v3178
        %3201 = vmatprep.subr.bf16.mxu0 0
        %3202 = vmatpush1.bf16.msra.mxu0 %v3179
        %3203 = vmatprep.subr.bf16.mxu0 0
        %3204 = vmatpush1.bf16.msra.mxu0 %v3180
        %3205 = vmatprep.subr.bf16.mxu0 0
        %3206 = vmatpush1.bf16.msra.mxu0 0
        %3207 = vmatprep.subr.bf16.mxu0 0
        %3208 = vmatpush1.bf16.msra.mxu0 0
        %3209 = vmatprep.subr.bf16.mxu0 0
        %3210 = vmatpush1.bf16.msra.mxu0 0
        %3211 = vmatprep.subr.bf16.mxu0 0
        %3212 = vmatpush1.bf16.msra.mxu0 0
        %3213 = vmatprep.subr.bf16.mxu0 0
        %3214 = vmatpush1.bf16.msra.mxu0 0
        %3215 = vmatprep.subr.bf16.mxu0 0
        %3216 = vmatpush1.bf16.msra.mxu0 0
        %3217 = vmatprep.subr.bf16.mxu0 0
        %3218 = vmatpush1.bf16.msra.mxu0 0
        %3219 = vmatprep.subr.bf16.mxu0 0
        %3220 = vmatpush1.bf16.msra.mxu0 0
        %3221 = vmatprep.mubr.bf16.mxu0 0
        %3222 = vmatmul.mubr.bf16.gmra.mrb[0].mxu0 %v3108
        %v3223 = vpop.f32.mrb[0].mxu0
        %v3224 = vadd.f32 0.0, %v3223
        %v3225 = vpop.f32.mrb[0].mxu0
        %v3226 = vpop.f32.mrb[0].mxu0
        %v3227 = vadd.f32 0.0, %v3226
        %v3228 = vpop.f32.mrb[0].mxu0
        %3229 = vmatprep.mubr.bf16.mxu0 0
        %3230 = vmatmul.mubr.bf16.gmra.mrb[0].mxu0 %v3109
        %v3231 = vpop.f32.mrb[0].mxu0
        %v3232 = vadd.f32 0.0, %v3231
        %v3233 = vpop.f32.mrb[0].mxu0
        %v3234 = vpop.f32.mrb[0].mxu0
        %v3235 = vadd.f32 0.0, %v3234
        %v3236 = vpop.f32.mrb[0].mxu0
        %3237 = vmatprep.mubr.bf16.mxu0 0
        %3238 = vmatmul.mubr.bf16.gmra.mrb[0].mxu0 %v3110
        %v3239 = vpop.f32.mrb[0].mxu0
        %v3240 = vadd.f32 0.0, %v3239
        %v3241 = vpop.f32.mrb[0].mxu0
        %v3242 = vpop.f32.mrb[0].mxu0
        %v3243 = vadd.f32 0.0, %v3242
        %v3244 = vpop.f32.mrb[0].mxu0
        %3245 = vmatprep.mubr.bf16.mxu0 0
        %3246 = vmatmul.mubr.bf16.gmra.mrb[0].mxu0 %v3111
        %v3247 = vpop.f32.mrb[0].mxu0
        %v3248 = vadd.f32 0.0, %v3247
        %v3249 = vpop.f32.mrb[0].mxu0
        %v3250 = vpop.f32.mrb[0].mxu0
        %v3251 = vadd.f32 0.0, %v3250
        %v3252 = vpop.f32.mrb[0].mxu0
        %3253 = vmatprep.mubr.bf16.mxu0 0
        %3254 = vmatmul.mubr.bf16.gmra.mrb[0].mxu0 %v3112
        %v3255 = vpop.f32.mrb[0].mxu0
        %v3256 = vadd.f32 0.0, %v3255
        %v3257 = vpop.f32.mrb[0].mxu0
        %v3258 = vpop.f32.mrb[0].mxu0
        %v3259 = vadd.f32 0.0, %v3258
        %v3260 = vpop.f32.mrb[0].mxu0
        %3261 = vmatprep.mubr.bf16.mxu0 0
        %3262 = vmatmul.mubr.bf16.gmra.mrb[0].mxu0 %v3113
        %v3263 = vpop.f32.mrb[0].mxu0
        %v3264 = vadd.f32 0.0, %v3263
        %v3265 = vpop.f32.mrb[0].mxu0
        %v3266 = vpop.f32.mrb[0].mxu0
        %v3267 = vadd.f32 0.0, %v3266
        %v3268 = vpop.f32.mrb[0].mxu0
        %3269 = vmatprep.mubr.bf16.mxu0 0
        %3270 = vmatmul.mubr.bf16.gmra.mrb[0].mxu0 %v3114
        %v3271 = vpop.f32.mrb[0].mxu0
        %v3272 = vadd.f32 0.0, %v3271
        %v3273 = vpop.f32.mrb[0].mxu0
        %v3274 = vpop.f32.mrb[0].mxu0
        %v3275 = vadd.f32 0.0, %v3274
        %v3276 = vpop.f32.mrb[0].mxu0
        %3277 = vmatprep.mubr.bf16.mxu0 0
        %3278 = vmatmul.mubr.bf16.gmra.mrb[0].mxu0 %v3115
        %v3279 = vpop.f32.mrb[0].mxu0
        %v3280 = vadd.f32 0.0, %v3279
        %v3281 = vpop.f32.mrb[0].mxu0
        %v3282 = vpop.f32.mrb[0].mxu0
        %v3283 = vadd.f32 0.0, %v3282
        %v3284 = vpop.f32.mrb[0].mxu0
        %3285 = vmatprep.mubr.bf16.mxu0 0
        %3286 = vmatmul.mubr.bf16.gmra.mrb[0].mxu0 %v3116
        %v3287 = vpop.f32.mrb[0].mxu0
        %v3288 = vadd.f32 0.0, %v3287
        %v3289 = vpop.f32.mrb[0].mxu0
        %v3290 = vpop.f32.mrb[0].mxu0
        %v3291 = vadd.f32 0.0, %v3290
        %v3292 = vpop.f32.mrb[0].mxu0
        %3293 = vmatprep.mubr.bf16.mxu0 0
        %3294 = vmatmul.mubr.bf16.gmra.mrb[0].mxu0 %v3117
        %v3295 = vpop.f32.mrb[0].mxu0
        %v3296 = vadd.f32 0.0, %v3295
        %v3297 = vpop.f32.mrb[0].mxu0
        %v3298 = vpop.f32.mrb[0].mxu0
        %v3299 = vadd.f32 0.0, %v3298
        %v3300 = vpop.f32.mrb[0].mxu0
        %3301 = vmatprep.mubr.bf16.mxu0 0
        %3302 = vmatmul.mubr.bf16.gmra.mrb[0].mxu0 %v3118
        %v3303 = vpop.f32.mrb[0].mxu0
        %v3304 = vadd.f32 0.0, %v3303
        %v3305 = vpop.f32.mrb[0].mxu0
        %v3306 = vpop.f32.mrb[0].mxu0
        %v3307 = vadd.f32 0.0, %v3306
        %v3308 = vpop.f32.mrb[0].mxu0
        %3309 = vmatprep.mubr.bf16.mxu0 0
        %3310 = vmatmul.mubr.bf16.gmra.mrb[0].mxu0 %v3119
        %v3311 = vpop.f32.mrb[0].mxu0
        %v3312 = vadd.f32 0.0, %v3311
        %v3313 = vpop.f32.mrb[0].mxu0
        %v3314 = vpop.f32.mrb[0].mxu0
        %v3315 = vadd.f32 0.0, %v3314
        %v3316 = vpop.f32.mrb[0].mxu0
        %3317 = vmatprep.mubr.bf16.mxu0 0
        %3318 = vmatmul.mubr.bf16.gmra.mrb[0].mxu0 %v3120
        %v3319 = vpop.f32.mrb[0].mxu0
        %v3320 = vadd.f32 0.0, %v3319
        %v3321 = vpop.f32.mrb[0].mxu0
        %v3322 = vpop.f32.mrb[0].mxu0
        %v3323 = vadd.f32 0.0, %v3322
        %v3324 = vpop.f32.mrb[0].mxu0
        %3325 = vmatprep.mubr.bf16.mxu0 0
        %3326 = vmatmul.mubr.bf16.gmra.mrb[0].mxu0 %v3121
        %v3327 = vpop.f32.mrb[0].mxu0
        %v3328 = vadd.f32 0.0, %v3327
        %v3329 = vpop.f32.mrb[0].mxu0
        %v3330 = vpop.f32.mrb[0].mxu0
        %v3331 = vadd.f32 0.0, %v3330
        %v3332 = vpop.f32.mrb[0].mxu0
        %3333 = vmatprep.mubr.bf16.mxu0 0
        %3334 = vmatmul.mubr.bf16.gmra.mrb[0].mxu0 %v3122
        %v3335 = vpop.f32.mrb[0].mxu0
        %v3336 = vadd.f32 0.0, %v3335
        %v3337 = vpop.f32.mrb[0].mxu0
        %v3338 = vpop.f32.mrb[0].mxu0
        %v3339 = vadd.f32 0.0, %v3338
        %v3340 = vpop.f32.mrb[0].mxu0
        %3341 = vmatprep.mubr.bf16.mxu0 0
        %3342 = vmatmul.mubr.bf16.gmra.mrb[0].mxu0 %v3123
        %v3343 = vpop.f32.mrb[0].mxu0
        %v3344 = vadd.f32 0.0, %v3343
        %v3345 = vpop.f32.mrb[0].mxu0
        %v3346 = vpop.f32.mrb[0].mxu0
        %v3347 = vadd.f32 0.0, %v3346
        %v3348 = vpop.f32.mrb[0].mxu0
        %3349 = vdwg.mxu0
        %v3350 = vadd.f32 %v3044, %v3224
        %v3351 = vadd.f32 %v3045, %v3227
        %v3352 = vadd.f32 %v3046, %v3232
        %v3353 = vadd.f32 %v3047, %v3235
        %v3354 = vadd.f32 %v3048, %v3240
        %v3355 = vadd.f32 %v3049, %v3243
        %v3356 = vadd.f32 %v3050, %v3248
        %v3357 = vadd.f32 %v3051, %v3251
        %v3358 = vadd.f32 %v3052, %v3256
        %v3359 = vadd.f32 %v3053, %v3259
        %v3360 = vadd.f32 %v3054, %v3264
        %v3361 = vadd.f32 %v3055, %v3267
        %v3362 = vadd.f32 %v3056, %v3272
        %v3363 = vadd.f32 %v3057, %v3275
        %v3364 = vadd.f32 %v3058, %v3280
        %v3365 = vadd.f32 %v3059, %v3283
        %v3366 = vadd.f32 %v3060, %v3288
        %v3367 = vadd.f32 %v3061, %v3291
        %v3368 = vadd.f32 %v3062, %v3296
        %v3369 = vadd.f32 %v3063, %v3299
        %v3370 = vadd.f32 %v3064, %v3304
        %v3371 = vadd.f32 %v3065, %v3307
        %v3372 = vadd.f32 %v3066, %v3312
        %v3373 = vadd.f32 %v3067, %v3315
        %v3374 = vadd.f32 %v3068, %v3320
        %v3375 = vadd.f32 %v3069, %v3323
        %v3376 = vadd.f32 %v3070, %v3328
        %v3377 = vadd.f32 %v3071, %v3331
        %v3378 = vadd.f32 %v3072, %v3336
        %v3379 = vadd.f32 %v3073, %v3339
        %v3380 = vadd.f32 %v3074, %v3344
        %v3381 = vadd.f32 %v3075, %v3347
        %v3382 = vld [vmem:[%s4] sm:$0x1]
        %v3384 = vlaneseq
        %v3385 = vshrl.u32 %v3384, 7
        %v3386 = vsub.s32 0, %v3385
        %v3387 = vrot.slane %v3382, %v3386
        %v3389 = vadd.f32 %v3350, %v3387
        %v3390 = vadd.f32 %v3351, %v3387
        %v3391 = vadd.f32 %v3352, %v3387
        %v3392 = vadd.f32 %v3353, %v3387
        %v3393 = vadd.f32 %v3354, %v3387
        %v3394 = vadd.f32 %v3355, %v3387
        %v3395 = vadd.f32 %v3356, %v3387
        %v3396 = vadd.f32 %v3357, %v3387
        %v3397 = vadd.f32 %v3358, %v3387
        %v3398 = vadd.f32 %v3359, %v3387
        %v3399 = vadd.f32 %v3360, %v3387
        %v3400 = vadd.f32 %v3361, %v3387
        %v3401 = vadd.f32 %v3362, %v3387
        %v3402 = vadd.f32 %v3363, %v3387
        %v3403 = vadd.f32 %v3364, %v3387
        %v3404 = vadd.f32 %v3365, %v3387
        %v3405 = vadd.f32 %v3366, %v3387
        %v3406 = vadd.f32 %v3367, %v3387
        %v3407 = vadd.f32 %v3368, %v3387
        %v3408 = vadd.f32 %v3369, %v3387
        %v3409 = vadd.f32 %v3370, %v3387
        %v3410 = vadd.f32 %v3371, %v3387
        %v3411 = vadd.f32 %v3372, %v3387
        %v3412 = vadd.f32 %v3373, %v3387
        %v3413 = vadd.f32 %v3374, %v3387
        %v3414 = vadd.f32 %v3375, %v3387
        %v3415 = vadd.f32 %v3376, %v3387
        %v3416 = vadd.f32 %v3377, %v3387
        %v3417 = vadd.f32 %v3378, %v3387
        %v3418 = vadd.f32 %v3379, %v3387
        %v3419 = vadd.f32 %v3380, %v3387
        %v3420 = vadd.f32 %v3381, %v3387
        %v3421 = vmax.f32 %v3389, 0.0
        %v3422 = vmax.f32 %v3390, 0.0
        %v3423 = vmax.f32 %v3391, 0.0
        %v3424 = vmax.f32 %v3392, 0.0
        %v3425 = vmax.f32 %v3393, 0.0
        %v3426 = vmax.f32 %v3394, 0.0
        %v3427 = vmax.f32 %v3395, 0.0
        %v3428 = vmax.f32 %v3396, 0.0
        %v3429 = vmax.f32 %v3397, 0.0
        %v3430 = vmax.f32 %v3398, 0.0
        %v3431 = vmax.f32 %v3399, 0.0
        %v3432 = vmax.f32 %v3400, 0.0
        %v3433 = vmax.f32 %v3401, 0.0
        %v3434 = vmax.f32 %v3402, 0.0
        %v3435 = vmax.f32 %v3403, 0.0
        %v3436 = vmax.f32 %v3404, 0.0
        %v3437 = vmax.f32 %v3405, 0.0
        %v3438 = vmax.f32 %v3406, 0.0
        %v3439 = vmax.f32 %v3407, 0.0
        %v3440 = vmax.f32 %v3408, 0.0
        %v3441 = vmax.f32 %v3409, 0.0
        %v3442 = vmax.f32 %v3410, 0.0
        %v3443 = vmax.f32 %v3411, 0.0
        %v3444 = vmax.f32 %v3412, 0.0
        %v3445 = vmax.f32 %v3413, 0.0
        %v3446 = vmax.f32 %v3414, 0.0
        %v3447 = vmax.f32 %v3415, 0.0
        %v3448 = vmax.f32 %v3416, 0.0
        %v3449 = vmax.f32 %v3417, 0.0
        %v3450 = vmax.f32 %v3418, 0.0
        %v3451 = vmax.f32 %v3419, 0.0
        %v3452 = vmax.f32 %v3420, 0.0
        %3453 = vst [vmem:[%s232] sm:$0xff] %v3421
        %3454 = vst [vmem:[%s232 + $0x8] sm:$0xff] %v3422
        %3455 = vst [vmem:[%s232 + $0x10] sm:$0xff] %v3423
        %3456 = vst [vmem:[%s232 + $0x18] sm:$0xff] %v3424
        %3457 = vst [vmem:[%s232 + $0x20] sm:$0xff] %v3425
        %3458 = vst [vmem:[%s232 + $0x28] sm:$0xff] %v3426
        %3459 = vst [vmem:[%s232 + $0x30] sm:$0xff] %v3427
        %3460 = vst [vmem:[%s232 + $0x38] sm:$0xff] %v3428
        %3461 = vst [vmem:[%s232 + $0x40] sm:$0xff] %v3429
        %3462 = vst [vmem:[%s232 + $0x48] sm:$0xff] %v3430
        %3463 = vst [vmem:[%s232 + $0x50] sm:$0xff] %v3431
        %3464 = vst [vmem:[%s232 + $0x58] sm:$0xff] %v3432
        %3465 = vst [vmem:[%s232 + $0x60] sm:$0xff] %v3433
        %3466 = vst [vmem:[%s232 + $0x68] sm:$0xff] %v3434
        %3467 = vst [vmem:[%s232 + $0x70] sm:$0xff] %v3435
        %3468 = vst [vmem:[%s232 + $0x78] sm:$0xff] %v3436
        %3469 = vst [vmem:[%s232 + $0x80] sm:$0xff] %v3437
        %3470 = vst [vmem:[%s232 + $0x88] sm:$0xff] %v3438
        %3471 = vst [vmem:[%s232 + $0x90] sm:$0xff] %v3439
        %3472 = vst [vmem:[%s232 + $0x98] sm:$0xff] %v3440
        %3473 = vst [vmem:[%s232 + $0xa0] sm:$0xff] %v3441
        %3474 = vst [vmem:[%s232 + $0xa8] sm:$0xff] %v3442
        %3475 = vst [vmem:[%s232 + $0xb0] sm:$0xff] %v3443
        %3476 = vst [vmem:[%s232 + $0xb8] sm:$0xff] %v3444
        %3477 = vst [vmem:[%s232 + $0xc0] sm:$0xff] %v3445
        %3478 = vst [vmem:[%s232 + $0xc8] sm:$0xff] %v3446
        %3479 = vst [vmem:[%s232 + $0xd0] sm:$0xff] %v3447
        %3480 = vst [vmem:[%s232 + $0xd8] sm:$0xff] %v3448
        %3481 = vst [vmem:[%s232 + $0xe0] sm:$0xff] %v3449
        %3482 = vst [vmem:[%s232 + $0xe8] sm:$0xff] %v3450
        %3483 = vst [vmem:[%s232 + $0xf0] sm:$0xff] %v3451
        %3484 = vst [vmem:[%s232 + $0xf8] sm:$0xff] %v3452
        %s3485 = sand.u32 %s138, 1
        %s3486 = scalar_lea.sflag [#allocation5], %s3485
        %s3487 = sand.u32 %s138, 1
        %s3488 = smul.addr %s3487, 256
        %s3489 = scalar_lea.vmem [#allocation6], %s3488
        // Predicated region
        $region45: #{tpu_custom_call.1} parent=39 // pred_check
          %p3490 = pneg %p148
        $region46: #{tpu_custom_call.1} parent=39 // pred_check_branch
          %3492 = sbr.rel (%p3490) target = $region48
        $region47: #{tpu_custom_call.1} parent=39 // pred_region
          %s3494 = ssub.s32 4096, 4096
          %3495 = vsyncadd %s3486, %s3494
          %s3496 = smul.addr %s20, 32
          %s3497 = smul.addr %s3496, 128
          %s3498 = scalar_lea.hbm %s5, %s3497
          %s3499 = sshll.u32 %s3489, 4
          %s3500 = int_to_ptr.vmem [resolvable:$true] %s3499
          %3505 = dma.vmem_to_hbm [thread:$0]  %s3500, 4096, %s3498, %s3486, 128, 128, 8
        $region48: #{tpu_custom_call.1} parent=39 // pred_fallthru
          _
      $region40: #{tpu_custom_call.1} parent=5 // pred_fallthru
        _
      %p3506 = scmp.le.s32.totalorder 2, %s15
      // Predicated region
      $region49: #{tpu_custom_call.1} parent=5 // pred_check
        %p3507 = pneg %p3506
      $region50: #{tpu_custom_call.1} parent=5 // pred_check_branch
        %3509 = sbr.rel (%p3507) target = $region52
      $region51: #{tpu_custom_call.1} parent=5 // pred_region
        %s3510 = ssub.s32 %s15, 2
        // Predicated region
        $region53: #{tpu_custom_call.1} parent=51 // pred_check
          %p3511 = pneg %p154
        $region54: #{tpu_custom_call.1} parent=51 // pred_check_branch
          %3513 = sbr.rel (%p3511) target = $region56
        $region55: #{tpu_custom_call.1} parent=51 // pred_region
          %s3514 = sand.u32 %s139, 1
          %s3515 = scalar_lea.sflag [#allocation5], %s3514
          %s3516 = sand.u32 %s139, 1
          %s3517 = smul.addr %s3516, 256
          %s3518 = scalar_lea.vmem [#allocation6], %s3517
          %3519 = dma.done %s3515, 4096
        $region56: #{tpu_custom_call.1} parent=51 // pred_fallthru
          _
      $region52: #{tpu_custom_call.1} parent=5 // pred_fallthru
        _
    $region6: #{tpu_custom_call.1} parent=1 // loop_footer
      %s19 = sadd.s32 1, %s15
    $region7: #{tpu_custom_call.1} parent=1 // loop_footer_branch
      %14 = sbr.rel target = $region3
    $region8: #{tpu_custom_call.1} parent=1 // loop_exit
      _
    %3520 = vsyncpa [#allocation4], 1
    %s3521 = scalar_lea.sflag [#allocation4], 1
    %3522 = vsyncpa %s3521, 1
    %3523 = vsyncpa [#allocation5], 1
    %s3524 = scalar_lea.sflag [#allocation5], 1
    %3525 = vsyncpa %s3524, 1

</llo_original>
